<compile_context>
chip_gen: v7x
topology: tpu7x:2x2x1
jax: 0.10.0
libtpu: 0.0.40
codegen_flags: <defaults>
</compile_context>

<pallas_src>
import jax
import jax.numpy as jnp
from jax.experimental import pallas as pl
from jax.experimental.pallas import tpu as pltpu

IN_FEATURES = 6000 * 2          # 12000
HIDDEN = 512
NUM_ACTIONS = 2

B_PAD = 8                       # pad batch to sublane multiple
K_PAD = 12288                   # 12000 -> 96 * 128 (lane multiple), zero padded
TK = 6144                       # K tile -> 2 grid steps (bf16 tile = 3 MiB)
N_SPLIT = 2                     # HIDDEN split across leading "parallel" axis
HIDDEN_HALF = HIDDEN // N_SPLIT


def _mlp_kernel(x_ref, w1_ref, b1_ref, w2_ref, out_ref, acc_ref):
    """Per (hidden-half h, K-tile k):  relu(x @ W1[:, half] + b1[half]) @ W2[half]."""
    k = pl.program_id(1)

    @pl.when(k == 0)
    def _():
        acc_ref[...] = jnp.zeros_like(acc_ref)

    # bf16 x bf16 -> f32 accumulation on the MXU over the 12288-wide K axis.
    acc_ref[...] += jnp.dot(x_ref[...], w1_ref[...],
                            preferred_element_type=jnp.float32)

    @pl.when(k == pl.num_programs(1) - 1)
    def _():
        h = jnp.maximum(acc_ref[...] + b1_ref[...], 0.0)          # bias + ReLU
        partial = jnp.dot(h, w2_ref[...],
                          preferred_element_type=jnp.float32)     # partial logits
        out_ref[...] = partial.astype(out_ref.dtype)              # b2 added in glue


def prepare_params(params):
    """One-time padding/casting of weights (keep OUT of the per-call path)."""
    w1, b1, w2, b2 = params
    w1p = (jnp.zeros((K_PAD, HIDDEN), jnp.bfloat16)
           .at[:IN_FEATURES, :].set(w1.astype(jnp.bfloat16)))
    b1r = b1.reshape(1, HIDDEN).astype(jnp.float32)
    return (w1p, b1r, w2.astype(jnp.float32), b2.astype(jnp.float32))


@jax.jit
def policy_mlp_pallas(combined, w1p, b1r, w2, b2):
    """combined: (B, 12000) f32 -> logits (B, 2) f32."""
    B = combined.shape[0]

    # Pad batch to 8 and K to a lane multiple; padding columns hit zero rows of
    # the (pre-padded) W1, so the result is unchanged.  Activations go bf16.
    x = (jnp.zeros((B_PAD, K_PAD), jnp.bfloat16)
         .at[:B, :IN_FEATURES].set(combined.astype(jnp.bfloat16)))

    partials = pl.pallas_call(
        _mlp_kernel,
        out_shape=jax.ShapeDtypeStruct((N_SPLIT, B_PAD, NUM_ACTIONS), jnp.float32),
        grid_spec=pltpu.PrefetchScalarGridSpec(
            num_scalar_prefetch=0,
            grid=(N_SPLIT, K_PAD // TK),                           # (hidden half, K tile)
            in_specs=[
                pl.BlockSpec((B_PAD, TK), lambda h, k: (0, k)),            # x tile (bf16)
                pl.BlockSpec((TK, HIDDEN_HALF), lambda h, k: (k, h)),      # W1 tile (bf16)
                pl.BlockSpec((1, HIDDEN_HALF), lambda h, k: (0, h)),       # b1 half
                pl.BlockSpec((HIDDEN_HALF, NUM_ACTIONS), lambda h, k: (h, 0)),  # W2 half
            ],
            out_specs=pl.BlockSpec((None, B_PAD, NUM_ACTIONS),
                                   lambda h, k: (h, 0, 0)),        # per-half partial logits
            scratch_shapes=[pltpu.VMEM((B_PAD, HIDDEN_HALF), jnp.float32)],
        ),
        compiler_params=pltpu.CompilerParams(
            dimension_semantics=("parallel", "arbitrary")),
    )(x, w1p, b1r, w2)

    # Sum the two HIDDEN-half partials, add b2 exactly once, drop batch padding.
    logits = partials.sum(axis=0)[:B] + b2
    return logits


def policy_network_forward(state, previous_state, prepared_params, sample_key):
    """Mirrors PolicyNetwork.forward (sampling uses an explicit JAX key)."""
    B = state.shape[0]
    s = state.reshape(B, -1)
    ps = previous_state.reshape(B, -1)
    combined = jnp.concatenate([s, ps], axis=-1)             # (B, 12000)

    logits = policy_mlp_pallas(combined, *prepared_params)   # (B, 2)

    # Categorical(logits=...).sample() + log_prob  (glue, not hot path)
    action = jax.random.categorical(sample_key, logits, axis=-1)   # (B,)
    log_probs = logits - jax.nn.logsumexp(logits, axis=-1, keepdims=True)
    action_log_prob = jnp.take_along_axis(
        log_probs, action[:, None], axis=-1)[:, 0]            # (B,)
    # torch's .squeeze(-1) on a (B,) sample is a no-op for B > 1.
    return {"logits": logits, "action": action, "action_log_prob": action_log_prob}


def init_params(key):
    """Deterministic PyTorch-style (kaiming-uniform-ish) init."""
    k1, k2, k3, k4 = jax.random.split(key, 4)
    bound1 = 1.0 / jnp.sqrt(IN_FEATURES)
    bound2 = 1.0 / jnp.sqrt(HIDDEN)
    w1 = jax.random.uniform(k1, (IN_FEATURES, HIDDEN), jnp.float32, -bound1, bound1)
    b1 = jax.random.uniform(k2, (HIDDEN,), jnp.float32, -bound1, bound1)
    w2 = jax.random.uniform(k3, (HIDDEN, NUM_ACTIONS), jnp.float32, -bound2, bound2)
    b2 = jax.random.uniform(k4, (NUM_ACTIONS,), jnp.float32, -bound2, bound2)
    return (w1, b1, w2, b2)


if __name__ == "__main__":
    root = jax.random.PRNGKey(0)
    k_state, k_prev, k_param, k_sample = jax.random.split(root, 4)

    batch = 2
    state = jax.random.normal(k_state, (batch, 6000), jnp.float32)
    previous_state = jax.random.normal(k_prev, (batch, 6000), jnp.float32)

    params = init_params(k_param)
    prepared = prepare_params(params)          # one-time weight padding + bf16 cast

    out = policy_network_forward(state, previous_state, prepared, k_sample)
    jax.block_until_ready(out)

    # Sanity check against a JAX reference with the same bf16-rounded operands
    # (kernel uses bf16 x / W1 with f32 accumulation).
    combined = jnp.concatenate(
        [state.reshape(batch, -1), previous_state.reshape(batch, -1)], axis=-1)
    w1, b1, w2, b2 = params
    c_bf = combined.astype(jnp.bfloat16).astype(jnp.float32)
    w1_bf = w1.astype(jnp.bfloat16).astype(jnp.float32)
    ref_logits = jnp.maximum(c_bf @ w1_bf + b1, 0.0) @ w2 + b2
    assert jnp.allclose(out["logits"], ref_logits, atol=2e-2, rtol=2e-2)

    # Loose check against the full-f32 reference (bf16 weight quantization error).
    ref_f32 = jnp.maximum(combined @ w1 + b1, 0.0) @ w2 + b2
    assert jnp.allclose(out["logits"], ref_f32, atol=5e-2, rtol=5e-2)

    assert out["logits"].shape == (batch, NUM_ACTIONS)
    assert out["action"].shape == (batch,)
    assert out["action_log_prob"].shape == (batch,)

    print("KERNEL_OK")
</pallas_src>

<mosaic_0001>
module attributes {stable_mosaic.version = 11 : i64} {
  func.func @_mlp_kernel(%arg0: i32, %arg1: i32, %arg2: memref<8x6144xbf16, #tpu.memory_space<vmem>>, %arg3: memref<6144x256xbf16, #tpu.memory_space<vmem>>, %arg4: memref<1x256xf32, #tpu.memory_space<vmem>>, %arg5: memref<256x2xf32, #tpu.memory_space<vmem>>, %arg6: memref<1x8x2xf32, #tpu.memory_space<vmem>>, %arg7: memref<8x256xf32, #tpu.memory_space<vmem>>) attributes {dimension_semantics = [#tpu.dimension_semantics<parallel>, #tpu.dimension_semantics<arbitrary>], iteration_bounds = array<i64: 2, 2>, scalar_prefetch = 0 : i64, scratch_operands = 1 : i64, tpu.core_type = #tpu.core_type<tc>, window_params = [{transform_indices = @transform_0, window_bounds = array<i64: 8, 6144>}, {transform_indices = @transform_1, window_bounds = array<i64: 6144, 256>}, {transform_indices = @transform_2, window_bounds = array<i64: 1, 256>}, {transform_indices = @transform_3, window_bounds = array<i64: 256, 2>}, {transform_indices = @transform_4, window_bounds = array<i64: 1, 8, 2>}]} {
    %c0_i32 = arith.constant 0 : i32
    %0 = arith.cmpi eq, %arg1, %c0_i32 : i32
    %1 = arith.extui %0 : i1 to i32
    %c0_i32_0 = arith.constant 0 : i32
    %2 = arith.cmpi ne, %1, %c0_i32_0 : i32
    scf.if %2 {
      %cst_9 = arith.constant 0.000000e+00 : f32
      %12 = vector.broadcast %cst_9 : f32 to vector<8x256xf32>
      %c0_10 = arith.constant 0 : index
      %c0_11 = arith.constant 0 : index
      %13 = vector.load %arg7[%c0_10, %c0_11] : memref<8x256xf32, #tpu.memory_space<vmem>>, vector<8x256xf32>
      tpu.vector_store %arg7[%c0_10, %c0_11], %12 {strides = array<i32>} : memref<8x256xf32, #tpu.memory_space<vmem>>, vector<8x256xf32>,
    } else {
    }
    %c0 = arith.constant 0 : index
    %c0_1 = arith.constant 0 : index
    %3 = vector.load %arg7[%c0, %c0_1] : memref<8x256xf32, #tpu.memory_space<vmem>>, vector<8x256xf32>
    %c0_2 = arith.constant 0 : index
    %c0_3 = arith.constant 0 : index
    %4 = vector.load %arg2[%c0_2, %c0_3] : memref<8x6144xbf16, #tpu.memory_space<vmem>>, vector<8x6144xbf16>
    %c0_4 = arith.constant 0 : index
    %c0_5 = arith.constant 0 : index
    %5 = vector.load %arg3[%c0_4, %c0_5] : memref<6144x256xbf16, #tpu.memory_space<vmem>>, vector<6144x256xbf16>
    %cst = arith.constant dense<0.000000e+00> : vector<8x256xf32>
    %6 = tpu.matmul %4, %5, %cst {dimension_numbers = #tpu.dot_dimension_numbers<[1], [0], [0], [1], [0, 0, 1, 1], [], []>} : vector<8x6144xbf16>, vector<6144x256xbf16>, vector<8x256xf32> -> vector<8x256xf32>
    %7 = arith.addf %3, %6 : vector<8x256xf32>
    %c0_6 = arith.constant 0 : index
    %c0_7 = arith.constant 0 : index
    %8 = vector.load %arg7[%c0_6, %c0_7] : memref<8x256xf32, #tpu.memory_space<vmem>>, vector<8x256xf32>
    tpu.vector_store %arg7[%c0_6, %c0_7], %7 {strides = array<i32>} : memref<8x256xf32, #tpu.memory_space<vmem>>, vector<8x256xf32>,
    %c1_i32 = arith.constant 1 : i32
    %9 = arith.cmpi eq, %arg1, %c1_i32 : i32
    %10 = arith.extui %9 : i1 to i32
    %c0_i32_8 = arith.constant 0 : i32
    %11 = arith.cmpi ne, %10, %c0_i32_8 : i32
    scf.if %11 {
      %c0_9 = arith.constant 0 : index
      %c0_10 = arith.constant 0 : index
      %12 = vector.load %arg7[%c0_9, %c0_10] : memref<8x256xf32, #tpu.memory_space<vmem>>, vector<8x256xf32>
      %c0_11 = arith.constant 0 : index
      %c0_12 = arith.constant 0 : index
      %13 = vector.load %arg4[%c0_11, %c0_12] : memref<1x256xf32, #tpu.memory_space<vmem>>, vector<1x256xf32>
      %14 = vector.broadcast %13 : vector<1x256xf32> to vector<8x256xf32>
      %15 = arith.addf %12, %14 : vector<8x256xf32>
      %cst_13 = arith.constant 0.000000e+00 : f32
      %16 = vector.broadcast %cst_13 : f32 to vector<8x256xf32>
      %17 = arith.maximumf %15, %16 : vector<8x256xf32>
      %c0_14 = arith.constant 0 : index
      %c0_15 = arith.constant 0 : index
      %18 = vector.load %arg5[%c0_14, %c0_15] : memref<256x2xf32, #tpu.memory_space<vmem>>, vector<256x2xf32>
      %cst_16 = arith.constant dense<0.000000e+00> : vector<8x2xf32>
      %19 = tpu.matmul %17, %18, %cst_16 {dimension_numbers = #tpu.dot_dimension_numbers<[1], [0], [0], [1], [0, 0, 1, 1], [], []>} : vector<8x256xf32>, vector<256x2xf32>, vector<8x2xf32> -> vector<8x2xf32>
      %c0_17 = arith.constant 0 : index
      %c0_18 = arith.constant 0 : index
      %c0_19 = arith.constant 0 : index
      %20 = vector.load %arg6[%c0_17, %c0_18, %c0_19] : memref<1x8x2xf32, #tpu.memory_space<vmem>>, vector<1x8x2xf32>
      %21 = vector.shape_cast %20 : vector<1x8x2xf32> to vector<8x2xf32>
      %22 = vector.shape_cast %19 : vector<8x2xf32> to vector<1x8x2xf32>
      tpu.vector_store %arg6[%c0_17, %c0_18, %c0_19], %22 {strides = array<i32>} : memref<1x8x2xf32, #tpu.memory_space<vmem>>, vector<1x8x2xf32>,
    } else {
    }
    return
  }
  func.func @transform_0(%arg0: i32, %arg1: i32) -> (i32, i32) {
    %c0_i32 = arith.constant 0 : i32
    %c0_i32_0 = arith.constant 0 : i32
    return %c0_i32, %arg1 : i32, i32
  }
  func.func @transform_1(%arg0: i32, %arg1: i32) -> (i32, i32) {
    %c0_i32 = arith.constant 0 : i32
    return %arg1, %arg0 : i32, i32
  }
  func.func @transform_2(%arg0: i32, %arg1: i32) -> (i32, i32) {
    %c0_i32 = arith.constant 0 : i32
    %c0_i32_0 = arith.constant 0 : i32
    return %c0_i32, %arg0 : i32, i32
  }
  func.func @transform_3(%arg0: i32, %arg1: i32) -> (i32, i32) {
    %c0_i32 = arith.constant 0 : i32
    %c0_i32_0 = arith.constant 0 : i32
    return %arg0, %c0_i32 : i32, i32
  }
  func.func @transform_4(%arg0: i32, %arg1: i32) -> (i32, i32, i32) {
    %c0_i32 = arith.constant 0 : i32
    %c0_i32_0 = arith.constant 0 : i32
    %c0_i32_1 = arith.constant 0 : i32
    return %arg0, %c0_i32, %c0_i32_0 : i32, i32, i32
  }
}

</mosaic_0001>

<llo_original>
// kernel: policy_mlp_pallas.1
$region0: #{policy_mlp_pallas.1}
  #allocation0 [shape = 'u32[]', space=smem, size = 0x4, offset = 0x4, fixed_abs, tag = 'smem constant byte address 0x4 - core index']
  #allocation1 [shape = 'u32[144,128]{1,0:T(1,128)}', space=vmem, size = 0x12000, scoped, tag = 'internal scratch']
  #allocation2 [shape = 'f32[8,256]{1,0:T(8,128)}', space=vmem, size = 0x2000, scoped, tag = 'scratch operand']
  %s0 = inlined_call_operand.vmem [shape: bf16[8,12288], index: 0, kind: input, shape index: {}]
  %s1 = inlined_call_operand.hbm [shape: bf16[12288,512], index: 1, kind: input, shape index: {}]
  %s2 = inlined_call_operand.hbm [shape: f32[1,512], index: 2, kind: input, shape index: {}]
  %s3 = inlined_call_operand.vmem [shape: f32[512,2], index: 3, kind: input, shape index: {}]
  %s4 = inlined_call_operand.vmem [shape: f32[2,8,2], index: 4, kind: output, shape index: {}]
  %s5 = sld [smem:[#allocation0]]
  $region65: #{policy_mlp_pallas.1} parent=0
    _
  %s7 = ssub.s32 1, %s5
  %s8 = scalar_select 0, %s7, %s5
  $region1: #{policy_mlp_pallas.1} parent=0
    #allocation3 [shape = 'u8[6291456]{0}', space=vmem, size = 0x600000, scoped, tag = 'input window, operand 1']
    #allocation4 [shape = 's32[2]{0}', space=sflag, size = 0x8, scoped, tag = 'scoped memory for policy_mlp_pallas.1']
    #allocation5 [shape = 'u8[2048]{0}', space=vmem, size = 0x800, scoped, tag = 'input window, operand 2']
    #allocation6 [shape = 's32[2]{0}', space=sflag, size = 0x8, scoped, tag = 'scoped memory for policy_mlp_pallas.1']
    %9 = vsyncpa [#allocation4], 0
    %s10 = scalar_lea.sflag [#allocation4], 1
    %11 = vsyncpa %s10, 0
    %12 = vsyncpa [#allocation6], 0
    %s13 = scalar_lea.sflag [#allocation6], 1
    %14 = vsyncpa %s13, 0
    loop: start=0, step=1, limit=6
    $region2: #{policy_mlp_pallas.1} parent=1 // loop_pre_header
      _
    $region3: #{policy_mlp_pallas.1} parent=1 // loop_header
      %s16 = sphi 0, %s20
      %p17 = scmp.ge.s32.totalorder %s16, 6
      %s23 = sphi 0, %s35
      %s24 = sphi 0, %s31
      %s25 = sphi 0, %s23
      %s26 = sphi 0, %s24
      %s27 = sphi 0, %s25
      %s28 = sphi 0, %s26
      %s38 = sphi 0, %s40
      %s41 = sphi 0, %s38
      %s42 = sphi 0, %s41
      %s58 = sphi 0, %s42
      %s66 = sphi 0, %s68
      %s69 = sphi 0, %s66
      %s70 = sphi 0, %s69
      %s86 = sphi 0, %s70
      %s92 = sphi 0, %s94
      %s95 = sphi 0, %s92
      %s96 = sphi 0, %s95
      %s112 = sphi 0, %s96
      %s118 = sphi 0, %s120
      %s121 = sphi 0, %s118
      %s122 = sphi 0, %s121
      %s138 = sphi 0, %s122
      %s144 = sphi 0, %s146
      %s147 = sphi 0, %s144
      %s148 = sphi 0, %s147
      %s164 = sphi 0, %s148
    $region4: #{policy_mlp_pallas.1} parent=1 // loop_header_branch
      %19 = sbr.rel (%p17) target = $region8
    $region5: #{policy_mlp_pallas.1} parent=1 // loop_body
      %s21 = ssub.s32 %s16, 1
      %s22 = ssub.s32 %s16, 2
      %s29 = sadd.s32 1, %s24
      %p30 = scmp.ge.s32.totalorder %s29, 2
      %s31 = scalar_select %p30, 0, %s29
      %s32 = sadd.s32 1, %s23
      %s33 = scalar_select %p30, %s32, %s23
      %p34 = scmp.ge.s32.totalorder %s33, 2
      %s35 = scalar_select %p34, 0, %s33
      %s36 = ssub.s32 %s24, %s31
      %p37 = scmp.eq.s32.totalorder %s36, 0
      %s39 = sadd.s32 %s38, 1
      %s40 = scalar_select %p37, %s38, %s39
      %p43 = pneg %p37
      %p44 = scmp.eq.s32.totalorder %s16, 3
      %p45 = por %p43, %p44
      %p46 = scmp.ne.s32.totalorder %s38, %s41
      %p47 = scmp.eq.s32.totalorder %s16, 0
      %p48 = por %p46, %p47
      %p49 = scmp.ne.s32.totalorder %s38, %s41
      %p50 = scmp.eq.s32.totalorder %s21, 3
      %p51 = por %p49, %p50
      %p52 = scmp.ne.s32.totalorder %s41, %s42
      %p53 = scmp.eq.s32.totalorder %s21, 0
      %p54 = por %p52, %p53
      %p55 = scmp.ne.s32.totalorder %s41, %s42
      %p56 = scmp.eq.s32.totalorder %s22, 3
      %p57 = por %p55, %p56
      %p59 = scmp.ne.s32.totalorder %s42, %s58
      %p60 = scmp.eq.s32.totalorder %s22, 0
      %p61 = por %p59, %p60
      %s62 = ssub.s32 %s24, %s31
      %s63 = ssub.s32 %s23, %s35
      %s64 = sor.u32 %s62, %s63
      %p65 = scmp.eq.s32.totalorder %s64, 0
      %s67 = sadd.s32 %s66, 1
      %s68 = scalar_select %p65, %s66, %s67
      %p71 = pneg %p65
      %p72 = scmp.eq.s32.totalorder %s16, 3
      %p73 = por %p71, %p72
      %p74 = scmp.ne.s32.totalorder %s66, %s69
      %p75 = scmp.eq.s32.totalorder %s16, 0
      %p76 = por %p74, %p75
      %p77 = scmp.ne.s32.totalorder %s66, %s69
      %p78 = scmp.eq.s32.totalorder %s21, 3
      %p79 = por %p77, %p78
      %p80 = scmp.ne.s32.totalorder %s69, %s70
      %p81 = scmp.eq.s32.totalorder %s21, 0
      %p82 = por %p80, %p81
      %p83 = scmp.ne.s32.totalorder %s69, %s70
      %p84 = scmp.eq.s32.totalorder %s22, 3
      %p85 = por %p83, %p84
      %p87 = scmp.ne.s32.totalorder %s70, %s86
      %p88 = scmp.eq.s32.totalorder %s22, 0
      %p89 = por %p87, %p88
      %s90 = ssub.s32 %s23, %s35
      %p91 = scmp.eq.s32.totalorder %s90, 0
      %s93 = sadd.s32 %s92, 1
      %s94 = scalar_select %p91, %s92, %s93
      %p97 = pneg %p91
      %p98 = scmp.eq.s32.totalorder %s16, 3
      %p99 = por %p97, %p98
      %p100 = scmp.ne.s32.totalorder %s92, %s95
      %p101 = scmp.eq.s32.totalorder %s16, 0
      %p102 = por %p100, %p101
      %p103 = scmp.ne.s32.totalorder %s92, %s95
      %p104 = scmp.eq.s32.totalorder %s21, 3
      %p105 = por %p103, %p104
      %p106 = scmp.ne.s32.totalorder %s95, %s96
      %p107 = scmp.eq.s32.totalorder %s21, 0
      %p108 = por %p106, %p107
      %p109 = scmp.ne.s32.totalorder %s95, %s96
      %p110 = scmp.eq.s32.totalorder %s22, 3
      %p111 = por %p109, %p110
      %p113 = scmp.ne.s32.totalorder %s96, %s112
      %p114 = scmp.eq.s32.totalorder %s22, 0
      %p115 = por %p113, %p114
      %s116 = ssub.s32 %s23, %s35
      %p117 = scmp.eq.s32.totalorder %s116, 0
      %s119 = sadd.s32 %s118, 1
      %s120 = scalar_select %p117, %s118, %s119
      %p123 = pneg %p117
      %p124 = scmp.eq.s32.totalorder %s16, 3
      %p125 = por %p123, %p124
      %p126 = scmp.ne.s32.totalorder %s118, %s121
      %p127 = scmp.eq.s32.totalorder %s16, 0
      %p128 = por %p126, %p127
      %p129 = scmp.ne.s32.totalorder %s118, %s121
      %p130 = scmp.eq.s32.totalorder %s21, 3
      %p131 = por %p129, %p130
      %p132 = scmp.ne.s32.totalorder %s121, %s122
      %p133 = scmp.eq.s32.totalorder %s21, 0
      %p134 = por %p132, %p133
      %p135 = scmp.ne.s32.totalorder %s121, %s122
      %p136 = scmp.eq.s32.totalorder %s22, 3
      %p137 = por %p135, %p136
      %p139 = scmp.ne.s32.totalorder %s122, %s138
      %p140 = scmp.eq.s32.totalorder %s22, 0
      %p141 = por %p139, %p140
      %s142 = ssub.s32 %s23, %s35
      %p143 = scmp.eq.s32.totalorder %s142, 0
      %s145 = sadd.s32 %s144, 1
      %s146 = scalar_select %p143, %s144, %s145
      %p149 = pneg %p143
      %p150 = scmp.eq.s32.totalorder %s16, 3
      %p151 = por %p149, %p150
      %p152 = scmp.ne.s32.totalorder %s144, %s147
      %p153 = scmp.eq.s32.totalorder %s16, 0
      %p154 = por %p152, %p153
      %p155 = scmp.ne.s32.totalorder %s144, %s147
      %p156 = scmp.eq.s32.totalorder %s21, 3
      %p157 = por %p155, %p156
      %p158 = scmp.ne.s32.totalorder %s147, %s148
      %p159 = scmp.eq.s32.totalorder %s21, 0
      %p160 = por %p158, %p159
      %p161 = scmp.ne.s32.totalorder %s147, %s148
      %p162 = scmp.eq.s32.totalorder %s22, 3
      %p163 = por %p161, %p162
      %p165 = scmp.ne.s32.totalorder %s148, %s164
      %p166 = scmp.eq.s32.totalorder %s22, 0
      %p167 = por %p165, %p166
      %p168 = scmp.le.s32.totalorder 1, %s16
      %p169 = scmp.lt.s32.totalorder %s16, 5
      %p170 = pnand %p168, %p169
      %p171 = pneg %p170
      // Predicated region
      $region9: #{policy_mlp_pallas.1} parent=5 // pred_check
        _
      $region10: #{policy_mlp_pallas.1} parent=5 // pred_check_branch
        %173 = sbr.rel (%p170) target = $region12
      $region11: #{policy_mlp_pallas.1} parent=5 // pred_region
        %s174 = ssub.s32 %s16, 1
      $region12: #{policy_mlp_pallas.1} parent=5 // pred_fallthru
        _
      %p175 = scmp.lt.s32.totalorder %s16, 4
      // Predicated region
      $region13: #{policy_mlp_pallas.1} parent=5 // pred_check
        %p176 = pneg %p175
      $region14: #{policy_mlp_pallas.1} parent=5 // pred_check_branch
        %178 = sbr.rel (%p176) target = $region16
      $region15: #{policy_mlp_pallas.1} parent=5 // pred_region
        // Predicated region
        $region17: #{policy_mlp_pallas.1} parent=15 // pred_check
          %p179 = pneg %p48
        $region18: #{policy_mlp_pallas.1} parent=15 // pred_check_branch
          %181 = sbr.rel (%p179) target = $region20
        $region19: #{policy_mlp_pallas.1} parent=15 // pred_region
          %s182 = smul.u32 48, %s24
          %p183 = scmp.lt.s32.totalorder %s182, 95
          %s184 = scalar_select %p183, %s182, 95
          %s185 = smul.addr %s184, 4
          %s186 = scalar_lea.vmem %s0, %s185
          %s187 = smul.u32 48, %s24
        $region20: #{policy_mlp_pallas.1} parent=15 // pred_fallthru
          _
        // Predicated region
        $region21: #{policy_mlp_pallas.1} parent=15 // pred_check
          %p188 = pneg %p76
        $region22: #{policy_mlp_pallas.1} parent=15 // pred_check_branch
          %190 = sbr.rel (%p188) target = $region24
        $region23: #{policy_mlp_pallas.1} parent=15 // pred_region
          %s191 = sand.u32 %s66, 1
          %s192 = scalar_lea.sflag [#allocation4], %s191
          %s193 = sand.u32 %s66, 1
          %s194 = smul.addr %s193, 6144
          %s195 = scalar_lea.vmem [#allocation3], %s194
          %s196 = smul.u32 768, %s24
          %s197 = smul.u32 2, %s23
          %s199 = ssub.s32 98304, 98304
          %200 = vsyncadd %s192, %s199
          %s201 = smul.addr %s196, 4
          %s202 = sadd.s32 %s197, %s201
          %s203 = smul.addr %s202, 64
          %s204 = scalar_lea.hbm %s1, %s203
          %s205 = sshll.u32 %s195, 4
          %s206 = int_to_ptr.vmem [resolvable:$true] %s205
          %211 = dma.hbm_to_vmem [thread:$0]  %s204, 98304, %s206, %s192, 256, 128, 8
        $region24: #{policy_mlp_pallas.1} parent=15 // pred_fallthru
          _
        // Predicated region
        $region25: #{policy_mlp_pallas.1} parent=15 // pred_check
          %p212 = pneg %p102
        $region26: #{policy_mlp_pallas.1} parent=15 // pred_check_branch
          %214 = sbr.rel (%p212) target = $region28
        $region27: #{policy_mlp_pallas.1} parent=15 // pred_region
          %s215 = sand.u32 %s92, 1
          %s216 = scalar_lea.sflag [#allocation6], %s215
          %s217 = sand.u32 %s92, 1
          %s218 = smul.addr %s217, 2
          %s219 = scalar_lea.vmem [#allocation5], %s218
          %s220 = smul.u32 2, %s23
          %s222 = ssub.s32 32, 32
          %223 = vsyncadd %s216, %s222
          %s224 = smul.addr %s220, 16
          %s225 = scalar_lea.hbm %s2, %s224
          %s227 = sshll.u32 %s219, 4
          %s228 = int_to_ptr.vmem [resolvable:$true] %s227
          %230 = dma.hbm_to_vmem [thread:$0]  %s225, 32, %s228, %s216
        $region28: #{policy_mlp_pallas.1} parent=15 // pred_fallthru
          _
        // Predicated region
        $region29: #{policy_mlp_pallas.1} parent=15 // pred_check
          %p231 = pneg %p128
        $region30: #{policy_mlp_pallas.1} parent=15 // pred_check_branch
          %233 = sbr.rel (%p231) target = $region32
        $region31: #{policy_mlp_pallas.1} parent=15 // pred_region
          %s234 = smul.u32 32, %s23
          %p235 = scmp.lt.s32.totalorder %s234, 63
          %s236 = scalar_select %p235, %s234, 63
          %s237 = smul.addr %s236, 8
          %s238 = scalar_lea.vmem %s3, %s237
          %s239 = smul.u32 32, %s23
        $region32: #{policy_mlp_pallas.1} parent=15 // pred_fallthru
          _
      $region16: #{policy_mlp_pallas.1} parent=5 // pred_fallthru
        _
      %p240 = scmp.le.s32.totalorder 1, %s16
      %p241 = scmp.lt.s32.totalorder %s16, 5
      %p242 = pnand %p240, %p241
      %p243 = pneg %p242
      // Predicated region
      $region33: #{policy_mlp_pallas.1} parent=5 // pred_check
        _
      $region34: #{policy_mlp_pallas.1} parent=5 // pred_check_branch
        %245 = sbr.rel (%p242) target = $region36
      $region35: #{policy_mlp_pallas.1} parent=5 // pred_region
        %s246 = ssub.s32 %s16, 1
        %s247 = sand.u32 %s69, 1
        %s248 = scalar_lea.sflag [#allocation4], %s247
        %s249 = sand.u32 %s69, 1
        %s250 = smul.addr %s249, 6144
        %s251 = scalar_lea.vmem [#allocation3], %s250
        // Predicated region
        $region37: #{policy_mlp_pallas.1} parent=35 // pred_check
          %p252 = pneg %p82
        $region38: #{policy_mlp_pallas.1} parent=35 // pred_check_branch
          %254 = sbr.rel (%p252) target = $region40
        $region39: #{policy_mlp_pallas.1} parent=35 // pred_region
          %255 = dma.done %s248, 98304
        $region40: #{policy_mlp_pallas.1} parent=35 // pred_fallthru
          _
        %s256 = sand.u32 %s95, 1
        %s257 = scalar_lea.sflag [#allocation6], %s256
        %s258 = sand.u32 %s95, 1
        %s259 = smul.addr %s258, 2
        %s260 = scalar_lea.vmem [#allocation5], %s259
        // Predicated region
        $region41: #{policy_mlp_pallas.1} parent=35 // pred_check
          %p261 = pneg %p108
        $region42: #{policy_mlp_pallas.1} parent=35 // pred_check_branch
          %263 = sbr.rel (%p261) target = $region44
        $region43: #{policy_mlp_pallas.1} parent=35 // pred_region
          %264 = dma.done %s257, 32
        $region44: #{policy_mlp_pallas.1} parent=35 // pred_fallthru
          _
        %s265 = smul.u32 48, %s26
        %p266 = scmp.lt.s32.totalorder %s265, 95
        %s267 = scalar_select %p266, %s265, 95
        %s268 = smul.addr %s267, 4
        %s269 = scalar_lea.vmem %s0, %s268
        %p270 = pneg %p54
        %p271 = pneg %p51
        %s272 = sand.u32 %s69, 1
        %s273 = scalar_lea.sflag [#allocation4], %s272
        %s274 = sand.u32 %s69, 1
        %s275 = smul.addr %s274, 6144
        %s276 = scalar_lea.vmem [#allocation3], %s275
        %p277 = pneg %p82
        %p278 = pneg %p79
        %s279 = sand.u32 %s95, 1
        %s280 = scalar_lea.sflag [#allocation6], %s279
        %s281 = sand.u32 %s95, 1
        %s282 = smul.addr %s281, 2
        %s283 = scalar_lea.vmem [#allocation5], %s282
        %p284 = pneg %p108
        %p285 = pneg %p105
        %s286 = smul.u32 32, %s25
        %p287 = scmp.lt.s32.totalorder %s286, 63
        %s288 = scalar_select %p287, %s286, 63
        %s289 = smul.addr %s288, 8
        %s290 = scalar_lea.vmem %s3, %s289
        %p291 = pneg %p134
        %p292 = pneg %p131
        %p293 = pneg %p160
        %p294 = pneg %p157
        %p295 = scmp.lt.s32.totalorder %s25, 1
        %s296 = scalar_select %p295, %s25, 1
        %s297 = smul.addr %s296, 8
        %s298 = scalar_lea.vmem %s4, %s297
        %s299 = smul.u32 48, %s26
        %p300 = scmp.lt.s32.totalorder %s299, 95
        %s301 = scalar_select %p300, %s299, 95
        %s302 = smul.addr %s301, 4
        %s303 = scalar_lea.vmem %s0, %s302
        %s304 = smul.u32 48, %s26
        %s305 = smul.u32 768, %s26
        %s306 = smul.u32 2, %s25
        %s307 = smul.u32 2, %s25
        %s308 = smul.u32 32, %s25
        %p309 = scmp.lt.s32.totalorder %s308, 63
        %s310 = scalar_select %p309, %s308, 63
        %s311 = smul.addr %s310, 8
        %s312 = scalar_lea.vmem %s3, %s311
        %s313 = smul.u32 32, %s25
        %p314 = scmp.lt.s32.totalorder %s25, 1
        %s315 = scalar_select %p314, %s25, 1
        %s316 = smul.addr %s315, 8
        %s317 = scalar_lea.vmem %s4, %s316
        %p318 = scmp.eq.s32.totalorder %s26, 0
        // Predicated region
        $region45: #{policy_mlp_pallas.1} parent=35 // pred_check
          %p319 = pneg %p318
        $region46: #{policy_mlp_pallas.1} parent=35 // pred_check_branch
          %321 = sbr.rel (%p319) target = $region48
        $region47: #{policy_mlp_pallas.1} parent=35 // pred_region
          %322 = vst [vmem:[#allocation2] sm:$0xff] 0.0
          %323 = vst [vmem:[#allocation2 + $0x8] sm:$0xff] 0.0
        $region48: #{policy_mlp_pallas.1} parent=35 // pred_fallthru
          _
        %v324 = vld [vmem:[#allocation2] sm:$0xff]
        %v325 = vld [vmem:[#allocation2 + $0x8] sm:$0xff]
        %v326 = vld [vmem:[%s303] sm:$0xff]
        %v327 = vld [vmem:[%s303 + $0x8] sm:$0xff]
        %v328 = vld [vmem:[%s303 + $0x10] sm:$0xff]
        %v329 = vld [vmem:[%s303 + $0x18] sm:$0xff]
        %v330 = vld [vmem:[%s303 + $0x20] sm:$0xff]
        %v331 = vld [vmem:[%s303 + $0x28] sm:$0xff]
        %v332 = vld [vmem:[%s303 + $0x30] sm:$0xff]
        %v333 = vld [vmem:[%s303 + $0x38] sm:$0xff]
        %v334 = vld [vmem:[%s303 + $0x40] sm:$0xff]
        %v335 = vld [vmem:[%s303 + $0x48] sm:$0xff]
        %v336 = vld [vmem:[%s303 + $0x50] sm:$0xff]
        %v337 = vld [vmem:[%s303 + $0x58] sm:$0xff]
        %v338 = vld [vmem:[%s303 + $0x60] sm:$0xff]
        %v339 = vld [vmem:[%s303 + $0x68] sm:$0xff]
        %v340 = vld [vmem:[%s303 + $0x70] sm:$0xff]
        %v341 = vld [vmem:[%s303 + $0x78] sm:$0xff]
        %v342 = vld [vmem:[%s303 + $0x80] sm:$0xff]
        %v343 = vld [vmem:[%s303 + $0x88] sm:$0xff]
        %v344 = vld [vmem:[%s303 + $0x90] sm:$0xff]
        %v345 = vld [vmem:[%s303 + $0x98] sm:$0xff]
        %v346 = vld [vmem:[%s303 + $0xa0] sm:$0xff]
        %v347 = vld [vmem:[%s303 + $0xa8] sm:$0xff]
        %v348 = vld [vmem:[%s303 + $0xb0] sm:$0xff]
        %v349 = vld [vmem:[%s303 + $0xb8] sm:$0xff]
        %v350 = vld [vmem:[%s251] sm:$0xff]
        %v351 = vld [vmem:[%s251 + $0x8] sm:$0xff]
        %v352 = vld [vmem:[%s251 + $0x10] sm:$0xff]
        %v353 = vld [vmem:[%s251 + $0x18] sm:$0xff]
        %v354 = vld [vmem:[%s251 + $0x20] sm:$0xff]
        %v355 = vld [vmem:[%s251 + $0x28] sm:$0xff]
        %v356 = vld [vmem:[%s251 + $0x30] sm:$0xff]
        %v357 = vld [vmem:[%s251 + $0x38] sm:$0xff]
        %v358 = vld [vmem:[%s251 + $0x40] sm:$0xff]
        %v359 = vld [vmem:[%s251 + $0x48] sm:$0xff]
        %v360 = vld [vmem:[%s251 + $0x50] sm:$0xff]
        %v361 = vld [vmem:[%s251 + $0x58] sm:$0xff]
        %v362 = vld [vmem:[%s251 + $0x60] sm:$0xff]
        %v363 = vld [vmem:[%s251 + $0x68] sm:$0xff]
        %v364 = vld [vmem:[%s251 + $0x70] sm:$0xff]
        %v365 = vld [vmem:[%s251 + $0x78] sm:$0xff]
        %v366 = vld [vmem:[%s251 + $0x80] sm:$0xff]
        %v367 = vld [vmem:[%s251 + $0x88] sm:$0xff]
        %v368 = vld [vmem:[%s251 + $0x90] sm:$0xff]
        %v369 = vld [vmem:[%s251 + $0x98] sm:$0xff]
        %v370 = vld [vmem:[%s251 + $0xa0] sm:$0xff]
        %v371 = vld [vmem:[%s251 + $0xa8] sm:$0xff]
        %v372 = vld [vmem:[%s251 + $0xb0] sm:$0xff]
        %v373 = vld [vmem:[%s251 + $0xb8] sm:$0xff]
        %v374 = vld [vmem:[%s251 + $0xc0] sm:$0xff]
        %v375 = vld [vmem:[%s251 + $0xc8] sm:$0xff]
        %v376 = vld [vmem:[%s251 + $0xd0] sm:$0xff]
        %v377 = vld [vmem:[%s251 + $0xd8] sm:$0xff]
        %v378 = vld [vmem:[%s251 + $0xe0] sm:$0xff]
        %v379 = vld [vmem:[%s251 + $0xe8] sm:$0xff]
        %v380 = vld [vmem:[%s251 + $0xf0] sm:$0xff]
        %v381 = vld [vmem:[%s251 + $0xf8] sm:$0xff]
        %v382 = vld [vmem:[%s251 + $0x100] sm:$0xff]
        %v383 = vld [vmem:[%s251 + $0x108] sm:$0xff]
        %v384 = vld [vmem:[%s251 + $0x110] sm:$0xff]
        %v385 = vld [vmem:[%s251 + $0x118] sm:$0xff]
        %v386 = vld [vmem:[%s251 + $0x120] sm:$0xff]
        %v387 = vld [vmem:[%s251 + $0x128] sm:$0xff]
        %v388 = vld [vmem:[%s251 + $0x130] sm:$0xff]
        %v389 = vld [vmem:[%s251 + $0x138] sm:$0xff]
        %v390 = vld [vmem:[%s251 + $0x140] sm:$0xff]
        %v391 = vld [vmem:[%s251 + $0x148] sm:$0xff]
        %v392 = vld [vmem:[%s251 + $0x150] sm:$0xff]
        %v393 = vld [vmem:[%s251 + $0x158] sm:$0xff]
        %v394 = vld [vmem:[%s251 + $0x160] sm:$0xff]
        %v395 = vld [vmem:[%s251 + $0x168] sm:$0xff]
        %v396 = vld [vmem:[%s251 + $0x170] sm:$0xff]
        %v397 = vld [vmem:[%s251 + $0x178] sm:$0xff]
        %v398 = vld [vmem:[%s251 + $0x180] sm:$0xff]
        %v399 = vld [vmem:[%s251 + $0x188] sm:$0xff]
        %v400 = vld [vmem:[%s251 + $0x190] sm:$0xff]
        %v401 = vld [vmem:[%s251 + $0x198] sm:$0xff]
        %v402 = vld [vmem:[%s251 + $0x1a0] sm:$0xff]
        %v403 = vld [vmem:[%s251 + $0x1a8] sm:$0xff]
        %v404 = vld [vmem:[%s251 + $0x1b0] sm:$0xff]
        %v405 = vld [vmem:[%s251 + $0x1b8] sm:$0xff]
        %v406 = vld [vmem:[%s251 + $0x1c0] sm:$0xff]
        %v407 = vld [vmem:[%s251 + $0x1c8] sm:$0xff]
        %v408 = vld [vmem:[%s251 + $0x1d0] sm:$0xff]
        %v409 = vld [vmem:[%s251 + $0x1d8] sm:$0xff]
        %v410 = vld [vmem:[%s251 + $0x1e0] sm:$0xff]
        %v411 = vld [vmem:[%s251 + $0x1e8] sm:$0xff]
        %v412 = vld [vmem:[%s251 + $0x1f0] sm:$0xff]
        %v413 = vld [vmem:[%s251 + $0x1f8] sm:$0xff]
        %v414 = vld [vmem:[%s251 + $0x200] sm:$0xff]
        %v415 = vld [vmem:[%s251 + $0x208] sm:$0xff]
        %v416 = vld [vmem:[%s251 + $0x210] sm:$0xff]
        %v417 = vld [vmem:[%s251 + $0x218] sm:$0xff]
        %v418 = vld [vmem:[%s251 + $0x220] sm:$0xff]
        %v419 = vld [vmem:[%s251 + $0x228] sm:$0xff]
        %v420 = vld [vmem:[%s251 + $0x230] sm:$0xff]
        %v421 = vld [vmem:[%s251 + $0x238] sm:$0xff]
        %v422 = vld [vmem:[%s251 + $0x240] sm:$0xff]
        %v423 = vld [vmem:[%s251 + $0x248] sm:$0xff]
        %v424 = vld [vmem:[%s251 + $0x250] sm:$0xff]
        %v425 = vld [vmem:[%s251 + $0x258] sm:$0xff]
        %v426 = vld [vmem:[%s251 + $0x260] sm:$0xff]
        %v427 = vld [vmem:[%s251 + $0x268] sm:$0xff]
        %v428 = vld [vmem:[%s251 + $0x270] sm:$0xff]
        %v429 = vld [vmem:[%s251 + $0x278] sm:$0xff]
        %v430 = vld [vmem:[%s251 + $0x280] sm:$0xff]
        %v431 = vld [vmem:[%s251 + $0x288] sm:$0xff]
        %v432 = vld [vmem:[%s251 + $0x290] sm:$0xff]
        %v433 = vld [vmem:[%s251 + $0x298] sm:$0xff]
        %v434 = vld [vmem:[%s251 + $0x2a0] sm:$0xff]
        %v435 = vld [vmem:[%s251 + $0x2a8] sm:$0xff]
        %v436 = vld [vmem:[%s251 + $0x2b0] sm:$0xff]
        %v437 = vld [vmem:[%s251 + $0x2b8] sm:$0xff]
        %v438 = vld [vmem:[%s251 + $0x2c0] sm:$0xff]
        %v439 = vld [vmem:[%s251 + $0x2c8] sm:$0xff]
        %v440 = vld [vmem:[%s251 + $0x2d0] sm:$0xff]
        %v441 = vld [vmem:[%s251 + $0x2d8] sm:$0xff]
        %v442 = vld [vmem:[%s251 + $0x2e0] sm:$0xff]
        %v443 = vld [vmem:[%s251 + $0x2e8] sm:$0xff]
        %v444 = vld [vmem:[%s251 + $0x2f0] sm:$0xff]
        %v445 = vld [vmem:[%s251 + $0x2f8] sm:$0xff]
        %v446 = vld [vmem:[%s251 + $0x300] sm:$0xff]
        %v447 = vld [vmem:[%s251 + $0x308] sm:$0xff]
        %v448 = vld [vmem:[%s251 + $0x310] sm:$0xff]
        %v449 = vld [vmem:[%s251 + $0x318] sm:$0xff]
        %v450 = vld [vmem:[%s251 + $0x320] sm:$0xff]
        %v451 = vld [vmem:[%s251 + $0x328] sm:$0xff]
        %v452 = vld [vmem:[%s251 + $0x330] sm:$0xff]
        %v453 = vld [vmem:[%s251 + $0x338] sm:$0xff]
        %v454 = vld [vmem:[%s251 + $0x340] sm:$0xff]
        %v455 = vld [vmem:[%s251 + $0x348] sm:$0xff]
        %v456 = vld [vmem:[%s251 + $0x350] sm:$0xff]
        %v457 = vld [vmem:[%s251 + $0x358] sm:$0xff]
        %v458 = vld [vmem:[%s251 + $0x360] sm:$0xff]
        %v459 = vld [vmem:[%s251 + $0x368] sm:$0xff]
        %v460 = vld [vmem:[%s251 + $0x370] sm:$0xff]
        %v461 = vld [vmem:[%s251 + $0x378] sm:$0xff]
        %v462 = vld [vmem:[%s251 + $0x380] sm:$0xff]
        %v463 = vld [vmem:[%s251 + $0x388] sm:$0xff]
        %v464 = vld [vmem:[%s251 + $0x390] sm:$0xff]
        %v465 = vld [vmem:[%s251 + $0x398] sm:$0xff]
        %v466 = vld [vmem:[%s251 + $0x3a0] sm:$0xff]
        %v467 = vld [vmem:[%s251 + $0x3a8] sm:$0xff]
        %v468 = vld [vmem:[%s251 + $0x3b0] sm:$0xff]
        %v469 = vld [vmem:[%s251 + $0x3b8] sm:$0xff]
        %v470 = vld [vmem:[%s251 + $0x3c0] sm:$0xff]
        %v471 = vld [vmem:[%s251 + $0x3c8] sm:$0xff]
        %v472 = vld [vmem:[%s251 + $0x3d0] sm:$0xff]
        %v473 = vld [vmem:[%s251 + $0x3d8] sm:$0xff]
        %v474 = vld [vmem:[%s251 + $0x3e0] sm:$0xff]
        %v475 = vld [vmem:[%s251 + $0x3e8] sm:$0xff]
        %v476 = vld [vmem:[%s251 + $0x3f0] sm:$0xff]
        %v477 = vld [vmem:[%s251 + $0x3f8] sm:$0xff]
        %v478 = vld [vmem:[%s251 + $0x400] sm:$0xff]
        %v479 = vld [vmem:[%s251 + $0x408] sm:$0xff]
        %v480 = vld [vmem:[%s251 + $0x410] sm:$0xff]
        %v481 = vld [vmem:[%s251 + $0x418] sm:$0xff]
        %v482 = vld [vmem:[%s251 + $0x420] sm:$0xff]
        %v483 = vld [vmem:[%s251 + $0x428] sm:$0xff]
        %v484 = vld [vmem:[%s251 + $0x430] sm:$0xff]
        %v485 = vld [vmem:[%s251 + $0x438] sm:$0xff]
        %v486 = vld [vmem:[%s251 + $0x440] sm:$0xff]
        %v487 = vld [vmem:[%s251 + $0x448] sm:$0xff]
        %v488 = vld [vmem:[%s251 + $0x450] sm:$0xff]
        %v489 = vld [vmem:[%s251 + $0x458] sm:$0xff]
        %v490 = vld [vmem:[%s251 + $0x460] sm:$0xff]
        %v491 = vld [vmem:[%s251 + $0x468] sm:$0xff]
        %v492 = vld [vmem:[%s251 + $0x470] sm:$0xff]
        %v493 = vld [vmem:[%s251 + $0x478] sm:$0xff]
        %v494 = vld [vmem:[%s251 + $0x480] sm:$0xff]
        %v495 = vld [vmem:[%s251 + $0x488] sm:$0xff]
        %v496 = vld [vmem:[%s251 + $0x490] sm:$0xff]
        %v497 = vld [vmem:[%s251 + $0x498] sm:$0xff]
        %v498 = vld [vmem:[%s251 + $0x4a0] sm:$0xff]
        %v499 = vld [vmem:[%s251 + $0x4a8] sm:$0xff]
        %v500 = vld [vmem:[%s251 + $0x4b0] sm:$0xff]
        %v501 = vld [vmem:[%s251 + $0x4b8] sm:$0xff]
        %v502 = vld [vmem:[%s251 + $0x4c0] sm:$0xff]
        %v503 = vld [vmem:[%s251 + $0x4c8] sm:$0xff]
        %v504 = vld [vmem:[%s251 + $0x4d0] sm:$0xff]
        %v505 = vld [vmem:[%s251 + $0x4d8] sm:$0xff]
        %v506 = vld [vmem:[%s251 + $0x4e0] sm:$0xff]
        %v507 = vld [vmem:[%s251 + $0x4e8] sm:$0xff]
        %v508 = vld [vmem:[%s251 + $0x4f0] sm:$0xff]
        %v509 = vld [vmem:[%s251 + $0x4f8] sm:$0xff]
        %v510 = vld [vmem:[%s251 + $0x500] sm:$0xff]
        %v511 = vld [vmem:[%s251 + $0x508] sm:$0xff]
        %v512 = vld [vmem:[%s251 + $0x510] sm:$0xff]
        %v513 = vld [vmem:[%s251 + $0x518] sm:$0xff]
        %v514 = vld [vmem:[%s251 + $0x520] sm:$0xff]
        %v515 = vld [vmem:[%s251 + $0x528] sm:$0xff]
        %v516 = vld [vmem:[%s251 + $0x530] sm:$0xff]
        %v517 = vld [vmem:[%s251 + $0x538] sm:$0xff]
        %v518 = vld [vmem:[%s251 + $0x540] sm:$0xff]
        %v519 = vld [vmem:[%s251 + $0x548] sm:$0xff]
        %v520 = vld [vmem:[%s251 + $0x550] sm:$0xff]
        %v521 = vld [vmem:[%s251 + $0x558] sm:$0xff]
        %v522 = vld [vmem:[%s251 + $0x560] sm:$0xff]
        %v523 = vld [vmem:[%s251 + $0x568] sm:$0xff]
        %v524 = vld [vmem:[%s251 + $0x570] sm:$0xff]
        %v525 = vld [vmem:[%s251 + $0x578] sm:$0xff]
        %v526 = vld [vmem:[%s251 + $0x580] sm:$0xff]
        %v527 = vld [vmem:[%s251 + $0x588] sm:$0xff]
        %v528 = vld [vmem:[%s251 + $0x590] sm:$0xff]
        %v529 = vld [vmem:[%s251 + $0x598] sm:$0xff]
        %v530 = vld [vmem:[%s251 + $0x5a0] sm:$0xff]
        %v531 = vld [vmem:[%s251 + $0x5a8] sm:$0xff]
        %v532 = vld [vmem:[%s251 + $0x5b0] sm:$0xff]
        %v533 = vld [vmem:[%s251 + $0x5b8] sm:$0xff]
        %v534 = vld [vmem:[%s251 + $0x5c0] sm:$0xff]
        %v535 = vld [vmem:[%s251 + $0x5c8] sm:$0xff]
        %v536 = vld [vmem:[%s251 + $0x5d0] sm:$0xff]
        %v537 = vld [vmem:[%s251 + $0x5d8] sm:$0xff]
        %v538 = vld [vmem:[%s251 + $0x5e0] sm:$0xff]
        %v539 = vld [vmem:[%s251 + $0x5e8] sm:$0xff]
        %v540 = vld [vmem:[%s251 + $0x5f0] sm:$0xff]
        %v541 = vld [vmem:[%s251 + $0x5f8] sm:$0xff]
        %v542 = vld [vmem:[%s251 + $0x600] sm:$0xff]
        %v543 = vld [vmem:[%s251 + $0x608] sm:$0xff]
        %v544 = vld [vmem:[%s251 + $0x610] sm:$0xff]
        %v545 = vld [vmem:[%s251 + $0x618] sm:$0xff]
        %v546 = vld [vmem:[%s251 + $0x620] sm:$0xff]
        %v547 = vld [vmem:[%s251 + $0x628] sm:$0xff]
        %v548 = vld [vmem:[%s251 + $0x630] sm:$0xff]
        %v549 = vld [vmem:[%s251 + $0x638] sm:$0xff]
        %v550 = vld [vmem:[%s251 + $0x640] sm:$0xff]
        %v551 = vld [vmem:[%s251 + $0x648] sm:$0xff]
        %v552 = vld [vmem:[%s251 + $0x650] sm:$0xff]
        %v553 = vld [vmem:[%s251 + $0x658] sm:$0xff]
        %v554 = vld [vmem:[%s251 + $0x660] sm:$0xff]
        %v555 = vld [vmem:[%s251 + $0x668] sm:$0xff]
        %v556 = vld [vmem:[%s251 + $0x670] sm:$0xff]
        %v557 = vld [vmem:[%s251 + $0x678] sm:$0xff]
        %v558 = vld [vmem:[%s251 + $0x680] sm:$0xff]
        %v559 = vld [vmem:[%s251 + $0x688] sm:$0xff]
        %v560 = vld [vmem:[%s251 + $0x690] sm:$0xff]
        %v561 = vld [vmem:[%s251 + $0x698] sm:$0xff]
        %v562 = vld [vmem:[%s251 + $0x6a0] sm:$0xff]
        %v563 = vld [vmem:[%s251 + $0x6a8] sm:$0xff]
        %v564 = vld [vmem:[%s251 + $0x6b0] sm:$0xff]
        %v565 = vld [vmem:[%s251 + $0x6b8] sm:$0xff]
        %v566 = vld [vmem:[%s251 + $0x6c0] sm:$0xff]
        %v567 = vld [vmem:[%s251 + $0x6c8] sm:$0xff]
        %v568 = vld [vmem:[%s251 + $0x6d0] sm:$0xff]
        %v569 = vld [vmem:[%s251 + $0x6d8] sm:$0xff]
        %v570 = vld [vmem:[%s251 + $0x6e0] sm:$0xff]
        %v571 = vld [vmem:[%s251 + $0x6e8] sm:$0xff]
        %v572 = vld [vmem:[%s251 + $0x6f0] sm:$0xff]
        %v573 = vld [vmem:[%s251 + $0x6f8] sm:$0xff]
        %v574 = vld [vmem:[%s251 + $0x700] sm:$0xff]
        %v575 = vld [vmem:[%s251 + $0x708] sm:$0xff]
        %v576 = vld [vmem:[%s251 + $0x710] sm:$0xff]
        %v577 = vld [vmem:[%s251 + $0x718] sm:$0xff]
        %v578 = vld [vmem:[%s251 + $0x720] sm:$0xff]
        %v579 = vld [vmem:[%s251 + $0x728] sm:$0xff]
        %v580 = vld [vmem:[%s251 + $0x730] sm:$0xff]
        %v581 = vld [vmem:[%s251 + $0x738] sm:$0xff]
        %v582 = vld [vmem:[%s251 + $0x740] sm:$0xff]
        %v583 = vld [vmem:[%s251 + $0x748] sm:$0xff]
        %v584 = vld [vmem:[%s251 + $0x750] sm:$0xff]
        %v585 = vld [vmem:[%s251 + $0x758] sm:$0xff]
        %v586 = vld [vmem:[%s251 + $0x760] sm:$0xff]
        %v587 = vld [vmem:[%s251 + $0x768] sm:$0xff]
        %v588 = vld [vmem:[%s251 + $0x770] sm:$0xff]
        %v589 = vld [vmem:[%s251 + $0x778] sm:$0xff]
        %v590 = vld [vmem:[%s251 + $0x780] sm:$0xff]
        %v591 = vld [vmem:[%s251 + $0x788] sm:$0xff]
        %v592 = vld [vmem:[%s251 + $0x790] sm:$0xff]
        %v593 = vld [vmem:[%s251 + $0x798] sm:$0xff]
        %v594 = vld [vmem:[%s251 + $0x7a0] sm:$0xff]
        %v595 = vld [vmem:[%s251 + $0x7a8] sm:$0xff]
        %v596 = vld [vmem:[%s251 + $0x7b0] sm:$0xff]
        %v597 = vld [vmem:[%s251 + $0x7b8] sm:$0xff]
        %v598 = vld [vmem:[%s251 + $0x7c0] sm:$0xff]
        %v599 = vld [vmem:[%s251 + $0x7c8] sm:$0xff]
        %v600 = vld [vmem:[%s251 + $0x7d0] sm:$0xff]
        %v601 = vld [vmem:[%s251 + $0x7d8] sm:$0xff]
        %v602 = vld [vmem:[%s251 + $0x7e0] sm:$0xff]
        %v603 = vld [vmem:[%s251 + $0x7e8] sm:$0xff]
        %v604 = vld [vmem:[%s251 + $0x7f0] sm:$0xff]
        %v605 = vld [vmem:[%s251 + $0x7f8] sm:$0xff]
        %v606 = vld [vmem:[%s251 + $0x800] sm:$0xff]
        %v607 = vld [vmem:[%s251 + $0x808] sm:$0xff]
        %v608 = vld [vmem:[%s251 + $0x810] sm:$0xff]
        %v609 = vld [vmem:[%s251 + $0x818] sm:$0xff]
        %v610 = vld [vmem:[%s251 + $0x820] sm:$0xff]
        %v611 = vld [vmem:[%s251 + $0x828] sm:$0xff]
        %v612 = vld [vmem:[%s251 + $0x830] sm:$0xff]
        %v613 = vld [vmem:[%s251 + $0x838] sm:$0xff]
        %v614 = vld [vmem:[%s251 + $0x840] sm:$0xff]
        %v615 = vld [vmem:[%s251 + $0x848] sm:$0xff]
        %v616 = vld [vmem:[%s251 + $0x850] sm:$0xff]
        %v617 = vld [vmem:[%s251 + $0x858] sm:$0xff]
        %v618 = vld [vmem:[%s251 + $0x860] sm:$0xff]
        %v619 = vld [vmem:[%s251 + $0x868] sm:$0xff]
        %v620 = vld [vmem:[%s251 + $0x870] sm:$0xff]
        %v621 = vld [vmem:[%s251 + $0x878] sm:$0xff]
        %v622 = vld [vmem:[%s251 + $0x880] sm:$0xff]
        %v623 = vld [vmem:[%s251 + $0x888] sm:$0xff]
        %v624 = vld [vmem:[%s251 + $0x890] sm:$0xff]
        %v625 = vld [vmem:[%s251 + $0x898] sm:$0xff]
        %v626 = vld [vmem:[%s251 + $0x8a0] sm:$0xff]
        %v627 = vld [vmem:[%s251 + $0x8a8] sm:$0xff]
        %v628 = vld [vmem:[%s251 + $0x8b0] sm:$0xff]
        %v629 = vld [vmem:[%s251 + $0x8b8] sm:$0xff]
        %v630 = vld [vmem:[%s251 + $0x8c0] sm:$0xff]
        %v631 = vld [vmem:[%s251 + $0x8c8] sm:$0xff]
        %v632 = vld [vmem:[%s251 + $0x8d0] sm:$0xff]
        %v633 = vld [vmem:[%s251 + $0x8d8] sm:$0xff]
        %v634 = vld [vmem:[%s251 + $0x8e0] sm:$0xff]
        %v635 = vld [vmem:[%s251 + $0x8e8] sm:$0xff]
        %v636 = vld [vmem:[%s251 + $0x8f0] sm:$0xff]
        %v637 = vld [vmem:[%s251 + $0x8f8] sm:$0xff]
        %v638 = vld [vmem:[%s251 + $0x900] sm:$0xff]
        %v639 = vld [vmem:[%s251 + $0x908] sm:$0xff]
        %v640 = vld [vmem:[%s251 + $0x910] sm:$0xff]
        %v641 = vld [vmem:[%s251 + $0x918] sm:$0xff]
        %v642 = vld [vmem:[%s251 + $0x920] sm:$0xff]
        %v643 = vld [vmem:[%s251 + $0x928] sm:$0xff]
        %v644 = vld [vmem:[%s251 + $0x930] sm:$0xff]
        %v645 = vld [vmem:[%s251 + $0x938] sm:$0xff]
        %v646 = vld [vmem:[%s251 + $0x940] sm:$0xff]
        %v647 = vld [vmem:[%s251 + $0x948] sm:$0xff]
        %v648 = vld [vmem:[%s251 + $0x950] sm:$0xff]
        %v649 = vld [vmem:[%s251 + $0x958] sm:$0xff]
        %v650 = vld [vmem:[%s251 + $0x960] sm:$0xff]
        %v651 = vld [vmem:[%s251 + $0x968] sm:$0xff]
        %v652 = vld [vmem:[%s251 + $0x970] sm:$0xff]
        %v653 = vld [vmem:[%s251 + $0x978] sm:$0xff]
        %v654 = vld [vmem:[%s251 + $0x980] sm:$0xff]
        %v655 = vld [vmem:[%s251 + $0x988] sm:$0xff]
        %v656 = vld [vmem:[%s251 + $0x990] sm:$0xff]
        %v657 = vld [vmem:[%s251 + $0x998] sm:$0xff]
        %v658 = vld [vmem:[%s251 + $0x9a0] sm:$0xff]
        %v659 = vld [vmem:[%s251 + $0x9a8] sm:$0xff]
        %v660 = vld [vmem:[%s251 + $0x9b0] sm:$0xff]
        %v661 = vld [vmem:[%s251 + $0x9b8] sm:$0xff]
        %v662 = vld [vmem:[%s251 + $0x9c0] sm:$0xff]
        %v663 = vld [vmem:[%s251 + $0x9c8] sm:$0xff]
        %v664 = vld [vmem:[%s251 + $0x9d0] sm:$0xff]
        %v665 = vld [vmem:[%s251 + $0x9d8] sm:$0xff]
        %v666 = vld [vmem:[%s251 + $0x9e0] sm:$0xff]
        %v667 = vld [vmem:[%s251 + $0x9e8] sm:$0xff]
        %v668 = vld [vmem:[%s251 + $0x9f0] sm:$0xff]
        %v669 = vld [vmem:[%s251 + $0x9f8] sm:$0xff]
        %v670 = vld [vmem:[%s251 + $0xa00] sm:$0xff]
        %v671 = vld [vmem:[%s251 + $0xa08] sm:$0xff]
        %v672 = vld [vmem:[%s251 + $0xa10] sm:$0xff]
        %v673 = vld [vmem:[%s251 + $0xa18] sm:$0xff]
        %v674 = vld [vmem:[%s251 + $0xa20] sm:$0xff]
        %v675 = vld [vmem:[%s251 + $0xa28] sm:$0xff]
        %v676 = vld [vmem:[%s251 + $0xa30] sm:$0xff]
        %v677 = vld [vmem:[%s251 + $0xa38] sm:$0xff]
        %v678 = vld [vmem:[%s251 + $0xa40] sm:$0xff]
        %v679 = vld [vmem:[%s251 + $0xa48] sm:$0xff]
        %v680 = vld [vmem:[%s251 + $0xa50] sm:$0xff]
        %v681 = vld [vmem:[%s251 + $0xa58] sm:$0xff]
        %v682 = vld [vmem:[%s251 + $0xa60] sm:$0xff]
        %v683 = vld [vmem:[%s251 + $0xa68] sm:$0xff]
        %v684 = vld [vmem:[%s251 + $0xa70] sm:$0xff]
        %v685 = vld [vmem:[%s251 + $0xa78] sm:$0xff]
        %v686 = vld [vmem:[%s251 + $0xa80] sm:$0xff]
        %v687 = vld [vmem:[%s251 + $0xa88] sm:$0xff]
        %v688 = vld [vmem:[%s251 + $0xa90] sm:$0xff]
        %v689 = vld [vmem:[%s251 + $0xa98] sm:$0xff]
        %v690 = vld [vmem:[%s251 + $0xaa0] sm:$0xff]
        %v691 = vld [vmem:[%s251 + $0xaa8] sm:$0xff]
        %v692 = vld [vmem:[%s251 + $0xab0] sm:$0xff]
        %v693 = vld [vmem:[%s251 + $0xab8] sm:$0xff]
        %v694 = vld [vmem:[%s251 + $0xac0] sm:$0xff]
        %v695 = vld [vmem:[%s251 + $0xac8] sm:$0xff]
        %v696 = vld [vmem:[%s251 + $0xad0] sm:$0xff]
        %v697 = vld [vmem:[%s251 + $0xad8] sm:$0xff]
        %v698 = vld [vmem:[%s251 + $0xae0] sm:$0xff]
        %v699 = vld [vmem:[%s251 + $0xae8] sm:$0xff]
        %v700 = vld [vmem:[%s251 + $0xaf0] sm:$0xff]
        %v701 = vld [vmem:[%s251 + $0xaf8] sm:$0xff]
        %v702 = vld [vmem:[%s251 + $0xb00] sm:$0xff]
        %v703 = vld [vmem:[%s251 + $0xb08] sm:$0xff]
        %v704 = vld [vmem:[%s251 + $0xb10] sm:$0xff]
        %v705 = vld [vmem:[%s251 + $0xb18] sm:$0xff]
        %v706 = vld [vmem:[%s251 + $0xb20] sm:$0xff]
        %v707 = vld [vmem:[%s251 + $0xb28] sm:$0xff]
        %v708 = vld [vmem:[%s251 + $0xb30] sm:$0xff]
        %v709 = vld [vmem:[%s251 + $0xb38] sm:$0xff]
        %v710 = vld [vmem:[%s251 + $0xb40] sm:$0xff]
        %v711 = vld [vmem:[%s251 + $0xb48] sm:$0xff]
        %v712 = vld [vmem:[%s251 + $0xb50] sm:$0xff]
        %v713 = vld [vmem:[%s251 + $0xb58] sm:$0xff]
        %v714 = vld [vmem:[%s251 + $0xb60] sm:$0xff]
        %v715 = vld [vmem:[%s251 + $0xb68] sm:$0xff]
        %v716 = vld [vmem:[%s251 + $0xb70] sm:$0xff]
        %v717 = vld [vmem:[%s251 + $0xb78] sm:$0xff]
        %v718 = vld [vmem:[%s251 + $0xb80] sm:$0xff]
        %v719 = vld [vmem:[%s251 + $0xb88] sm:$0xff]
        %v720 = vld [vmem:[%s251 + $0xb90] sm:$0xff]
        %v721 = vld [vmem:[%s251 + $0xb98] sm:$0xff]
        %v722 = vld [vmem:[%s251 + $0xba0] sm:$0xff]
        %v723 = vld [vmem:[%s251 + $0xba8] sm:$0xff]
        %v724 = vld [vmem:[%s251 + $0xbb0] sm:$0xff]
        %v725 = vld [vmem:[%s251 + $0xbb8] sm:$0xff]
        %v726 = vld [vmem:[%s251 + $0xbc0] sm:$0xff]
        %v727 = vld [vmem:[%s251 + $0xbc8] sm:$0xff]
        %v728 = vld [vmem:[%s251 + $0xbd0] sm:$0xff]
        %v729 = vld [vmem:[%s251 + $0xbd8] sm:$0xff]
        %v730 = vld [vmem:[%s251 + $0xbe0] sm:$0xff]
        %v731 = vld [vmem:[%s251 + $0xbe8] sm:$0xff]
        %v732 = vld [vmem:[%s251 + $0xbf0] sm:$0xff]
        %v733 = vld [vmem:[%s251 + $0xbf8] sm:$0xff]
        %v734 = vld [vmem:[%s251 + $0xc00] sm:$0xff]
        %v735 = vld [vmem:[%s251 + $0xc08] sm:$0xff]
        %v736 = vld [vmem:[%s251 + $0xc10] sm:$0xff]
        %v737 = vld [vmem:[%s251 + $0xc18] sm:$0xff]
        %v738 = vld [vmem:[%s251 + $0xc20] sm:$0xff]
        %v739 = vld [vmem:[%s251 + $0xc28] sm:$0xff]
        %v740 = vld [vmem:[%s251 + $0xc30] sm:$0xff]
        %v741 = vld [vmem:[%s251 + $0xc38] sm:$0xff]
        %v742 = vld [vmem:[%s251 + $0xc40] sm:$0xff]
        %v743 = vld [vmem:[%s251 + $0xc48] sm:$0xff]
        %v744 = vld [vmem:[%s251 + $0xc50] sm:$0xff]
        %v745 = vld [vmem:[%s251 + $0xc58] sm:$0xff]
        %v746 = vld [vmem:[%s251 + $0xc60] sm:$0xff]
        %v747 = vld [vmem:[%s251 + $0xc68] sm:$0xff]
        %v748 = vld [vmem:[%s251 + $0xc70] sm:$0xff]
        %v749 = vld [vmem:[%s251 + $0xc78] sm:$0xff]
        %v750 = vld [vmem:[%s251 + $0xc80] sm:$0xff]
        %v751 = vld [vmem:[%s251 + $0xc88] sm:$0xff]
        %v752 = vld [vmem:[%s251 + $0xc90] sm:$0xff]
        %v753 = vld [vmem:[%s251 + $0xc98] sm:$0xff]
        %v754 = vld [vmem:[%s251 + $0xca0] sm:$0xff]
        %v755 = vld [vmem:[%s251 + $0xca8] sm:$0xff]
        %v756 = vld [vmem:[%s251 + $0xcb0] sm:$0xff]
        %v757 = vld [vmem:[%s251 + $0xcb8] sm:$0xff]
        %v758 = vld [vmem:[%s251 + $0xcc0] sm:$0xff]
        %v759 = vld [vmem:[%s251 + $0xcc8] sm:$0xff]
        %v760 = vld [vmem:[%s251 + $0xcd0] sm:$0xff]
        %v761 = vld [vmem:[%s251 + $0xcd8] sm:$0xff]
        %v762 = vld [vmem:[%s251 + $0xce0] sm:$0xff]
        %v763 = vld [vmem:[%s251 + $0xce8] sm:$0xff]
        %v764 = vld [vmem:[%s251 + $0xcf0] sm:$0xff]
        %v765 = vld [vmem:[%s251 + $0xcf8] sm:$0xff]
        %v766 = vld [vmem:[%s251 + $0xd00] sm:$0xff]
        %v767 = vld [vmem:[%s251 + $0xd08] sm:$0xff]
        %v768 = vld [vmem:[%s251 + $0xd10] sm:$0xff]
        %v769 = vld [vmem:[%s251 + $0xd18] sm:$0xff]
        %v770 = vld [vmem:[%s251 + $0xd20] sm:$0xff]
        %v771 = vld [vmem:[%s251 + $0xd28] sm:$0xff]
        %v772 = vld [vmem:[%s251 + $0xd30] sm:$0xff]
        %v773 = vld [vmem:[%s251 + $0xd38] sm:$0xff]
        %v774 = vld [vmem:[%s251 + $0xd40] sm:$0xff]
        %v775 = vld [vmem:[%s251 + $0xd48] sm:$0xff]
        %v776 = vld [vmem:[%s251 + $0xd50] sm:$0xff]
        %v777 = vld [vmem:[%s251 + $0xd58] sm:$0xff]
        %v778 = vld [vmem:[%s251 + $0xd60] sm:$0xff]
        %v779 = vld [vmem:[%s251 + $0xd68] sm:$0xff]
        %v780 = vld [vmem:[%s251 + $0xd70] sm:$0xff]
        %v781 = vld [vmem:[%s251 + $0xd78] sm:$0xff]
        %v782 = vld [vmem:[%s251 + $0xd80] sm:$0xff]
        %v783 = vld [vmem:[%s251 + $0xd88] sm:$0xff]
        %v784 = vld [vmem:[%s251 + $0xd90] sm:$0xff]
        %v785 = vld [vmem:[%s251 + $0xd98] sm:$0xff]
        %v786 = vld [vmem:[%s251 + $0xda0] sm:$0xff]
        %v787 = vld [vmem:[%s251 + $0xda8] sm:$0xff]
        %v788 = vld [vmem:[%s251 + $0xdb0] sm:$0xff]
        %v789 = vld [vmem:[%s251 + $0xdb8] sm:$0xff]
        %v790 = vld [vmem:[%s251 + $0xdc0] sm:$0xff]
        %v791 = vld [vmem:[%s251 + $0xdc8] sm:$0xff]
        %v792 = vld [vmem:[%s251 + $0xdd0] sm:$0xff]
        %v793 = vld [vmem:[%s251 + $0xdd8] sm:$0xff]
        %v794 = vld [vmem:[%s251 + $0xde0] sm:$0xff]
        %v795 = vld [vmem:[%s251 + $0xde8] sm:$0xff]
        %v796 = vld [vmem:[%s251 + $0xdf0] sm:$0xff]
        %v797 = vld [vmem:[%s251 + $0xdf8] sm:$0xff]
        %v798 = vld [vmem:[%s251 + $0xe00] sm:$0xff]
        %v799 = vld [vmem:[%s251 + $0xe08] sm:$0xff]
        %v800 = vld [vmem:[%s251 + $0xe10] sm:$0xff]
        %v801 = vld [vmem:[%s251 + $0xe18] sm:$0xff]
        %v802 = vld [vmem:[%s251 + $0xe20] sm:$0xff]
        %v803 = vld [vmem:[%s251 + $0xe28] sm:$0xff]
        %v804 = vld [vmem:[%s251 + $0xe30] sm:$0xff]
        %v805 = vld [vmem:[%s251 + $0xe38] sm:$0xff]
        %v806 = vld [vmem:[%s251 + $0xe40] sm:$0xff]
        %v807 = vld [vmem:[%s251 + $0xe48] sm:$0xff]
        %v808 = vld [vmem:[%s251 + $0xe50] sm:$0xff]
        %v809 = vld [vmem:[%s251 + $0xe58] sm:$0xff]
        %v810 = vld [vmem:[%s251 + $0xe60] sm:$0xff]
        %v811 = vld [vmem:[%s251 + $0xe68] sm:$0xff]
        %v812 = vld [vmem:[%s251 + $0xe70] sm:$0xff]
        %v813 = vld [vmem:[%s251 + $0xe78] sm:$0xff]
        %v814 = vld [vmem:[%s251 + $0xe80] sm:$0xff]
        %v815 = vld [vmem:[%s251 + $0xe88] sm:$0xff]
        %v816 = vld [vmem:[%s251 + $0xe90] sm:$0xff]
        %v817 = vld [vmem:[%s251 + $0xe98] sm:$0xff]
        %v818 = vld [vmem:[%s251 + $0xea0] sm:$0xff]
        %v819 = vld [vmem:[%s251 + $0xea8] sm:$0xff]
        %v820 = vld [vmem:[%s251 + $0xeb0] sm:$0xff]
        %v821 = vld [vmem:[%s251 + $0xeb8] sm:$0xff]
        %v822 = vld [vmem:[%s251 + $0xec0] sm:$0xff]
        %v823 = vld [vmem:[%s251 + $0xec8] sm:$0xff]
        %v824 = vld [vmem:[%s251 + $0xed0] sm:$0xff]
        %v825 = vld [vmem:[%s251 + $0xed8] sm:$0xff]
        %v826 = vld [vmem:[%s251 + $0xee0] sm:$0xff]
        %v827 = vld [vmem:[%s251 + $0xee8] sm:$0xff]
        %v828 = vld [vmem:[%s251 + $0xef0] sm:$0xff]
        %v829 = vld [vmem:[%s251 + $0xef8] sm:$0xff]
        %v830 = vld [vmem:[%s251 + $0xf00] sm:$0xff]
        %v831 = vld [vmem:[%s251 + $0xf08] sm:$0xff]
        %v832 = vld [vmem:[%s251 + $0xf10] sm:$0xff]
        %v833 = vld [vmem:[%s251 + $0xf18] sm:$0xff]
        %v834 = vld [vmem:[%s251 + $0xf20] sm:$0xff]
        %v835 = vld [vmem:[%s251 + $0xf28] sm:$0xff]
        %v836 = vld [vmem:[%s251 + $0xf30] sm:$0xff]
        %v837 = vld [vmem:[%s251 + $0xf38] sm:$0xff]
        %v838 = vld [vmem:[%s251 + $0xf40] sm:$0xff]
        %v839 = vld [vmem:[%s251 + $0xf48] sm:$0xff]
        %v840 = vld [vmem:[%s251 + $0xf50] sm:$0xff]
        %v841 = vld [vmem:[%s251 + $0xf58] sm:$0xff]
        %v842 = vld [vmem:[%s251 + $0xf60] sm:$0xff]
        %v843 = vld [vmem:[%s251 + $0xf68] sm:$0xff]
        %v844 = vld [vmem:[%s251 + $0xf70] sm:$0xff]
        %v845 = vld [vmem:[%s251 + $0xf78] sm:$0xff]
        %v846 = vld [vmem:[%s251 + $0xf80] sm:$0xff]
        %v847 = vld [vmem:[%s251 + $0xf88] sm:$0xff]
        %v848 = vld [vmem:[%s251 + $0xf90] sm:$0xff]
        %v849 = vld [vmem:[%s251 + $0xf98] sm:$0xff]
        %v850 = vld [vmem:[%s251 + $0xfa0] sm:$0xff]
        %v851 = vld [vmem:[%s251 + $0xfa8] sm:$0xff]
        %v852 = vld [vmem:[%s251 + $0xfb0] sm:$0xff]
        %v853 = vld [vmem:[%s251 + $0xfb8] sm:$0xff]
        %v854 = vld [vmem:[%s251 + $0xfc0] sm:$0xff]
        %v855 = vld [vmem:[%s251 + $0xfc8] sm:$0xff]
        %v856 = vld [vmem:[%s251 + $0xfd0] sm:$0xff]
        %v857 = vld [vmem:[%s251 + $0xfd8] sm:$0xff]
        %v858 = vld [vmem:[%s251 + $0xfe0] sm:$0xff]
        %v859 = vld [vmem:[%s251 + $0xfe8] sm:$0xff]
        %v860 = vld [vmem:[%s251 + $0xff0] sm:$0xff]
        %v861 = vld [vmem:[%s251 + $0xff8] sm:$0xff]
        %v862 = vld [vmem:[%s251 + $0x1000] sm:$0xff]
        %v863 = vld [vmem:[%s251 + $0x1008] sm:$0xff]
        %v864 = vld [vmem:[%s251 + $0x1010] sm:$0xff]
        %v865 = vld [vmem:[%s251 + $0x1018] sm:$0xff]
        %v866 = vld [vmem:[%s251 + $0x1020] sm:$0xff]
        %v867 = vld [vmem:[%s251 + $0x1028] sm:$0xff]
        %v868 = vld [vmem:[%s251 + $0x1030] sm:$0xff]
        %v869 = vld [vmem:[%s251 + $0x1038] sm:$0xff]
        %v870 = vld [vmem:[%s251 + $0x1040] sm:$0xff]
        %v871 = vld [vmem:[%s251 + $0x1048] sm:$0xff]
        %v872 = vld [vmem:[%s251 + $0x1050] sm:$0xff]
        %v873 = vld [vmem:[%s251 + $0x1058] sm:$0xff]
        %v874 = vld [vmem:[%s251 + $0x1060] sm:$0xff]
        %v875 = vld [vmem:[%s251 + $0x1068] sm:$0xff]
        %v876 = vld [vmem:[%s251 + $0x1070] sm:$0xff]
        %v877 = vld [vmem:[%s251 + $0x1078] sm:$0xff]
        %v878 = vld [vmem:[%s251 + $0x1080] sm:$0xff]
        %v879 = vld [vmem:[%s251 + $0x1088] sm:$0xff]
        %v880 = vld [vmem:[%s251 + $0x1090] sm:$0xff]
        %v881 = vld [vmem:[%s251 + $0x1098] sm:$0xff]
        %v882 = vld [vmem:[%s251 + $0x10a0] sm:$0xff]
        %v883 = vld [vmem:[%s251 + $0x10a8] sm:$0xff]
        %v884 = vld [vmem:[%s251 + $0x10b0] sm:$0xff]
        %v885 = vld [vmem:[%s251 + $0x10b8] sm:$0xff]
        %v886 = vld [vmem:[%s251 + $0x10c0] sm:$0xff]
        %v887 = vld [vmem:[%s251 + $0x10c8] sm:$0xff]
        %v888 = vld [vmem:[%s251 + $0x10d0] sm:$0xff]
        %v889 = vld [vmem:[%s251 + $0x10d8] sm:$0xff]
        %v890 = vld [vmem:[%s251 + $0x10e0] sm:$0xff]
        %v891 = vld [vmem:[%s251 + $0x10e8] sm:$0xff]
        %v892 = vld [vmem:[%s251 + $0x10f0] sm:$0xff]
        %v893 = vld [vmem:[%s251 + $0x10f8] sm:$0xff]
        %v894 = vld [vmem:[%s251 + $0x1100] sm:$0xff]
        %v895 = vld [vmem:[%s251 + $0x1108] sm:$0xff]
        %v896 = vld [vmem:[%s251 + $0x1110] sm:$0xff]
        %v897 = vld [vmem:[%s251 + $0x1118] sm:$0xff]
        %v898 = vld [vmem:[%s251 + $0x1120] sm:$0xff]
        %v899 = vld [vmem:[%s251 + $0x1128] sm:$0xff]
        %v900 = vld [vmem:[%s251 + $0x1130] sm:$0xff]
        %v901 = vld [vmem:[%s251 + $0x1138] sm:$0xff]
        %v902 = vld [vmem:[%s251 + $0x1140] sm:$0xff]
        %v903 = vld [vmem:[%s251 + $0x1148] sm:$0xff]
        %v904 = vld [vmem:[%s251 + $0x1150] sm:$0xff]
        %v905 = vld [vmem:[%s251 + $0x1158] sm:$0xff]
        %v906 = vld [vmem:[%s251 + $0x1160] sm:$0xff]
        %v907 = vld [vmem:[%s251 + $0x1168] sm:$0xff]
        %v908 = vld [vmem:[%s251 + $0x1170] sm:$0xff]
        %v909 = vld [vmem:[%s251 + $0x1178] sm:$0xff]
        %v910 = vld [vmem:[%s251 + $0x1180] sm:$0xff]
        %v911 = vld [vmem:[%s251 + $0x1188] sm:$0xff]
        %v912 = vld [vmem:[%s251 + $0x1190] sm:$0xff]
        %v913 = vld [vmem:[%s251 + $0x1198] sm:$0xff]
        %v914 = vld [vmem:[%s251 + $0x11a0] sm:$0xff]
        %v915 = vld [vmem:[%s251 + $0x11a8] sm:$0xff]
        %v916 = vld [vmem:[%s251 + $0x11b0] sm:$0xff]
        %v917 = vld [vmem:[%s251 + $0x11b8] sm:$0xff]
        %v918 = vld [vmem:[%s251 + $0x11c0] sm:$0xff]
        %v919 = vld [vmem:[%s251 + $0x11c8] sm:$0xff]
        %v920 = vld [vmem:[%s251 + $0x11d0] sm:$0xff]
        %v921 = vld [vmem:[%s251 + $0x11d8] sm:$0xff]
        %v922 = vld [vmem:[%s251 + $0x11e0] sm:$0xff]
        %v923 = vld [vmem:[%s251 + $0x11e8] sm:$0xff]
        %v924 = vld [vmem:[%s251 + $0x11f0] sm:$0xff]
        %v925 = vld [vmem:[%s251 + $0x11f8] sm:$0xff]
        %v926 = vld [vmem:[%s251 + $0x1200] sm:$0xff]
        %v927 = vld [vmem:[%s251 + $0x1208] sm:$0xff]
        %v928 = vld [vmem:[%s251 + $0x1210] sm:$0xff]
        %v929 = vld [vmem:[%s251 + $0x1218] sm:$0xff]
        %v930 = vld [vmem:[%s251 + $0x1220] sm:$0xff]
        %v931 = vld [vmem:[%s251 + $0x1228] sm:$0xff]
        %v932 = vld [vmem:[%s251 + $0x1230] sm:$0xff]
        %v933 = vld [vmem:[%s251 + $0x1238] sm:$0xff]
        %v934 = vld [vmem:[%s251 + $0x1240] sm:$0xff]
        %v935 = vld [vmem:[%s251 + $0x1248] sm:$0xff]
        %v936 = vld [vmem:[%s251 + $0x1250] sm:$0xff]
        %v937 = vld [vmem:[%s251 + $0x1258] sm:$0xff]
        %v938 = vld [vmem:[%s251 + $0x1260] sm:$0xff]
        %v939 = vld [vmem:[%s251 + $0x1268] sm:$0xff]
        %v940 = vld [vmem:[%s251 + $0x1270] sm:$0xff]
        %v941 = vld [vmem:[%s251 + $0x1278] sm:$0xff]
        %v942 = vld [vmem:[%s251 + $0x1280] sm:$0xff]
        %v943 = vld [vmem:[%s251 + $0x1288] sm:$0xff]
        %v944 = vld [vmem:[%s251 + $0x1290] sm:$0xff]
        %v945 = vld [vmem:[%s251 + $0x1298] sm:$0xff]
        %v946 = vld [vmem:[%s251 + $0x12a0] sm:$0xff]
        %v947 = vld [vmem:[%s251 + $0x12a8] sm:$0xff]
        %v948 = vld [vmem:[%s251 + $0x12b0] sm:$0xff]
        %v949 = vld [vmem:[%s251 + $0x12b8] sm:$0xff]
        %v950 = vld [vmem:[%s251 + $0x12c0] sm:$0xff]
        %v951 = vld [vmem:[%s251 + $0x12c8] sm:$0xff]
        %v952 = vld [vmem:[%s251 + $0x12d0] sm:$0xff]
        %v953 = vld [vmem:[%s251 + $0x12d8] sm:$0xff]
        %v954 = vld [vmem:[%s251 + $0x12e0] sm:$0xff]
        %v955 = vld [vmem:[%s251 + $0x12e8] sm:$0xff]
        %v956 = vld [vmem:[%s251 + $0x12f0] sm:$0xff]
        %v957 = vld [vmem:[%s251 + $0x12f8] sm:$0xff]
        %v958 = vld [vmem:[%s251 + $0x1300] sm:$0xff]
        %v959 = vld [vmem:[%s251 + $0x1308] sm:$0xff]
        %v960 = vld [vmem:[%s251 + $0x1310] sm:$0xff]
        %v961 = vld [vmem:[%s251 + $0x1318] sm:$0xff]
        %v962 = vld [vmem:[%s251 + $0x1320] sm:$0xff]
        %v963 = vld [vmem:[%s251 + $0x1328] sm:$0xff]
        %v964 = vld [vmem:[%s251 + $0x1330] sm:$0xff]
        %v965 = vld [vmem:[%s251 + $0x1338] sm:$0xff]
        %v966 = vld [vmem:[%s251 + $0x1340] sm:$0xff]
        %v967 = vld [vmem:[%s251 + $0x1348] sm:$0xff]
        %v968 = vld [vmem:[%s251 + $0x1350] sm:$0xff]
        %v969 = vld [vmem:[%s251 + $0x1358] sm:$0xff]
        %v970 = vld [vmem:[%s251 + $0x1360] sm:$0xff]
        %v971 = vld [vmem:[%s251 + $0x1368] sm:$0xff]
        %v972 = vld [vmem:[%s251 + $0x1370] sm:$0xff]
        %v973 = vld [vmem:[%s251 + $0x1378] sm:$0xff]
        %v974 = vld [vmem:[%s251 + $0x1380] sm:$0xff]
        %v975 = vld [vmem:[%s251 + $0x1388] sm:$0xff]
        %v976 = vld [vmem:[%s251 + $0x1390] sm:$0xff]
        %v977 = vld [vmem:[%s251 + $0x1398] sm:$0xff]
        %v978 = vld [vmem:[%s251 + $0x13a0] sm:$0xff]
        %v979 = vld [vmem:[%s251 + $0x13a8] sm:$0xff]
        %v980 = vld [vmem:[%s251 + $0x13b0] sm:$0xff]
        %v981 = vld [vmem:[%s251 + $0x13b8] sm:$0xff]
        %v982 = vld [vmem:[%s251 + $0x13c0] sm:$0xff]
        %v983 = vld [vmem:[%s251 + $0x13c8] sm:$0xff]
        %v984 = vld [vmem:[%s251 + $0x13d0] sm:$0xff]
        %v985 = vld [vmem:[%s251 + $0x13d8] sm:$0xff]
        %v986 = vld [vmem:[%s251 + $0x13e0] sm:$0xff]
        %v987 = vld [vmem:[%s251 + $0x13e8] sm:$0xff]
        %v988 = vld [vmem:[%s251 + $0x13f0] sm:$0xff]
        %v989 = vld [vmem:[%s251 + $0x13f8] sm:$0xff]
        %v990 = vld [vmem:[%s251 + $0x1400] sm:$0xff]
        %v991 = vld [vmem:[%s251 + $0x1408] sm:$0xff]
        %v992 = vld [vmem:[%s251 + $0x1410] sm:$0xff]
        %v993 = vld [vmem:[%s251 + $0x1418] sm:$0xff]
        %v994 = vld [vmem:[%s251 + $0x1420] sm:$0xff]
        %v995 = vld [vmem:[%s251 + $0x1428] sm:$0xff]
        %v996 = vld [vmem:[%s251 + $0x1430] sm:$0xff]
        %v997 = vld [vmem:[%s251 + $0x1438] sm:$0xff]
        %v998 = vld [vmem:[%s251 + $0x1440] sm:$0xff]
        %v999 = vld [vmem:[%s251 + $0x1448] sm:$0xff]
        %v1000 = vld [vmem:[%s251 + $0x1450] sm:$0xff]
        %v1001 = vld [vmem:[%s251 + $0x1458] sm:$0xff]
        %v1002 = vld [vmem:[%s251 + $0x1460] sm:$0xff]
        %v1003 = vld [vmem:[%s251 + $0x1468] sm:$0xff]
        %v1004 = vld [vmem:[%s251 + $0x1470] sm:$0xff]
        %v1005 = vld [vmem:[%s251 + $0x1478] sm:$0xff]
        %v1006 = vld [vmem:[%s251 + $0x1480] sm:$0xff]
        %v1007 = vld [vmem:[%s251 + $0x1488] sm:$0xff]
        %v1008 = vld [vmem:[%s251 + $0x1490] sm:$0xff]
        %v1009 = vld [vmem:[%s251 + $0x1498] sm:$0xff]
        %v1010 = vld [vmem:[%s251 + $0x14a0] sm:$0xff]
        %v1011 = vld [vmem:[%s251 + $0x14a8] sm:$0xff]
        %v1012 = vld [vmem:[%s251 + $0x14b0] sm:$0xff]
        %v1013 = vld [vmem:[%s251 + $0x14b8] sm:$0xff]
        %v1014 = vld [vmem:[%s251 + $0x14c0] sm:$0xff]
        %v1015 = vld [vmem:[%s251 + $0x14c8] sm:$0xff]
        %v1016 = vld [vmem:[%s251 + $0x14d0] sm:$0xff]
        %v1017 = vld [vmem:[%s251 + $0x14d8] sm:$0xff]
        %v1018 = vld [vmem:[%s251 + $0x14e0] sm:$0xff]
        %v1019 = vld [vmem:[%s251 + $0x14e8] sm:$0xff]
        %v1020 = vld [vmem:[%s251 + $0x14f0] sm:$0xff]
        %v1021 = vld [vmem:[%s251 + $0x14f8] sm:$0xff]
        %v1022 = vld [vmem:[%s251 + $0x1500] sm:$0xff]
        %v1023 = vld [vmem:[%s251 + $0x1508] sm:$0xff]
        %v1024 = vld [vmem:[%s251 + $0x1510] sm:$0xff]
        %v1025 = vld [vmem:[%s251 + $0x1518] sm:$0xff]
        %v1026 = vld [vmem:[%s251 + $0x1520] sm:$0xff]
        %v1027 = vld [vmem:[%s251 + $0x1528] sm:$0xff]
        %v1028 = vld [vmem:[%s251 + $0x1530] sm:$0xff]
        %v1029 = vld [vmem:[%s251 + $0x1538] sm:$0xff]
        %v1030 = vld [vmem:[%s251 + $0x1540] sm:$0xff]
        %v1031 = vld [vmem:[%s251 + $0x1548] sm:$0xff]
        %v1032 = vld [vmem:[%s251 + $0x1550] sm:$0xff]
        %v1033 = vld [vmem:[%s251 + $0x1558] sm:$0xff]
        %v1034 = vld [vmem:[%s251 + $0x1560] sm:$0xff]
        %v1035 = vld [vmem:[%s251 + $0x1568] sm:$0xff]
        %v1036 = vld [vmem:[%s251 + $0x1570] sm:$0xff]
        %v1037 = vld [vmem:[%s251 + $0x1578] sm:$0xff]
        %v1038 = vld [vmem:[%s251 + $0x1580] sm:$0xff]
        %v1039 = vld [vmem:[%s251 + $0x1588] sm:$0xff]
        %v1040 = vld [vmem:[%s251 + $0x1590] sm:$0xff]
        %v1041 = vld [vmem:[%s251 + $0x1598] sm:$0xff]
        %v1042 = vld [vmem:[%s251 + $0x15a0] sm:$0xff]
        %v1043 = vld [vmem:[%s251 + $0x15a8] sm:$0xff]
        %v1044 = vld [vmem:[%s251 + $0x15b0] sm:$0xff]
        %v1045 = vld [vmem:[%s251 + $0x15b8] sm:$0xff]
        %v1046 = vld [vmem:[%s251 + $0x15c0] sm:$0xff]
        %v1047 = vld [vmem:[%s251 + $0x15c8] sm:$0xff]
        %v1048 = vld [vmem:[%s251 + $0x15d0] sm:$0xff]
        %v1049 = vld [vmem:[%s251 + $0x15d8] sm:$0xff]
        %v1050 = vld [vmem:[%s251 + $0x15e0] sm:$0xff]
        %v1051 = vld [vmem:[%s251 + $0x15e8] sm:$0xff]
        %v1052 = vld [vmem:[%s251 + $0x15f0] sm:$0xff]
        %v1053 = vld [vmem:[%s251 + $0x15f8] sm:$0xff]
        %v1054 = vld [vmem:[%s251 + $0x1600] sm:$0xff]
        %v1055 = vld [vmem:[%s251 + $0x1608] sm:$0xff]
        %v1056 = vld [vmem:[%s251 + $0x1610] sm:$0xff]
        %v1057 = vld [vmem:[%s251 + $0x1618] sm:$0xff]
        %v1058 = vld [vmem:[%s251 + $0x1620] sm:$0xff]
        %v1059 = vld [vmem:[%s251 + $0x1628] sm:$0xff]
        %v1060 = vld [vmem:[%s251 + $0x1630] sm:$0xff]
        %v1061 = vld [vmem:[%s251 + $0x1638] sm:$0xff]
        %v1062 = vld [vmem:[%s251 + $0x1640] sm:$0xff]
        %v1063 = vld [vmem:[%s251 + $0x1648] sm:$0xff]
        %v1064 = vld [vmem:[%s251 + $0x1650] sm:$0xff]
        %v1065 = vld [vmem:[%s251 + $0x1658] sm:$0xff]
        %v1066 = vld [vmem:[%s251 + $0x1660] sm:$0xff]
        %v1067 = vld [vmem:[%s251 + $0x1668] sm:$0xff]
        %v1068 = vld [vmem:[%s251 + $0x1670] sm:$0xff]
        %v1069 = vld [vmem:[%s251 + $0x1678] sm:$0xff]
        %v1070 = vld [vmem:[%s251 + $0x1680] sm:$0xff]
        %v1071 = vld [vmem:[%s251 + $0x1688] sm:$0xff]
        %v1072 = vld [vmem:[%s251 + $0x1690] sm:$0xff]
        %v1073 = vld [vmem:[%s251 + $0x1698] sm:$0xff]
        %v1074 = vld [vmem:[%s251 + $0x16a0] sm:$0xff]
        %v1075 = vld [vmem:[%s251 + $0x16a8] sm:$0xff]
        %v1076 = vld [vmem:[%s251 + $0x16b0] sm:$0xff]
        %v1077 = vld [vmem:[%s251 + $0x16b8] sm:$0xff]
        %v1078 = vld [vmem:[%s251 + $0x16c0] sm:$0xff]
        %v1079 = vld [vmem:[%s251 + $0x16c8] sm:$0xff]
        %v1080 = vld [vmem:[%s251 + $0x16d0] sm:$0xff]
        %v1081 = vld [vmem:[%s251 + $0x16d8] sm:$0xff]
        %v1082 = vld [vmem:[%s251 + $0x16e0] sm:$0xff]
        %v1083 = vld [vmem:[%s251 + $0x16e8] sm:$0xff]
        %v1084 = vld [vmem:[%s251 + $0x16f0] sm:$0xff]
        %v1085 = vld [vmem:[%s251 + $0x16f8] sm:$0xff]
        %v1086 = vld [vmem:[%s251 + $0x1700] sm:$0xff]
        %v1087 = vld [vmem:[%s251 + $0x1708] sm:$0xff]
        %v1088 = vld [vmem:[%s251 + $0x1710] sm:$0xff]
        %v1089 = vld [vmem:[%s251 + $0x1718] sm:$0xff]
        %v1090 = vld [vmem:[%s251 + $0x1720] sm:$0xff]
        %v1091 = vld [vmem:[%s251 + $0x1728] sm:$0xff]
        %v1092 = vld [vmem:[%s251 + $0x1730] sm:$0xff]
        %v1093 = vld [vmem:[%s251 + $0x1738] sm:$0xff]
        %v1094 = vld [vmem:[%s251 + $0x1740] sm:$0xff]
        %v1095 = vld [vmem:[%s251 + $0x1748] sm:$0xff]
        %v1096 = vld [vmem:[%s251 + $0x1750] sm:$0xff]
        %v1097 = vld [vmem:[%s251 + $0x1758] sm:$0xff]
        %v1098 = vld [vmem:[%s251 + $0x1760] sm:$0xff]
        %v1099 = vld [vmem:[%s251 + $0x1768] sm:$0xff]
        %v1100 = vld [vmem:[%s251 + $0x1770] sm:$0xff]
        %v1101 = vld [vmem:[%s251 + $0x1778] sm:$0xff]
        %v1102 = vld [vmem:[%s251 + $0x1780] sm:$0xff]
        %v1103 = vld [vmem:[%s251 + $0x1788] sm:$0xff]
        %v1104 = vld [vmem:[%s251 + $0x1790] sm:$0xff]
        %v1105 = vld [vmem:[%s251 + $0x1798] sm:$0xff]
        %v1106 = vld [vmem:[%s251 + $0x17a0] sm:$0xff]
        %v1107 = vld [vmem:[%s251 + $0x17a8] sm:$0xff]
        %v1108 = vld [vmem:[%s251 + $0x17b0] sm:$0xff]
        %v1109 = vld [vmem:[%s251 + $0x17b8] sm:$0xff]
        %v1110 = vld [vmem:[%s251 + $0x17c0] sm:$0xff]
        %v1111 = vld [vmem:[%s251 + $0x17c8] sm:$0xff]
        %v1112 = vld [vmem:[%s251 + $0x17d0] sm:$0xff]
        %v1113 = vld [vmem:[%s251 + $0x17d8] sm:$0xff]
        %v1114 = vld [vmem:[%s251 + $0x17e0] sm:$0xff]
        %v1115 = vld [vmem:[%s251 + $0x17e8] sm:$0xff]
        %v1116 = vld [vmem:[%s251 + $0x17f0] sm:$0xff]
        %v1117 = vld [vmem:[%s251 + $0x17f8] sm:$0xff]
        %v1142 = vunpack.c.l.b16 %v326
        %v1143 = vunpack.c.h.b16 %v326
        %v1144 = vunpack.c.l.b16 %v327
        %v1145 = vunpack.c.h.b16 %v327
        %v1146 = vunpack.c.l.b16 %v328
        %v1147 = vunpack.c.h.b16 %v328
        %v1148 = vunpack.c.l.b16 %v329
        %v1149 = vunpack.c.h.b16 %v329
        %v1150 = vunpack.c.l.b16 %v330
        %v1151 = vunpack.c.h.b16 %v330
        %v1152 = vunpack.c.l.b16 %v331
        %v1153 = vunpack.c.h.b16 %v331
        %v1154 = vunpack.c.l.b16 %v332
        %v1155 = vunpack.c.h.b16 %v332
        %v1156 = vunpack.c.l.b16 %v333
        %v1157 = vunpack.c.h.b16 %v333
        %v1158 = vunpack.c.l.b16 %v334
        %v1159 = vunpack.c.h.b16 %v334
        %v1160 = vunpack.c.l.b16 %v335
        %v1161 = vunpack.c.h.b16 %v335
        %v1162 = vunpack.c.l.b16 %v336
        %v1163 = vunpack.c.h.b16 %v336
        %v1164 = vunpack.c.l.b16 %v337
        %v1165 = vunpack.c.h.b16 %v337
        %v1166 = vunpack.c.l.b16 %v338
        %v1167 = vunpack.c.h.b16 %v338
        %v1168 = vunpack.c.l.b16 %v339
        %v1169 = vunpack.c.h.b16 %v339
        %v1170 = vunpack.c.l.b16 %v340
        %v1171 = vunpack.c.h.b16 %v340
        %v1172 = vunpack.c.l.b16 %v341
        %v1173 = vunpack.c.h.b16 %v341
        %v1174 = vunpack.c.l.b16 %v342
        %v1175 = vunpack.c.h.b16 %v342
        %v1176 = vunpack.c.l.b16 %v343
        %v1177 = vunpack.c.h.b16 %v343
        %v1178 = vunpack.c.l.b16 %v344
        %v1179 = vunpack.c.h.b16 %v344
        %v1180 = vunpack.c.l.b16 %v345
        %v1181 = vunpack.c.h.b16 %v345
        %v1182 = vunpack.c.l.b16 %v346
        %v1183 = vunpack.c.h.b16 %v346
        %v1184 = vunpack.c.l.b16 %v347
        %v1185 = vunpack.c.h.b16 %v347
        %v1186 = vunpack.c.l.b16 %v348
        %v1187 = vunpack.c.h.b16 %v348
        %v1188 = vunpack.c.l.b16 %v349
        %v1189 = vunpack.c.h.b16 %v349
        %v1190 = vpack.c.b16 %v1142, %v1142
        %v1191 = vpack.c.b16 %v1143, %v1143
        %v1192 = vpack.c.b16 %v1144, %v1144
        %v1193 = vpack.c.b16 %v1145, %v1145
        %v1194 = vpack.c.b16 %v1146, %v1146
        %v1195 = vpack.c.b16 %v1147, %v1147
        %v1196 = vpack.c.b16 %v1148, %v1148
        %v1197 = vpack.c.b16 %v1149, %v1149
        %v1198 = vpack.c.b16 %v1150, %v1150
        %v1199 = vpack.c.b16 %v1151, %v1151
        %v1200 = vpack.c.b16 %v1152, %v1152
        %v1201 = vpack.c.b16 %v1153, %v1153
        %v1202 = vpack.c.b16 %v1154, %v1154
        %v1203 = vpack.c.b16 %v1155, %v1155
        %v1204 = vpack.c.b16 %v1156, %v1156
        %v1205 = vpack.c.b16 %v1157, %v1157
        %v1206 = vpack.c.b16 %v1158, %v1158
        %v1207 = vpack.c.b16 %v1159, %v1159
        %v1208 = vpack.c.b16 %v1160, %v1160
        %v1209 = vpack.c.b16 %v1161, %v1161
        %v1210 = vpack.c.b16 %v1162, %v1162
        %v1211 = vpack.c.b16 %v1163, %v1163
        %v1212 = vpack.c.b16 %v1164, %v1164
        %v1213 = vpack.c.b16 %v1165, %v1165
        %v1214 = vpack.c.b16 %v1166, %v1166
        %v1215 = vpack.c.b16 %v1167, %v1167
        %v1216 = vpack.c.b16 %v1168, %v1168
        %v1217 = vpack.c.b16 %v1169, %v1169
        %v1218 = vpack.c.b16 %v1170, %v1170
        %v1219 = vpack.c.b16 %v1171, %v1171
        %v1220 = vpack.c.b16 %v1172, %v1172
        %v1221 = vpack.c.b16 %v1173, %v1173
        %v1222 = vpack.c.b16 %v1174, %v1174
        %v1223 = vpack.c.b16 %v1175, %v1175
        %v1224 = vpack.c.b16 %v1176, %v1176
        %v1225 = vpack.c.b16 %v1177, %v1177
        %v1226 = vpack.c.b16 %v1178, %v1178
        %v1227 = vpack.c.b16 %v1179, %v1179
        %v1228 = vpack.c.b16 %v1180, %v1180
        %v1229 = vpack.c.b16 %v1181, %v1181
        %v1230 = vpack.c.b16 %v1182, %v1182
        %v1231 = vpack.c.b16 %v1183, %v1183
        %v1232 = vpack.c.b16 %v1184, %v1184
        %v1233 = vpack.c.b16 %v1185, %v1185
        %v1234 = vpack.c.b16 %v1186, %v1186
        %v1235 = vpack.c.b16 %v1187, %v1187
        %v1236 = vpack.c.b16 %v1188, %v1188
        %v1237 = vpack.c.b16 %v1189, %v1189
        %v2054 = vunpack.c.l.b16 %v350
        %v2055 = vunpack.c.h.b16 %v350
        %v2056 = vunpack.c.l.b16 %v351
        %v2057 = vunpack.c.h.b16 %v351
        %v2058 = vunpack.c.l.b16 %v352
        %v2059 = vunpack.c.h.b16 %v352
        %v2060 = vunpack.c.l.b16 %v353
        %v2061 = vunpack.c.h.b16 %v353
        %v2062 = vunpack.c.l.b16 %v354
        %v2063 = vunpack.c.h.b16 %v354
        %v2064 = vunpack.c.l.b16 %v355
        %v2065 = vunpack.c.h.b16 %v355
        %v2066 = vunpack.c.l.b16 %v356
        %v2067 = vunpack.c.h.b16 %v356
        %v2068 = vunpack.c.l.b16 %v357
        %v2069 = vunpack.c.h.b16 %v357
        %v2070 = vunpack.c.l.b16 %v358
        %v2071 = vunpack.c.h.b16 %v358
        %v2072 = vunpack.c.l.b16 %v359
        %v2073 = vunpack.c.h.b16 %v359
        %v2074 = vunpack.c.l.b16 %v360
        %v2075 = vunpack.c.h.b16 %v360
        %v2076 = vunpack.c.l.b16 %v361
        %v2077 = vunpack.c.h.b16 %v361
        %v2078 = vunpack.c.l.b16 %v362
        %v2079 = vunpack.c.h.b16 %v362
        %v2080 = vunpack.c.l.b16 %v363
        %v2081 = vunpack.c.h.b16 %v363
        %v2082 = vunpack.c.l.b16 %v364
        %v2083 = vunpack.c.h.b16 %v364
        %v2084 = vunpack.c.l.b16 %v365
        %v2085 = vunpack.c.h.b16 %v365
        %v2086 = vunpack.c.l.b16 %v366
        %v2087 = vunpack.c.h.b16 %v366
        %v2088 = vunpack.c.l.b16 %v367
        %v2089 = vunpack.c.h.b16 %v367
        %v2090 = vunpack.c.l.b16 %v368
        %v2091 = vunpack.c.h.b16 %v368
        %v2092 = vunpack.c.l.b16 %v369
        %v2093 = vunpack.c.h.b16 %v369
        %v2094 = vunpack.c.l.b16 %v370
        %v2095 = vunpack.c.h.b16 %v370
        %v2096 = vunpack.c.l.b16 %v371
        %v2097 = vunpack.c.h.b16 %v371
        %v2098 = vunpack.c.l.b16 %v372
        %v2099 = vunpack.c.h.b16 %v372
        %v2100 = vunpack.c.l.b16 %v373
        %v2101 = vunpack.c.h.b16 %v373
        %v2102 = vunpack.c.l.b16 %v374
        %v2103 = vunpack.c.h.b16 %v374
        %v2104 = vunpack.c.l.b16 %v375
        %v2105 = vunpack.c.h.b16 %v375
        %v2106 = vunpack.c.l.b16 %v376
        %v2107 = vunpack.c.h.b16 %v376
        %v2108 = vunpack.c.l.b16 %v377
        %v2109 = vunpack.c.h.b16 %v377
        %v2110 = vunpack.c.l.b16 %v378
        %v2111 = vunpack.c.h.b16 %v378
        %v2112 = vunpack.c.l.b16 %v379
        %v2113 = vunpack.c.h.b16 %v379
        %v2114 = vunpack.c.l.b16 %v380
        %v2115 = vunpack.c.h.b16 %v380
        %v2116 = vunpack.c.l.b16 %v381
        %v2117 = vunpack.c.h.b16 %v381
        %v2118 = vunpack.c.l.b16 %v382
        %v2119 = vunpack.c.h.b16 %v382
        %v2120 = vunpack.c.l.b16 %v383
        %v2121 = vunpack.c.h.b16 %v383
        %v2122 = vunpack.c.l.b16 %v384
        %v2123 = vunpack.c.h.b16 %v384
        %v2124 = vunpack.c.l.b16 %v385
        %v2125 = vunpack.c.h.b16 %v385
        %v2126 = vunpack.c.l.b16 %v386
        %v2127 = vunpack.c.h.b16 %v386
        %v2128 = vunpack.c.l.b16 %v387
        %v2129 = vunpack.c.h.b16 %v387
        %v2130 = vunpack.c.l.b16 %v388
        %v2131 = vunpack.c.h.b16 %v388
        %v2132 = vunpack.c.l.b16 %v389
        %v2133 = vunpack.c.h.b16 %v389
        %v2134 = vunpack.c.l.b16 %v390
        %v2135 = vunpack.c.h.b16 %v390
        %v2136 = vunpack.c.l.b16 %v391
        %v2137 = vunpack.c.h.b16 %v391
        %v2138 = vunpack.c.l.b16 %v392
        %v2139 = vunpack.c.h.b16 %v392
        %v2140 = vunpack.c.l.b16 %v393
        %v2141 = vunpack.c.h.b16 %v393
        %v2142 = vunpack.c.l.b16 %v394
        %v2143 = vunpack.c.h.b16 %v394
        %v2144 = vunpack.c.l.b16 %v395
        %v2145 = vunpack.c.h.b16 %v395
        %v2146 = vunpack.c.l.b16 %v396
        %v2147 = vunpack.c.h.b16 %v396
        %v2148 = vunpack.c.l.b16 %v397
        %v2149 = vunpack.c.h.b16 %v397
        %v2150 = vunpack.c.l.b16 %v398
        %v2151 = vunpack.c.h.b16 %v398
        %v2152 = vunpack.c.l.b16 %v399
        %v2153 = vunpack.c.h.b16 %v399
        %v2154 = vunpack.c.l.b16 %v400
        %v2155 = vunpack.c.h.b16 %v400
        %v2156 = vunpack.c.l.b16 %v401
        %v2157 = vunpack.c.h.b16 %v401
        %v2158 = vunpack.c.l.b16 %v402
        %v2159 = vunpack.c.h.b16 %v402
        %v2160 = vunpack.c.l.b16 %v403
        %v2161 = vunpack.c.h.b16 %v403
        %v2162 = vunpack.c.l.b16 %v404
        %v2163 = vunpack.c.h.b16 %v404
        %v2164 = vunpack.c.l.b16 %v405
        %v2165 = vunpack.c.h.b16 %v405
        %v2166 = vunpack.c.l.b16 %v406
        %v2167 = vunpack.c.h.b16 %v406
        %v2168 = vunpack.c.l.b16 %v407
        %v2169 = vunpack.c.h.b16 %v407
        %v2170 = vunpack.c.l.b16 %v408
        %v2171 = vunpack.c.h.b16 %v408
        %v2172 = vunpack.c.l.b16 %v409
        %v2173 = vunpack.c.h.b16 %v409
        %v2174 = vunpack.c.l.b16 %v410
        %v2175 = vunpack.c.h.b16 %v410
        %v2176 = vunpack.c.l.b16 %v411
        %v2177 = vunpack.c.h.b16 %v411
        %v2178 = vunpack.c.l.b16 %v412
        %v2179 = vunpack.c.h.b16 %v412
        %v2180 = vunpack.c.l.b16 %v413
        %v2181 = vunpack.c.h.b16 %v413
        %v2182 = vunpack.c.l.b16 %v414
        %v2183 = vunpack.c.h.b16 %v414
        %v2184 = vunpack.c.l.b16 %v415
        %v2185 = vunpack.c.h.b16 %v415
        %v2186 = vunpack.c.l.b16 %v416
        %v2187 = vunpack.c.h.b16 %v416
        %v2188 = vunpack.c.l.b16 %v417
        %v2189 = vunpack.c.h.b16 %v417
        %v2190 = vunpack.c.l.b16 %v418
        %v2191 = vunpack.c.h.b16 %v418
        %v2192 = vunpack.c.l.b16 %v419
        %v2193 = vunpack.c.h.b16 %v419
        %v2194 = vunpack.c.l.b16 %v420
        %v2195 = vunpack.c.h.b16 %v420
        %v2196 = vunpack.c.l.b16 %v421
        %v2197 = vunpack.c.h.b16 %v421
        %v2198 = vunpack.c.l.b16 %v422
        %v2199 = vunpack.c.h.b16 %v422
        %v2200 = vunpack.c.l.b16 %v423
        %v2201 = vunpack.c.h.b16 %v423
        %v2202 = vunpack.c.l.b16 %v424
        %v2203 = vunpack.c.h.b16 %v424
        %v2204 = vunpack.c.l.b16 %v425
        %v2205 = vunpack.c.h.b16 %v425
        %v2206 = vunpack.c.l.b16 %v426
        %v2207 = vunpack.c.h.b16 %v426
        %v2208 = vunpack.c.l.b16 %v427
        %v2209 = vunpack.c.h.b16 %v427
        %v2210 = vunpack.c.l.b16 %v428
        %v2211 = vunpack.c.h.b16 %v428
        %v2212 = vunpack.c.l.b16 %v429
        %v2213 = vunpack.c.h.b16 %v429
        %v2214 = vunpack.c.l.b16 %v430
        %v2215 = vunpack.c.h.b16 %v430
        %v2216 = vunpack.c.l.b16 %v431
        %v2217 = vunpack.c.h.b16 %v431
        %v2218 = vunpack.c.l.b16 %v432
        %v2219 = vunpack.c.h.b16 %v432
        %v2220 = vunpack.c.l.b16 %v433
        %v2221 = vunpack.c.h.b16 %v433
        %v2222 = vunpack.c.l.b16 %v434
        %v2223 = vunpack.c.h.b16 %v434
        %v2224 = vunpack.c.l.b16 %v435
        %v2225 = vunpack.c.h.b16 %v435
        %v2226 = vunpack.c.l.b16 %v436
        %v2227 = vunpack.c.h.b16 %v436
        %v2228 = vunpack.c.l.b16 %v437
        %v2229 = vunpack.c.h.b16 %v437
        %v2230 = vunpack.c.l.b16 %v438
        %v2231 = vunpack.c.h.b16 %v438
        %v2232 = vunpack.c.l.b16 %v439
        %v2233 = vunpack.c.h.b16 %v439
        %v2234 = vunpack.c.l.b16 %v440
        %v2235 = vunpack.c.h.b16 %v440
        %v2236 = vunpack.c.l.b16 %v441
        %v2237 = vunpack.c.h.b16 %v441
        %v2238 = vunpack.c.l.b16 %v442
        %v2239 = vunpack.c.h.b16 %v442
        %v2240 = vunpack.c.l.b16 %v443
        %v2241 = vunpack.c.h.b16 %v443
        %v2242 = vunpack.c.l.b16 %v444
        %v2243 = vunpack.c.h.b16 %v444
        %v2244 = vunpack.c.l.b16 %v445
        %v2245 = vunpack.c.h.b16 %v445
        %v2246 = vunpack.c.l.b16 %v446
        %v2247 = vunpack.c.h.b16 %v446
        %v2248 = vunpack.c.l.b16 %v447
        %v2249 = vunpack.c.h.b16 %v447
        %v2250 = vunpack.c.l.b16 %v448
        %v2251 = vunpack.c.h.b16 %v448
        %v2252 = vunpack.c.l.b16 %v449
        %v2253 = vunpack.c.h.b16 %v449
        %v2254 = vunpack.c.l.b16 %v450
        %v2255 = vunpack.c.h.b16 %v450
        %v2256 = vunpack.c.l.b16 %v451
        %v2257 = vunpack.c.h.b16 %v451
        %v2258 = vunpack.c.l.b16 %v452
        %v2259 = vunpack.c.h.b16 %v452
        %v2260 = vunpack.c.l.b16 %v453
        %v2261 = vunpack.c.h.b16 %v453
        %v2262 = vunpack.c.l.b16 %v454
        %v2263 = vunpack.c.h.b16 %v454
        %v2264 = vunpack.c.l.b16 %v455
        %v2265 = vunpack.c.h.b16 %v455
        %v2266 = vunpack.c.l.b16 %v456
        %v2267 = vunpack.c.h.b16 %v456
        %v2268 = vunpack.c.l.b16 %v457
        %v2269 = vunpack.c.h.b16 %v457
        %v2270 = vunpack.c.l.b16 %v458
        %v2271 = vunpack.c.h.b16 %v458
        %v2272 = vunpack.c.l.b16 %v459
        %v2273 = vunpack.c.h.b16 %v459
        %v2274 = vunpack.c.l.b16 %v460
        %v2275 = vunpack.c.h.b16 %v460
        %v2276 = vunpack.c.l.b16 %v461
        %v2277 = vunpack.c.h.b16 %v461
        %v2278 = vunpack.c.l.b16 %v462
        %v2279 = vunpack.c.h.b16 %v462
        %v2280 = vunpack.c.l.b16 %v463
        %v2281 = vunpack.c.h.b16 %v463
        %v2282 = vunpack.c.l.b16 %v464
        %v2283 = vunpack.c.h.b16 %v464
        %v2284 = vunpack.c.l.b16 %v465
        %v2285 = vunpack.c.h.b16 %v465
        %v2286 = vunpack.c.l.b16 %v466
        %v2287 = vunpack.c.h.b16 %v466
        %v2288 = vunpack.c.l.b16 %v467
        %v2289 = vunpack.c.h.b16 %v467
        %v2290 = vunpack.c.l.b16 %v468
        %v2291 = vunpack.c.h.b16 %v468
        %v2292 = vunpack.c.l.b16 %v469
        %v2293 = vunpack.c.h.b16 %v469
        %v2294 = vunpack.c.l.b16 %v470
        %v2295 = vunpack.c.h.b16 %v470
        %v2296 = vunpack.c.l.b16 %v471
        %v2297 = vunpack.c.h.b16 %v471
        %v2298 = vunpack.c.l.b16 %v472
        %v2299 = vunpack.c.h.b16 %v472
        %v2300 = vunpack.c.l.b16 %v473
        %v2301 = vunpack.c.h.b16 %v473
        %v2302 = vunpack.c.l.b16 %v474
        %v2303 = vunpack.c.h.b16 %v474
        %v2304 = vunpack.c.l.b16 %v475
        %v2305 = vunpack.c.h.b16 %v475
        %v2306 = vunpack.c.l.b16 %v476
        %v2307 = vunpack.c.h.b16 %v476
        %v2308 = vunpack.c.l.b16 %v477
        %v2309 = vunpack.c.h.b16 %v477
        %v2310 = vunpack.c.l.b16 %v478
        %v2311 = vunpack.c.h.b16 %v478
        %v2312 = vunpack.c.l.b16 %v479
        %v2313 = vunpack.c.h.b16 %v479
        %v2314 = vunpack.c.l.b16 %v480
        %v2315 = vunpack.c.h.b16 %v480
        %v2316 = vunpack.c.l.b16 %v481
        %v2317 = vunpack.c.h.b16 %v481
        %v2318 = vunpack.c.l.b16 %v482
        %v2319 = vunpack.c.h.b16 %v482
        %v2320 = vunpack.c.l.b16 %v483
        %v2321 = vunpack.c.h.b16 %v483
        %v2322 = vunpack.c.l.b16 %v484
        %v2323 = vunpack.c.h.b16 %v484
        %v2324 = vunpack.c.l.b16 %v485
        %v2325 = vunpack.c.h.b16 %v485
        %v2326 = vunpack.c.l.b16 %v486
        %v2327 = vunpack.c.h.b16 %v486
        %v2328 = vunpack.c.l.b16 %v487
        %v2329 = vunpack.c.h.b16 %v487
        %v2330 = vunpack.c.l.b16 %v488
        %v2331 = vunpack.c.h.b16 %v488
        %v2332 = vunpack.c.l.b16 %v489
        %v2333 = vunpack.c.h.b16 %v489
        %v2334 = vunpack.c.l.b16 %v490
        %v2335 = vunpack.c.h.b16 %v490
        %v2336 = vunpack.c.l.b16 %v491
        %v2337 = vunpack.c.h.b16 %v491
        %v2338 = vunpack.c.l.b16 %v492
        %v2339 = vunpack.c.h.b16 %v492
        %v2340 = vunpack.c.l.b16 %v493
        %v2341 = vunpack.c.h.b16 %v493
        %v2342 = vunpack.c.l.b16 %v494
        %v2343 = vunpack.c.h.b16 %v494
        %v2344 = vunpack.c.l.b16 %v495
        %v2345 = vunpack.c.h.b16 %v495
        %v2346 = vunpack.c.l.b16 %v496
        %v2347 = vunpack.c.h.b16 %v496
        %v2348 = vunpack.c.l.b16 %v497
        %v2349 = vunpack.c.h.b16 %v497
        %v2350 = vunpack.c.l.b16 %v498
        %v2351 = vunpack.c.h.b16 %v498
        %v2352 = vunpack.c.l.b16 %v499
        %v2353 = vunpack.c.h.b16 %v499
        %v2354 = vunpack.c.l.b16 %v500
        %v2355 = vunpack.c.h.b16 %v500
        %v2356 = vunpack.c.l.b16 %v501
        %v2357 = vunpack.c.h.b16 %v501
        %v2358 = vunpack.c.l.b16 %v502
        %v2359 = vunpack.c.h.b16 %v502
        %v2360 = vunpack.c.l.b16 %v503
        %v2361 = vunpack.c.h.b16 %v503
        %v2362 = vunpack.c.l.b16 %v504
        %v2363 = vunpack.c.h.b16 %v504
        %v2364 = vunpack.c.l.b16 %v505
        %v2365 = vunpack.c.h.b16 %v505
        %v2366 = vunpack.c.l.b16 %v506
        %v2367 = vunpack.c.h.b16 %v506
        %v2368 = vunpack.c.l.b16 %v507
        %v2369 = vunpack.c.h.b16 %v507
        %v2370 = vunpack.c.l.b16 %v508
        %v2371 = vunpack.c.h.b16 %v508
        %v2372 = vunpack.c.l.b16 %v509
        %v2373 = vunpack.c.h.b16 %v509
        %v2374 = vunpack.c.l.b16 %v510
        %v2375 = vunpack.c.h.b16 %v510
        %v2376 = vunpack.c.l.b16 %v511
        %v2377 = vunpack.c.h.b16 %v511
        %v2378 = vunpack.c.l.b16 %v512
        %v2379 = vunpack.c.h.b16 %v512
        %v2380 = vunpack.c.l.b16 %v513
        %v2381 = vunpack.c.h.b16 %v513
        %v2382 = vunpack.c.l.b16 %v514
        %v2383 = vunpack.c.h.b16 %v514
        %v2384 = vunpack.c.l.b16 %v515
        %v2385 = vunpack.c.h.b16 %v515
        %v2386 = vunpack.c.l.b16 %v516
        %v2387 = vunpack.c.h.b16 %v516
        %v2388 = vunpack.c.l.b16 %v517
        %v2389 = vunpack.c.h.b16 %v517
        %v2390 = vunpack.c.l.b16 %v518
        %v2391 = vunpack.c.h.b16 %v518
        %v2392 = vunpack.c.l.b16 %v519
        %v2393 = vunpack.c.h.b16 %v519
        %v2394 = vunpack.c.l.b16 %v520
        %v2395 = vunpack.c.h.b16 %v520
        %v2396 = vunpack.c.l.b16 %v521
        %v2397 = vunpack.c.h.b16 %v521
        %v2398 = vunpack.c.l.b16 %v522
        %v2399 = vunpack.c.h.b16 %v522
        %v2400 = vunpack.c.l.b16 %v523
        %v2401 = vunpack.c.h.b16 %v523
        %v2402 = vunpack.c.l.b16 %v524
        %v2403 = vunpack.c.h.b16 %v524
        %v2404 = vunpack.c.l.b16 %v525
        %v2405 = vunpack.c.h.b16 %v525
        %v2406 = vunpack.c.l.b16 %v526
        %v2407 = vunpack.c.h.b16 %v526
        %v2408 = vunpack.c.l.b16 %v527
        %v2409 = vunpack.c.h.b16 %v527
        %v2410 = vunpack.c.l.b16 %v528
        %v2411 = vunpack.c.h.b16 %v528
        %v2412 = vunpack.c.l.b16 %v529
        %v2413 = vunpack.c.h.b16 %v529
        %v2414 = vunpack.c.l.b16 %v530
        %v2415 = vunpack.c.h.b16 %v530
        %v2416 = vunpack.c.l.b16 %v531
        %v2417 = vunpack.c.h.b16 %v531
        %v2418 = vunpack.c.l.b16 %v532
        %v2419 = vunpack.c.h.b16 %v532
        %v2420 = vunpack.c.l.b16 %v533
        %v2421 = vunpack.c.h.b16 %v533
        %v2422 = vunpack.c.l.b16 %v534
        %v2423 = vunpack.c.h.b16 %v534
        %v2424 = vunpack.c.l.b16 %v535
        %v2425 = vunpack.c.h.b16 %v535
        %v2426 = vunpack.c.l.b16 %v536
        %v2427 = vunpack.c.h.b16 %v536
        %v2428 = vunpack.c.l.b16 %v537
        %v2429 = vunpack.c.h.b16 %v537
        %v2430 = vunpack.c.l.b16 %v538
        %v2431 = vunpack.c.h.b16 %v538
        %v2432 = vunpack.c.l.b16 %v539
        %v2433 = vunpack.c.h.b16 %v539
        %v2434 = vunpack.c.l.b16 %v540
        %v2435 = vunpack.c.h.b16 %v540
        %v2436 = vunpack.c.l.b16 %v541
        %v2437 = vunpack.c.h.b16 %v541
        %v2438 = vunpack.c.l.b16 %v542
        %v2439 = vunpack.c.h.b16 %v542
        %v2440 = vunpack.c.l.b16 %v543
        %v2441 = vunpack.c.h.b16 %v543
        %v2442 = vunpack.c.l.b16 %v544
        %v2443 = vunpack.c.h.b16 %v544
        %v2444 = vunpack.c.l.b16 %v545
        %v2445 = vunpack.c.h.b16 %v545
        %v2446 = vunpack.c.l.b16 %v546
        %v2447 = vunpack.c.h.b16 %v546
        %v2448 = vunpack.c.l.b16 %v547
        %v2449 = vunpack.c.h.b16 %v547
        %v2450 = vunpack.c.l.b16 %v548
        %v2451 = vunpack.c.h.b16 %v548
        %v2452 = vunpack.c.l.b16 %v549
        %v2453 = vunpack.c.h.b16 %v549
        %v2454 = vunpack.c.l.b16 %v550
        %v2455 = vunpack.c.h.b16 %v550
        %v2456 = vunpack.c.l.b16 %v551
        %v2457 = vunpack.c.h.b16 %v551
        %v2458 = vunpack.c.l.b16 %v552
        %v2459 = vunpack.c.h.b16 %v552
        %v2460 = vunpack.c.l.b16 %v553
        %v2461 = vunpack.c.h.b16 %v553
        %v2462 = vunpack.c.l.b16 %v554
        %v2463 = vunpack.c.h.b16 %v554
        %v2464 = vunpack.c.l.b16 %v555
        %v2465 = vunpack.c.h.b16 %v555
        %v2466 = vunpack.c.l.b16 %v556
        %v2467 = vunpack.c.h.b16 %v556
        %v2468 = vunpack.c.l.b16 %v557
        %v2469 = vunpack.c.h.b16 %v557
        %v2470 = vunpack.c.l.b16 %v558
        %v2471 = vunpack.c.h.b16 %v558
        %v2472 = vunpack.c.l.b16 %v559
        %v2473 = vunpack.c.h.b16 %v559
        %v2474 = vunpack.c.l.b16 %v560
        %v2475 = vunpack.c.h.b16 %v560
        %v2476 = vunpack.c.l.b16 %v561
        %v2477 = vunpack.c.h.b16 %v561
        %v2478 = vunpack.c.l.b16 %v562
        %v2479 = vunpack.c.h.b16 %v562
        %v2480 = vunpack.c.l.b16 %v563
        %v2481 = vunpack.c.h.b16 %v563
        %v2482 = vunpack.c.l.b16 %v564
        %v2483 = vunpack.c.h.b16 %v564
        %v2484 = vunpack.c.l.b16 %v565
        %v2485 = vunpack.c.h.b16 %v565
        %v2486 = vunpack.c.l.b16 %v566
        %v2487 = vunpack.c.h.b16 %v566
        %v2488 = vunpack.c.l.b16 %v567
        %v2489 = vunpack.c.h.b16 %v567
        %v2490 = vunpack.c.l.b16 %v568
        %v2491 = vunpack.c.h.b16 %v568
        %v2492 = vunpack.c.l.b16 %v569
        %v2493 = vunpack.c.h.b16 %v569
        %v2494 = vunpack.c.l.b16 %v570
        %v2495 = vunpack.c.h.b16 %v570
        %v2496 = vunpack.c.l.b16 %v571
        %v2497 = vunpack.c.h.b16 %v571
        %v2498 = vunpack.c.l.b16 %v572
        %v2499 = vunpack.c.h.b16 %v572
        %v2500 = vunpack.c.l.b16 %v573
        %v2501 = vunpack.c.h.b16 %v573
        %v2502 = vunpack.c.l.b16 %v574
        %v2503 = vunpack.c.h.b16 %v574
        %v2504 = vunpack.c.l.b16 %v575
        %v2505 = vunpack.c.h.b16 %v575
        %v2506 = vunpack.c.l.b16 %v576
        %v2507 = vunpack.c.h.b16 %v576
        %v2508 = vunpack.c.l.b16 %v577
        %v2509 = vunpack.c.h.b16 %v577
        %v2510 = vunpack.c.l.b16 %v578
        %v2511 = vunpack.c.h.b16 %v578
        %v2512 = vunpack.c.l.b16 %v579
        %v2513 = vunpack.c.h.b16 %v579
        %v2514 = vunpack.c.l.b16 %v580
        %v2515 = vunpack.c.h.b16 %v580
        %v2516 = vunpack.c.l.b16 %v581
        %v2517 = vunpack.c.h.b16 %v581
        %v2518 = vunpack.c.l.b16 %v582
        %v2519 = vunpack.c.h.b16 %v582
        %v2520 = vunpack.c.l.b16 %v583
        %v2521 = vunpack.c.h.b16 %v583
        %v2522 = vunpack.c.l.b16 %v584
        %v2523 = vunpack.c.h.b16 %v584
        %v2524 = vunpack.c.l.b16 %v585
        %v2525 = vunpack.c.h.b16 %v585
        %v2526 = vunpack.c.l.b16 %v586
        %v2527 = vunpack.c.h.b16 %v586
        %v2528 = vunpack.c.l.b16 %v587
        %v2529 = vunpack.c.h.b16 %v587
        %v2530 = vunpack.c.l.b16 %v588
        %v2531 = vunpack.c.h.b16 %v588
        %v2532 = vunpack.c.l.b16 %v589
        %v2533 = vunpack.c.h.b16 %v589
        %v2534 = vunpack.c.l.b16 %v590
        %v2535 = vunpack.c.h.b16 %v590
        %v2536 = vunpack.c.l.b16 %v591
        %v2537 = vunpack.c.h.b16 %v591
        %v2538 = vunpack.c.l.b16 %v592
        %v2539 = vunpack.c.h.b16 %v592
        %v2540 = vunpack.c.l.b16 %v593
        %v2541 = vunpack.c.h.b16 %v593
        %v2542 = vunpack.c.l.b16 %v594
        %v2543 = vunpack.c.h.b16 %v594
        %v2544 = vunpack.c.l.b16 %v595
        %v2545 = vunpack.c.h.b16 %v595
        %v2546 = vunpack.c.l.b16 %v596
        %v2547 = vunpack.c.h.b16 %v596
        %v2548 = vunpack.c.l.b16 %v597
        %v2549 = vunpack.c.h.b16 %v597
        %v2550 = vunpack.c.l.b16 %v598
        %v2551 = vunpack.c.h.b16 %v598
        %v2552 = vunpack.c.l.b16 %v599
        %v2553 = vunpack.c.h.b16 %v599
        %v2554 = vunpack.c.l.b16 %v600
        %v2555 = vunpack.c.h.b16 %v600
        %v2556 = vunpack.c.l.b16 %v601
        %v2557 = vunpack.c.h.b16 %v601
        %v2558 = vunpack.c.l.b16 %v602
        %v2559 = vunpack.c.h.b16 %v602
        %v2560 = vunpack.c.l.b16 %v603
        %v2561 = vunpack.c.h.b16 %v603
        %v2562 = vunpack.c.l.b16 %v604
        %v2563 = vunpack.c.h.b16 %v604
        %v2564 = vunpack.c.l.b16 %v605
        %v2565 = vunpack.c.h.b16 %v605
        %v2566 = vunpack.c.l.b16 %v606
        %v2567 = vunpack.c.h.b16 %v606
        %v2568 = vunpack.c.l.b16 %v607
        %v2569 = vunpack.c.h.b16 %v607
        %v2570 = vunpack.c.l.b16 %v608
        %v2571 = vunpack.c.h.b16 %v608
        %v2572 = vunpack.c.l.b16 %v609
        %v2573 = vunpack.c.h.b16 %v609
        %v2574 = vunpack.c.l.b16 %v610
        %v2575 = vunpack.c.h.b16 %v610
        %v2576 = vunpack.c.l.b16 %v611
        %v2577 = vunpack.c.h.b16 %v611
        %v2578 = vunpack.c.l.b16 %v612
        %v2579 = vunpack.c.h.b16 %v612
        %v2580 = vunpack.c.l.b16 %v613
        %v2581 = vunpack.c.h.b16 %v613
        %v2582 = vunpack.c.l.b16 %v614
        %v2583 = vunpack.c.h.b16 %v614
        %v2584 = vunpack.c.l.b16 %v615
        %v2585 = vunpack.c.h.b16 %v615
        %v2586 = vunpack.c.l.b16 %v616
        %v2587 = vunpack.c.h.b16 %v616
        %v2588 = vunpack.c.l.b16 %v617
        %v2589 = vunpack.c.h.b16 %v617
        %v2590 = vunpack.c.l.b16 %v618
        %v2591 = vunpack.c.h.b16 %v618
        %v2592 = vunpack.c.l.b16 %v619
        %v2593 = vunpack.c.h.b16 %v619
        %v2594 = vunpack.c.l.b16 %v620
        %v2595 = vunpack.c.h.b16 %v620
        %v2596 = vunpack.c.l.b16 %v621
        %v2597 = vunpack.c.h.b16 %v621
        %v2598 = vunpack.c.l.b16 %v622
        %v2599 = vunpack.c.h.b16 %v622
        %v2600 = vunpack.c.l.b16 %v623
        %v2601 = vunpack.c.h.b16 %v623
        %v2602 = vunpack.c.l.b16 %v624
        %v2603 = vunpack.c.h.b16 %v624
        %v2604 = vunpack.c.l.b16 %v625
        %v2605 = vunpack.c.h.b16 %v625
        %v2606 = vunpack.c.l.b16 %v626
        %v2607 = vunpack.c.h.b16 %v626
        %v2608 = vunpack.c.l.b16 %v627
        %v2609 = vunpack.c.h.b16 %v627
        %v2610 = vunpack.c.l.b16 %v628
        %v2611 = vunpack.c.h.b16 %v628
        %v2612 = vunpack.c.l.b16 %v629
        %v2613 = vunpack.c.h.b16 %v629
        %v2614 = vunpack.c.l.b16 %v630
        %v2615 = vunpack.c.h.b16 %v630
        %v2616 = vunpack.c.l.b16 %v631
        %v2617 = vunpack.c.h.b16 %v631
        %v2618 = vunpack.c.l.b16 %v632
        %v2619 = vunpack.c.h.b16 %v632
        %v2620 = vunpack.c.l.b16 %v633
        %v2621 = vunpack.c.h.b16 %v633
        %v2622 = vunpack.c.l.b16 %v634
        %v2623 = vunpack.c.h.b16 %v634
        %v2624 = vunpack.c.l.b16 %v635
        %v2625 = vunpack.c.h.b16 %v635
        %v2626 = vunpack.c.l.b16 %v636
        %v2627 = vunpack.c.h.b16 %v636
        %v2628 = vunpack.c.l.b16 %v637
        %v2629 = vunpack.c.h.b16 %v637
        %v2630 = vunpack.c.l.b16 %v638
        %v2631 = vunpack.c.h.b16 %v638
        %v2632 = vunpack.c.l.b16 %v639
        %v2633 = vunpack.c.h.b16 %v639
        %v2634 = vunpack.c.l.b16 %v640
        %v2635 = vunpack.c.h.b16 %v640
        %v2636 = vunpack.c.l.b16 %v641
        %v2637 = vunpack.c.h.b16 %v641
        %v2638 = vunpack.c.l.b16 %v642
        %v2639 = vunpack.c.h.b16 %v642
        %v2640 = vunpack.c.l.b16 %v643
        %v2641 = vunpack.c.h.b16 %v643
        %v2642 = vunpack.c.l.b16 %v644
        %v2643 = vunpack.c.h.b16 %v644
        %v2644 = vunpack.c.l.b16 %v645
        %v2645 = vunpack.c.h.b16 %v645
        %v2646 = vunpack.c.l.b16 %v646
        %v2647 = vunpack.c.h.b16 %v646
        %v2648 = vunpack.c.l.b16 %v647
        %v2649 = vunpack.c.h.b16 %v647
        %v2650 = vunpack.c.l.b16 %v648
        %v2651 = vunpack.c.h.b16 %v648
        %v2652 = vunpack.c.l.b16 %v649
        %v2653 = vunpack.c.h.b16 %v649
        %v2654 = vunpack.c.l.b16 %v650
        %v2655 = vunpack.c.h.b16 %v650
        %v2656 = vunpack.c.l.b16 %v651
        %v2657 = vunpack.c.h.b16 %v651
        %v2658 = vunpack.c.l.b16 %v652
        %v2659 = vunpack.c.h.b16 %v652
        %v2660 = vunpack.c.l.b16 %v653
        %v2661 = vunpack.c.h.b16 %v653
        %v2662 = vunpack.c.l.b16 %v654
        %v2663 = vunpack.c.h.b16 %v654
        %v2664 = vunpack.c.l.b16 %v655
        %v2665 = vunpack.c.h.b16 %v655
        %v2666 = vunpack.c.l.b16 %v656
        %v2667 = vunpack.c.h.b16 %v656
        %v2668 = vunpack.c.l.b16 %v657
        %v2669 = vunpack.c.h.b16 %v657
        %v2670 = vunpack.c.l.b16 %v658
        %v2671 = vunpack.c.h.b16 %v658
        %v2672 = vunpack.c.l.b16 %v659
        %v2673 = vunpack.c.h.b16 %v659
        %v2674 = vunpack.c.l.b16 %v660
        %v2675 = vunpack.c.h.b16 %v660
        %v2676 = vunpack.c.l.b16 %v661
        %v2677 = vunpack.c.h.b16 %v661
        %v2678 = vunpack.c.l.b16 %v662
        %v2679 = vunpack.c.h.b16 %v662
        %v2680 = vunpack.c.l.b16 %v663
        %v2681 = vunpack.c.h.b16 %v663
        %v2682 = vunpack.c.l.b16 %v664
        %v2683 = vunpack.c.h.b16 %v664
        %v2684 = vunpack.c.l.b16 %v665
        %v2685 = vunpack.c.h.b16 %v665
        %v2686 = vunpack.c.l.b16 %v666
        %v2687 = vunpack.c.h.b16 %v666
        %v2688 = vunpack.c.l.b16 %v667
        %v2689 = vunpack.c.h.b16 %v667
        %v2690 = vunpack.c.l.b16 %v668
        %v2691 = vunpack.c.h.b16 %v668
        %v2692 = vunpack.c.l.b16 %v669
        %v2693 = vunpack.c.h.b16 %v669
        %v2694 = vunpack.c.l.b16 %v670
        %v2695 = vunpack.c.h.b16 %v670
        %v2696 = vunpack.c.l.b16 %v671
        %v2697 = vunpack.c.h.b16 %v671
        %v2698 = vunpack.c.l.b16 %v672
        %v2699 = vunpack.c.h.b16 %v672
        %v2700 = vunpack.c.l.b16 %v673
        %v2701 = vunpack.c.h.b16 %v673
        %v2702 = vunpack.c.l.b16 %v674
        %v2703 = vunpack.c.h.b16 %v674
        %v2704 = vunpack.c.l.b16 %v675
        %v2705 = vunpack.c.h.b16 %v675
        %v2706 = vunpack.c.l.b16 %v676
        %v2707 = vunpack.c.h.b16 %v676
        %v2708 = vunpack.c.l.b16 %v677
        %v2709 = vunpack.c.h.b16 %v677
        %v2710 = vunpack.c.l.b16 %v678
        %v2711 = vunpack.c.h.b16 %v678
        %v2712 = vunpack.c.l.b16 %v679
        %v2713 = vunpack.c.h.b16 %v679
        %v2714 = vunpack.c.l.b16 %v680
        %v2715 = vunpack.c.h.b16 %v680
        %v2716 = vunpack.c.l.b16 %v681
        %v2717 = vunpack.c.h.b16 %v681
        %v2718 = vunpack.c.l.b16 %v682
        %v2719 = vunpack.c.h.b16 %v682
        %v2720 = vunpack.c.l.b16 %v683
        %v2721 = vunpack.c.h.b16 %v683
        %v2722 = vunpack.c.l.b16 %v684
        %v2723 = vunpack.c.h.b16 %v684
        %v2724 = vunpack.c.l.b16 %v685
        %v2725 = vunpack.c.h.b16 %v685
        %v2726 = vunpack.c.l.b16 %v686
        %v2727 = vunpack.c.h.b16 %v686
        %v2728 = vunpack.c.l.b16 %v687
        %v2729 = vunpack.c.h.b16 %v687
        %v2730 = vunpack.c.l.b16 %v688
        %v2731 = vunpack.c.h.b16 %v688
        %v2732 = vunpack.c.l.b16 %v689
        %v2733 = vunpack.c.h.b16 %v689
        %v2734 = vunpack.c.l.b16 %v690
        %v2735 = vunpack.c.h.b16 %v690
        %v2736 = vunpack.c.l.b16 %v691
        %v2737 = vunpack.c.h.b16 %v691
        %v2738 = vunpack.c.l.b16 %v692
        %v2739 = vunpack.c.h.b16 %v692
        %v2740 = vunpack.c.l.b16 %v693
        %v2741 = vunpack.c.h.b16 %v693
        %v2742 = vunpack.c.l.b16 %v694
        %v2743 = vunpack.c.h.b16 %v694
        %v2744 = vunpack.c.l.b16 %v695
        %v2745 = vunpack.c.h.b16 %v695
        %v2746 = vunpack.c.l.b16 %v696
        %v2747 = vunpack.c.h.b16 %v696
        %v2748 = vunpack.c.l.b16 %v697
        %v2749 = vunpack.c.h.b16 %v697
        %v2750 = vunpack.c.l.b16 %v698
        %v2751 = vunpack.c.h.b16 %v698
        %v2752 = vunpack.c.l.b16 %v699
        %v2753 = vunpack.c.h.b16 %v699
        %v2754 = vunpack.c.l.b16 %v700
        %v2755 = vunpack.c.h.b16 %v700
        %v2756 = vunpack.c.l.b16 %v701
        %v2757 = vunpack.c.h.b16 %v701
        %v2758 = vunpack.c.l.b16 %v702
        %v2759 = vunpack.c.h.b16 %v702
        %v2760 = vunpack.c.l.b16 %v703
        %v2761 = vunpack.c.h.b16 %v703
        %v2762 = vunpack.c.l.b16 %v704
        %v2763 = vunpack.c.h.b16 %v704
        %v2764 = vunpack.c.l.b16 %v705
        %v2765 = vunpack.c.h.b16 %v705
        %v2766 = vunpack.c.l.b16 %v706
        %v2767 = vunpack.c.h.b16 %v706
        %v2768 = vunpack.c.l.b16 %v707
        %v2769 = vunpack.c.h.b16 %v707
        %v2770 = vunpack.c.l.b16 %v708
        %v2771 = vunpack.c.h.b16 %v708
        %v2772 = vunpack.c.l.b16 %v709
        %v2773 = vunpack.c.h.b16 %v709
        %v2774 = vunpack.c.l.b16 %v710
        %v2775 = vunpack.c.h.b16 %v710
        %v2776 = vunpack.c.l.b16 %v711
        %v2777 = vunpack.c.h.b16 %v711
        %v2778 = vunpack.c.l.b16 %v712
        %v2779 = vunpack.c.h.b16 %v712
        %v2780 = vunpack.c.l.b16 %v713
        %v2781 = vunpack.c.h.b16 %v713
        %v2782 = vunpack.c.l.b16 %v714
        %v2783 = vunpack.c.h.b16 %v714
        %v2784 = vunpack.c.l.b16 %v715
        %v2785 = vunpack.c.h.b16 %v715
        %v2786 = vunpack.c.l.b16 %v716
        %v2787 = vunpack.c.h.b16 %v716
        %v2788 = vunpack.c.l.b16 %v717
        %v2789 = vunpack.c.h.b16 %v717
        %v2790 = vunpack.c.l.b16 %v718
        %v2791 = vunpack.c.h.b16 %v718
        %v2792 = vunpack.c.l.b16 %v719
        %v2793 = vunpack.c.h.b16 %v719
        %v2794 = vunpack.c.l.b16 %v720
        %v2795 = vunpack.c.h.b16 %v720
        %v2796 = vunpack.c.l.b16 %v721
        %v2797 = vunpack.c.h.b16 %v721
        %v2798 = vunpack.c.l.b16 %v722
        %v2799 = vunpack.c.h.b16 %v722
        %v2800 = vunpack.c.l.b16 %v723
        %v2801 = vunpack.c.h.b16 %v723
        %v2802 = vunpack.c.l.b16 %v724
        %v2803 = vunpack.c.h.b16 %v724
        %v2804 = vunpack.c.l.b16 %v725
        %v2805 = vunpack.c.h.b16 %v725
        %v2806 = vunpack.c.l.b16 %v726
        %v2807 = vunpack.c.h.b16 %v726
        %v2808 = vunpack.c.l.b16 %v727
        %v2809 = vunpack.c.h.b16 %v727
        %v2810 = vunpack.c.l.b16 %v728
        %v2811 = vunpack.c.h.b16 %v728
        %v2812 = vunpack.c.l.b16 %v729
        %v2813 = vunpack.c.h.b16 %v729
        %v2814 = vunpack.c.l.b16 %v730
        %v2815 = vunpack.c.h.b16 %v730
        %v2816 = vunpack.c.l.b16 %v731
        %v2817 = vunpack.c.h.b16 %v731
        %v2818 = vunpack.c.l.b16 %v732
        %v2819 = vunpack.c.h.b16 %v732
        %v2820 = vunpack.c.l.b16 %v733
        %v2821 = vunpack.c.h.b16 %v733
        %v2822 = vunpack.c.l.b16 %v734
        %v2823 = vunpack.c.h.b16 %v734
        %v2824 = vunpack.c.l.b16 %v735
        %v2825 = vunpack.c.h.b16 %v735
        %v2826 = vunpack.c.l.b16 %v736
        %v2827 = vunpack.c.h.b16 %v736
        %v2828 = vunpack.c.l.b16 %v737
        %v2829 = vunpack.c.h.b16 %v737
        %v2830 = vunpack.c.l.b16 %v738
        %v2831 = vunpack.c.h.b16 %v738
        %v2832 = vunpack.c.l.b16 %v739
        %v2833 = vunpack.c.h.b16 %v739
        %v2834 = vunpack.c.l.b16 %v740
        %v2835 = vunpack.c.h.b16 %v740
        %v2836 = vunpack.c.l.b16 %v741
        %v2837 = vunpack.c.h.b16 %v741
        %v2838 = vunpack.c.l.b16 %v742
        %v2839 = vunpack.c.h.b16 %v742
        %v2840 = vunpack.c.l.b16 %v743
        %v2841 = vunpack.c.h.b16 %v743
        %v2842 = vunpack.c.l.b16 %v744
        %v2843 = vunpack.c.h.b16 %v744
        %v2844 = vunpack.c.l.b16 %v745
        %v2845 = vunpack.c.h.b16 %v745
        %v2846 = vunpack.c.l.b16 %v746
        %v2847 = vunpack.c.h.b16 %v746
        %v2848 = vunpack.c.l.b16 %v747
        %v2849 = vunpack.c.h.b16 %v747
        %v2850 = vunpack.c.l.b16 %v748
        %v2851 = vunpack.c.h.b16 %v748
        %v2852 = vunpack.c.l.b16 %v749
        %v2853 = vunpack.c.h.b16 %v749
        %v2854 = vunpack.c.l.b16 %v750
        %v2855 = vunpack.c.h.b16 %v750
        %v2856 = vunpack.c.l.b16 %v751
        %v2857 = vunpack.c.h.b16 %v751
        %v2858 = vunpack.c.l.b16 %v752
        %v2859 = vunpack.c.h.b16 %v752
        %v2860 = vunpack.c.l.b16 %v753
        %v2861 = vunpack.c.h.b16 %v753
        %v2862 = vunpack.c.l.b16 %v754
        %v2863 = vunpack.c.h.b16 %v754
        %v2864 = vunpack.c.l.b16 %v755
        %v2865 = vunpack.c.h.b16 %v755
        %v2866 = vunpack.c.l.b16 %v756
        %v2867 = vunpack.c.h.b16 %v756
        %v2868 = vunpack.c.l.b16 %v757
        %v2869 = vunpack.c.h.b16 %v757
        %v2870 = vunpack.c.l.b16 %v758
        %v2871 = vunpack.c.h.b16 %v758
        %v2872 = vunpack.c.l.b16 %v759
        %v2873 = vunpack.c.h.b16 %v759
        %v2874 = vunpack.c.l.b16 %v760
        %v2875 = vunpack.c.h.b16 %v760
        %v2876 = vunpack.c.l.b16 %v761
        %v2877 = vunpack.c.h.b16 %v761
        %v2878 = vunpack.c.l.b16 %v762
        %v2879 = vunpack.c.h.b16 %v762
        %v2880 = vunpack.c.l.b16 %v763
        %v2881 = vunpack.c.h.b16 %v763
        %v2882 = vunpack.c.l.b16 %v764
        %v2883 = vunpack.c.h.b16 %v764
        %v2884 = vunpack.c.l.b16 %v765
        %v2885 = vunpack.c.h.b16 %v765
        %v2886 = vunpack.c.l.b16 %v766
        %v2887 = vunpack.c.h.b16 %v766
        %v2888 = vunpack.c.l.b16 %v767
        %v2889 = vunpack.c.h.b16 %v767
        %v2890 = vunpack.c.l.b16 %v768
        %v2891 = vunpack.c.h.b16 %v768
        %v2892 = vunpack.c.l.b16 %v769
        %v2893 = vunpack.c.h.b16 %v769
        %v2894 = vunpack.c.l.b16 %v770
        %v2895 = vunpack.c.h.b16 %v770
        %v2896 = vunpack.c.l.b16 %v771
        %v2897 = vunpack.c.h.b16 %v771
        %v2898 = vunpack.c.l.b16 %v772
        %v2899 = vunpack.c.h.b16 %v772
        %v2900 = vunpack.c.l.b16 %v773
        %v2901 = vunpack.c.h.b16 %v773
        %v2902 = vunpack.c.l.b16 %v774
        %v2903 = vunpack.c.h.b16 %v774
        %v2904 = vunpack.c.l.b16 %v775
        %v2905 = vunpack.c.h.b16 %v775
        %v2906 = vunpack.c.l.b16 %v776
        %v2907 = vunpack.c.h.b16 %v776
        %v2908 = vunpack.c.l.b16 %v777
        %v2909 = vunpack.c.h.b16 %v777
        %v2910 = vunpack.c.l.b16 %v778
        %v2911 = vunpack.c.h.b16 %v778
        %v2912 = vunpack.c.l.b16 %v779
        %v2913 = vunpack.c.h.b16 %v779
        %v2914 = vunpack.c.l.b16 %v780
        %v2915 = vunpack.c.h.b16 %v780
        %v2916 = vunpack.c.l.b16 %v781
        %v2917 = vunpack.c.h.b16 %v781
        %v2918 = vunpack.c.l.b16 %v782
        %v2919 = vunpack.c.h.b16 %v782
        %v2920 = vunpack.c.l.b16 %v783
        %v2921 = vunpack.c.h.b16 %v783
        %v2922 = vunpack.c.l.b16 %v784
        %v2923 = vunpack.c.h.b16 %v784
        %v2924 = vunpack.c.l.b16 %v785
        %v2925 = vunpack.c.h.b16 %v785
        %v2926 = vunpack.c.l.b16 %v786
        %v2927 = vunpack.c.h.b16 %v786
        %v2928 = vunpack.c.l.b16 %v787
        %v2929 = vunpack.c.h.b16 %v787
        %v2930 = vunpack.c.l.b16 %v788
        %v2931 = vunpack.c.h.b16 %v788
        %v2932 = vunpack.c.l.b16 %v789
        %v2933 = vunpack.c.h.b16 %v789
        %v2934 = vunpack.c.l.b16 %v790
        %v2935 = vunpack.c.h.b16 %v790
        %v2936 = vunpack.c.l.b16 %v791
        %v2937 = vunpack.c.h.b16 %v791
        %v2938 = vunpack.c.l.b16 %v792
        %v2939 = vunpack.c.h.b16 %v792
        %v2940 = vunpack.c.l.b16 %v793
        %v2941 = vunpack.c.h.b16 %v793
        %v2942 = vunpack.c.l.b16 %v794
        %v2943 = vunpack.c.h.b16 %v794
        %v2944 = vunpack.c.l.b16 %v795
        %v2945 = vunpack.c.h.b16 %v795
        %v2946 = vunpack.c.l.b16 %v796
        %v2947 = vunpack.c.h.b16 %v796
        %v2948 = vunpack.c.l.b16 %v797
        %v2949 = vunpack.c.h.b16 %v797
        %v2950 = vunpack.c.l.b16 %v798
        %v2951 = vunpack.c.h.b16 %v798
        %v2952 = vunpack.c.l.b16 %v799
        %v2953 = vunpack.c.h.b16 %v799
        %v2954 = vunpack.c.l.b16 %v800
        %v2955 = vunpack.c.h.b16 %v800
        %v2956 = vunpack.c.l.b16 %v801
        %v2957 = vunpack.c.h.b16 %v801
        %v2958 = vunpack.c.l.b16 %v802
        %v2959 = vunpack.c.h.b16 %v802
        %v2960 = vunpack.c.l.b16 %v803
        %v2961 = vunpack.c.h.b16 %v803
        %v2962 = vunpack.c.l.b16 %v804
        %v2963 = vunpack.c.h.b16 %v804
        %v2964 = vunpack.c.l.b16 %v805
        %v2965 = vunpack.c.h.b16 %v805
        %v2966 = vunpack.c.l.b16 %v806
        %v2967 = vunpack.c.h.b16 %v806
        %v2968 = vunpack.c.l.b16 %v807
        %v2969 = vunpack.c.h.b16 %v807
        %v2970 = vunpack.c.l.b16 %v808
        %v2971 = vunpack.c.h.b16 %v808
        %v2972 = vunpack.c.l.b16 %v809
        %v2973 = vunpack.c.h.b16 %v809
        %v2974 = vunpack.c.l.b16 %v810
        %v2975 = vunpack.c.h.b16 %v810
        %v2976 = vunpack.c.l.b16 %v811
        %v2977 = vunpack.c.h.b16 %v811
        %v2978 = vunpack.c.l.b16 %v812
        %v2979 = vunpack.c.h.b16 %v812
        %v2980 = vunpack.c.l.b16 %v813
        %v2981 = vunpack.c.h.b16 %v813
        %v2982 = vunpack.c.l.b16 %v814
        %v2983 = vunpack.c.h.b16 %v814
        %v2984 = vunpack.c.l.b16 %v815
        %v2985 = vunpack.c.h.b16 %v815
        %v2986 = vunpack.c.l.b16 %v816
        %v2987 = vunpack.c.h.b16 %v816
        %v2988 = vunpack.c.l.b16 %v817
        %v2989 = vunpack.c.h.b16 %v817
        %v2990 = vunpack.c.l.b16 %v818
        %v2991 = vunpack.c.h.b16 %v818
        %v2992 = vunpack.c.l.b16 %v819
        %v2993 = vunpack.c.h.b16 %v819
        %v2994 = vunpack.c.l.b16 %v820
        %v2995 = vunpack.c.h.b16 %v820
        %v2996 = vunpack.c.l.b16 %v821
        %v2997 = vunpack.c.h.b16 %v821
        %v2998 = vunpack.c.l.b16 %v822
        %v2999 = vunpack.c.h.b16 %v822
        %v3000 = vunpack.c.l.b16 %v823
        %v3001 = vunpack.c.h.b16 %v823
        %v3002 = vunpack.c.l.b16 %v824
        %v3003 = vunpack.c.h.b16 %v824
        %v3004 = vunpack.c.l.b16 %v825
        %v3005 = vunpack.c.h.b16 %v825
        %v3006 = vunpack.c.l.b16 %v826
        %v3007 = vunpack.c.h.b16 %v826
        %v3008 = vunpack.c.l.b16 %v827
        %v3009 = vunpack.c.h.b16 %v827
        %v3010 = vunpack.c.l.b16 %v828
        %v3011 = vunpack.c.h.b16 %v828
        %v3012 = vunpack.c.l.b16 %v829
        %v3013 = vunpack.c.h.b16 %v829
        %v3014 = vunpack.c.l.b16 %v830
        %v3015 = vunpack.c.h.b16 %v830
        %v3016 = vunpack.c.l.b16 %v831
        %v3017 = vunpack.c.h.b16 %v831
        %v3018 = vunpack.c.l.b16 %v832
        %v3019 = vunpack.c.h.b16 %v832
        %v3020 = vunpack.c.l.b16 %v833
        %v3021 = vunpack.c.h.b16 %v833
        %v3022 = vunpack.c.l.b16 %v834
        %v3023 = vunpack.c.h.b16 %v834
        %v3024 = vunpack.c.l.b16 %v835
        %v3025 = vunpack.c.h.b16 %v835
        %v3026 = vunpack.c.l.b16 %v836
        %v3027 = vunpack.c.h.b16 %v836
        %v3028 = vunpack.c.l.b16 %v837
        %v3029 = vunpack.c.h.b16 %v837
        %v3030 = vunpack.c.l.b16 %v838
        %v3031 = vunpack.c.h.b16 %v838
        %v3032 = vunpack.c.l.b16 %v839
        %v3033 = vunpack.c.h.b16 %v839
        %v3034 = vunpack.c.l.b16 %v840
        %v3035 = vunpack.c.h.b16 %v840
        %v3036 = vunpack.c.l.b16 %v841
        %v3037 = vunpack.c.h.b16 %v841
        %v3038 = vunpack.c.l.b16 %v842
        %v3039 = vunpack.c.h.b16 %v842
        %v3040 = vunpack.c.l.b16 %v843
        %v3041 = vunpack.c.h.b16 %v843
        %v3042 = vunpack.c.l.b16 %v844
        %v3043 = vunpack.c.h.b16 %v844
        %v3044 = vunpack.c.l.b16 %v845
        %v3045 = vunpack.c.h.b16 %v845
        %v3046 = vunpack.c.l.b16 %v846
        %v3047 = vunpack.c.h.b16 %v846
        %v3048 = vunpack.c.l.b16 %v847
        %v3049 = vunpack.c.h.b16 %v847
        %v3050 = vunpack.c.l.b16 %v848
        %v3051 = vunpack.c.h.b16 %v848
        %v3052 = vunpack.c.l.b16 %v849
        %v3053 = vunpack.c.h.b16 %v849
        %v3054 = vunpack.c.l.b16 %v850
        %v3055 = vunpack.c.h.b16 %v850
        %v3056 = vunpack.c.l.b16 %v851
        %v3057 = vunpack.c.h.b16 %v851
        %v3058 = vunpack.c.l.b16 %v852
        %v3059 = vunpack.c.h.b16 %v852
        %v3060 = vunpack.c.l.b16 %v853
        %v3061 = vunpack.c.h.b16 %v853
        %v3062 = vunpack.c.l.b16 %v854
        %v3063 = vunpack.c.h.b16 %v854
        %v3064 = vunpack.c.l.b16 %v855
        %v3065 = vunpack.c.h.b16 %v855
        %v3066 = vunpack.c.l.b16 %v856
        %v3067 = vunpack.c.h.b16 %v856
        %v3068 = vunpack.c.l.b16 %v857
        %v3069 = vunpack.c.h.b16 %v857
        %v3070 = vunpack.c.l.b16 %v858
        %v3071 = vunpack.c.h.b16 %v858
        %v3072 = vunpack.c.l.b16 %v859
        %v3073 = vunpack.c.h.b16 %v859
        %v3074 = vunpack.c.l.b16 %v860
        %v3075 = vunpack.c.h.b16 %v860
        %v3076 = vunpack.c.l.b16 %v861
        %v3077 = vunpack.c.h.b16 %v861
        %v3078 = vunpack.c.l.b16 %v862
        %v3079 = vunpack.c.h.b16 %v862
        %v3080 = vunpack.c.l.b16 %v863
        %v3081 = vunpack.c.h.b16 %v863
        %v3082 = vunpack.c.l.b16 %v864
        %v3083 = vunpack.c.h.b16 %v864
        %v3084 = vunpack.c.l.b16 %v865
        %v3085 = vunpack.c.h.b16 %v865
        %v3086 = vunpack.c.l.b16 %v866
        %v3087 = vunpack.c.h.b16 %v866
        %v3088 = vunpack.c.l.b16 %v867
        %v3089 = vunpack.c.h.b16 %v867
        %v3090 = vunpack.c.l.b16 %v868
        %v3091 = vunpack.c.h.b16 %v868
        %v3092 = vunpack.c.l.b16 %v869
        %v3093 = vunpack.c.h.b16 %v869
        %v3094 = vunpack.c.l.b16 %v870
        %v3095 = vunpack.c.h.b16 %v870
        %v3096 = vunpack.c.l.b16 %v871
        %v3097 = vunpack.c.h.b16 %v871
        %v3098 = vunpack.c.l.b16 %v872
        %v3099 = vunpack.c.h.b16 %v872
        %v3100 = vunpack.c.l.b16 %v873
        %v3101 = vunpack.c.h.b16 %v873
        %v3102 = vunpack.c.l.b16 %v874
        %v3103 = vunpack.c.h.b16 %v874
        %v3104 = vunpack.c.l.b16 %v875
        %v3105 = vunpack.c.h.b16 %v875
        %v3106 = vunpack.c.l.b16 %v876
        %v3107 = vunpack.c.h.b16 %v876
        %v3108 = vunpack.c.l.b16 %v877
        %v3109 = vunpack.c.h.b16 %v877
        %v3110 = vunpack.c.l.b16 %v878
        %v3111 = vunpack.c.h.b16 %v878
        %v3112 = vunpack.c.l.b16 %v879
        %v3113 = vunpack.c.h.b16 %v879
        %v3114 = vunpack.c.l.b16 %v880
        %v3115 = vunpack.c.h.b16 %v880
        %v3116 = vunpack.c.l.b16 %v881
        %v3117 = vunpack.c.h.b16 %v881
        %v3118 = vunpack.c.l.b16 %v882
        %v3119 = vunpack.c.h.b16 %v882
        %v3120 = vunpack.c.l.b16 %v883
        %v3121 = vunpack.c.h.b16 %v883
        %v3122 = vunpack.c.l.b16 %v884
        %v3123 = vunpack.c.h.b16 %v884
        %v3124 = vunpack.c.l.b16 %v885
        %v3125 = vunpack.c.h.b16 %v885
        %v3126 = vunpack.c.l.b16 %v886
        %v3127 = vunpack.c.h.b16 %v886
        %v3128 = vunpack.c.l.b16 %v887
        %v3129 = vunpack.c.h.b16 %v887
        %v3130 = vunpack.c.l.b16 %v888
        %v3131 = vunpack.c.h.b16 %v888
        %v3132 = vunpack.c.l.b16 %v889
        %v3133 = vunpack.c.h.b16 %v889
        %v3134 = vunpack.c.l.b16 %v890
        %v3135 = vunpack.c.h.b16 %v890
        %v3136 = vunpack.c.l.b16 %v891
        %v3137 = vunpack.c.h.b16 %v891
        %v3138 = vunpack.c.l.b16 %v892
        %v3139 = vunpack.c.h.b16 %v892
        %v3140 = vunpack.c.l.b16 %v893
        %v3141 = vunpack.c.h.b16 %v893
        %v3142 = vunpack.c.l.b16 %v894
        %v3143 = vunpack.c.h.b16 %v894
        %v3144 = vunpack.c.l.b16 %v895
        %v3145 = vunpack.c.h.b16 %v895
        %v3146 = vunpack.c.l.b16 %v896
        %v3147 = vunpack.c.h.b16 %v896
        %v3148 = vunpack.c.l.b16 %v897
        %v3149 = vunpack.c.h.b16 %v897
        %v3150 = vunpack.c.l.b16 %v898
        %v3151 = vunpack.c.h.b16 %v898
        %v3152 = vunpack.c.l.b16 %v899
        %v3153 = vunpack.c.h.b16 %v899
        %v3154 = vunpack.c.l.b16 %v900
        %v3155 = vunpack.c.h.b16 %v900
        %v3156 = vunpack.c.l.b16 %v901
        %v3157 = vunpack.c.h.b16 %v901
        %v3158 = vunpack.c.l.b16 %v902
        %v3159 = vunpack.c.h.b16 %v902
        %v3160 = vunpack.c.l.b16 %v903
        %v3161 = vunpack.c.h.b16 %v903
        %v3162 = vunpack.c.l.b16 %v904
        %v3163 = vunpack.c.h.b16 %v904
        %v3164 = vunpack.c.l.b16 %v905
        %v3165 = vunpack.c.h.b16 %v905
        %v3166 = vunpack.c.l.b16 %v906
        %v3167 = vunpack.c.h.b16 %v906
        %v3168 = vunpack.c.l.b16 %v907
        %v3169 = vunpack.c.h.b16 %v907
        %v3170 = vunpack.c.l.b16 %v908
        %v3171 = vunpack.c.h.b16 %v908
        %v3172 = vunpack.c.l.b16 %v909
        %v3173 = vunpack.c.h.b16 %v909
        %v3174 = vunpack.c.l.b16 %v910
        %v3175 = vunpack.c.h.b16 %v910
        %v3176 = vunpack.c.l.b16 %v911
        %v3177 = vunpack.c.h.b16 %v911
        %v3178 = vunpack.c.l.b16 %v912
        %v3179 = vunpack.c.h.b16 %v912
        %v3180 = vunpack.c.l.b16 %v913
        %v3181 = vunpack.c.h.b16 %v913
        %v3182 = vunpack.c.l.b16 %v914
        %v3183 = vunpack.c.h.b16 %v914
        %v3184 = vunpack.c.l.b16 %v915
        %v3185 = vunpack.c.h.b16 %v915
        %v3186 = vunpack.c.l.b16 %v916
        %v3187 = vunpack.c.h.b16 %v916
        %v3188 = vunpack.c.l.b16 %v917
        %v3189 = vunpack.c.h.b16 %v917
        %v3190 = vunpack.c.l.b16 %v918
        %v3191 = vunpack.c.h.b16 %v918
        %v3192 = vunpack.c.l.b16 %v919
        %v3193 = vunpack.c.h.b16 %v919
        %v3194 = vunpack.c.l.b16 %v920
        %v3195 = vunpack.c.h.b16 %v920
        %v3196 = vunpack.c.l.b16 %v921
        %v3197 = vunpack.c.h.b16 %v921
        %v3198 = vunpack.c.l.b16 %v922
        %v3199 = vunpack.c.h.b16 %v922
        %v3200 = vunpack.c.l.b16 %v923
        %v3201 = vunpack.c.h.b16 %v923
        %v3202 = vunpack.c.l.b16 %v924
        %v3203 = vunpack.c.h.b16 %v924
        %v3204 = vunpack.c.l.b16 %v925
        %v3205 = vunpack.c.h.b16 %v925
        %v3206 = vunpack.c.l.b16 %v926
        %v3207 = vunpack.c.h.b16 %v926
        %v3208 = vunpack.c.l.b16 %v927
        %v3209 = vunpack.c.h.b16 %v927
        %v3210 = vunpack.c.l.b16 %v928
        %v3211 = vunpack.c.h.b16 %v928
        %v3212 = vunpack.c.l.b16 %v929
        %v3213 = vunpack.c.h.b16 %v929
        %v3214 = vunpack.c.l.b16 %v930
        %v3215 = vunpack.c.h.b16 %v930
        %v3216 = vunpack.c.l.b16 %v931
        %v3217 = vunpack.c.h.b16 %v931
        %v3218 = vunpack.c.l.b16 %v932
        %v3219 = vunpack.c.h.b16 %v932
        %v3220 = vunpack.c.l.b16 %v933
        %v3221 = vunpack.c.h.b16 %v933
        %v3222 = vunpack.c.l.b16 %v934
        %v3223 = vunpack.c.h.b16 %v934
        %v3224 = vunpack.c.l.b16 %v935
        %v3225 = vunpack.c.h.b16 %v935
        %v3226 = vunpack.c.l.b16 %v936
        %v3227 = vunpack.c.h.b16 %v936
        %v3228 = vunpack.c.l.b16 %v937
        %v3229 = vunpack.c.h.b16 %v937
        %v3230 = vunpack.c.l.b16 %v938
        %v3231 = vunpack.c.h.b16 %v938
        %v3232 = vunpack.c.l.b16 %v939
        %v3233 = vunpack.c.h.b16 %v939
        %v3234 = vunpack.c.l.b16 %v940
        %v3235 = vunpack.c.h.b16 %v940
        %v3236 = vunpack.c.l.b16 %v941
        %v3237 = vunpack.c.h.b16 %v941
        %v3238 = vunpack.c.l.b16 %v942
        %v3239 = vunpack.c.h.b16 %v942
        %v3240 = vunpack.c.l.b16 %v943
        %v3241 = vunpack.c.h.b16 %v943
        %v3242 = vunpack.c.l.b16 %v944
        %v3243 = vunpack.c.h.b16 %v944
        %v3244 = vunpack.c.l.b16 %v945
        %v3245 = vunpack.c.h.b16 %v945
        %v3246 = vunpack.c.l.b16 %v946
        %v3247 = vunpack.c.h.b16 %v946
        %v3248 = vunpack.c.l.b16 %v947
        %v3249 = vunpack.c.h.b16 %v947
        %v3250 = vunpack.c.l.b16 %v948
        %v3251 = vunpack.c.h.b16 %v948
        %v3252 = vunpack.c.l.b16 %v949
        %v3253 = vunpack.c.h.b16 %v949
        %v3254 = vunpack.c.l.b16 %v950
        %v3255 = vunpack.c.h.b16 %v950
        %v3256 = vunpack.c.l.b16 %v951
        %v3257 = vunpack.c.h.b16 %v951
        %v3258 = vunpack.c.l.b16 %v952
        %v3259 = vunpack.c.h.b16 %v952
        %v3260 = vunpack.c.l.b16 %v953
        %v3261 = vunpack.c.h.b16 %v953
        %v3262 = vunpack.c.l.b16 %v954
        %v3263 = vunpack.c.h.b16 %v954
        %v3264 = vunpack.c.l.b16 %v955
        %v3265 = vunpack.c.h.b16 %v955
        %v3266 = vunpack.c.l.b16 %v956
        %v3267 = vunpack.c.h.b16 %v956
        %v3268 = vunpack.c.l.b16 %v957
        %v3269 = vunpack.c.h.b16 %v957
        %v3270 = vunpack.c.l.b16 %v958
        %v3271 = vunpack.c.h.b16 %v958
        %v3272 = vunpack.c.l.b16 %v959
        %v3273 = vunpack.c.h.b16 %v959
        %v3274 = vunpack.c.l.b16 %v960
        %v3275 = vunpack.c.h.b16 %v960
        %v3276 = vunpack.c.l.b16 %v961
        %v3277 = vunpack.c.h.b16 %v961
        %v3278 = vunpack.c.l.b16 %v962
        %v3279 = vunpack.c.h.b16 %v962
        %v3280 = vunpack.c.l.b16 %v963
        %v3281 = vunpack.c.h.b16 %v963
        %v3282 = vunpack.c.l.b16 %v964
        %v3283 = vunpack.c.h.b16 %v964
        %v3284 = vunpack.c.l.b16 %v965
        %v3285 = vunpack.c.h.b16 %v965
        %v3286 = vunpack.c.l.b16 %v966
        %v3287 = vunpack.c.h.b16 %v966
        %v3288 = vunpack.c.l.b16 %v967
        %v3289 = vunpack.c.h.b16 %v967
        %v3290 = vunpack.c.l.b16 %v968
        %v3291 = vunpack.c.h.b16 %v968
        %v3292 = vunpack.c.l.b16 %v969
        %v3293 = vunpack.c.h.b16 %v969
        %v3294 = vunpack.c.l.b16 %v970
        %v3295 = vunpack.c.h.b16 %v970
        %v3296 = vunpack.c.l.b16 %v971
        %v3297 = vunpack.c.h.b16 %v971
        %v3298 = vunpack.c.l.b16 %v972
        %v3299 = vunpack.c.h.b16 %v972
        %v3300 = vunpack.c.l.b16 %v973
        %v3301 = vunpack.c.h.b16 %v973
        %v3302 = vunpack.c.l.b16 %v974
        %v3303 = vunpack.c.h.b16 %v974
        %v3304 = vunpack.c.l.b16 %v975
        %v3305 = vunpack.c.h.b16 %v975
        %v3306 = vunpack.c.l.b16 %v976
        %v3307 = vunpack.c.h.b16 %v976
        %v3308 = vunpack.c.l.b16 %v977
        %v3309 = vunpack.c.h.b16 %v977
        %v3310 = vunpack.c.l.b16 %v978
        %v3311 = vunpack.c.h.b16 %v978
        %v3312 = vunpack.c.l.b16 %v979
        %v3313 = vunpack.c.h.b16 %v979
        %v3314 = vunpack.c.l.b16 %v980
        %v3315 = vunpack.c.h.b16 %v980
        %v3316 = vunpack.c.l.b16 %v981
        %v3317 = vunpack.c.h.b16 %v981
        %v3318 = vunpack.c.l.b16 %v982
        %v3319 = vunpack.c.h.b16 %v982
        %v3320 = vunpack.c.l.b16 %v983
        %v3321 = vunpack.c.h.b16 %v983
        %v3322 = vunpack.c.l.b16 %v984
        %v3323 = vunpack.c.h.b16 %v984
        %v3324 = vunpack.c.l.b16 %v985
        %v3325 = vunpack.c.h.b16 %v985
        %v3326 = vunpack.c.l.b16 %v986
        %v3327 = vunpack.c.h.b16 %v986
        %v3328 = vunpack.c.l.b16 %v987
        %v3329 = vunpack.c.h.b16 %v987
        %v3330 = vunpack.c.l.b16 %v988
        %v3331 = vunpack.c.h.b16 %v988
        %v3332 = vunpack.c.l.b16 %v989
        %v3333 = vunpack.c.h.b16 %v989
        %v3334 = vunpack.c.l.b16 %v990
        %v3335 = vunpack.c.h.b16 %v990
        %v3336 = vunpack.c.l.b16 %v991
        %v3337 = vunpack.c.h.b16 %v991
        %v3338 = vunpack.c.l.b16 %v992
        %v3339 = vunpack.c.h.b16 %v992
        %v3340 = vunpack.c.l.b16 %v993
        %v3341 = vunpack.c.h.b16 %v993
        %v3342 = vunpack.c.l.b16 %v994
        %v3343 = vunpack.c.h.b16 %v994
        %v3344 = vunpack.c.l.b16 %v995
        %v3345 = vunpack.c.h.b16 %v995
        %v3346 = vunpack.c.l.b16 %v996
        %v3347 = vunpack.c.h.b16 %v996
        %v3348 = vunpack.c.l.b16 %v997
        %v3349 = vunpack.c.h.b16 %v997
        %v3350 = vunpack.c.l.b16 %v998
        %v3351 = vunpack.c.h.b16 %v998
        %v3352 = vunpack.c.l.b16 %v999
        %v3353 = vunpack.c.h.b16 %v999
        %v3354 = vunpack.c.l.b16 %v1000
        %v3355 = vunpack.c.h.b16 %v1000
        %v3356 = vunpack.c.l.b16 %v1001
        %v3357 = vunpack.c.h.b16 %v1001
        %v3358 = vunpack.c.l.b16 %v1002
        %v3359 = vunpack.c.h.b16 %v1002
        %v3360 = vunpack.c.l.b16 %v1003
        %v3361 = vunpack.c.h.b16 %v1003
        %v3362 = vunpack.c.l.b16 %v1004
        %v3363 = vunpack.c.h.b16 %v1004
        %v3364 = vunpack.c.l.b16 %v1005
        %v3365 = vunpack.c.h.b16 %v1005
        %v3366 = vunpack.c.l.b16 %v1006
        %v3367 = vunpack.c.h.b16 %v1006
        %v3368 = vunpack.c.l.b16 %v1007
        %v3369 = vunpack.c.h.b16 %v1007
        %v3370 = vunpack.c.l.b16 %v1008
        %v3371 = vunpack.c.h.b16 %v1008
        %v3372 = vunpack.c.l.b16 %v1009
        %v3373 = vunpack.c.h.b16 %v1009
        %v3374 = vunpack.c.l.b16 %v1010
        %v3375 = vunpack.c.h.b16 %v1010
        %v3376 = vunpack.c.l.b16 %v1011
        %v3377 = vunpack.c.h.b16 %v1011
        %v3378 = vunpack.c.l.b16 %v1012
        %v3379 = vunpack.c.h.b16 %v1012
        %v3380 = vunpack.c.l.b16 %v1013
        %v3381 = vunpack.c.h.b16 %v1013
        %v3382 = vunpack.c.l.b16 %v1014
        %v3383 = vunpack.c.h.b16 %v1014
        %v3384 = vunpack.c.l.b16 %v1015
        %v3385 = vunpack.c.h.b16 %v1015
        %v3386 = vunpack.c.l.b16 %v1016
        %v3387 = vunpack.c.h.b16 %v1016
        %v3388 = vunpack.c.l.b16 %v1017
        %v3389 = vunpack.c.h.b16 %v1017
        %v3390 = vunpack.c.l.b16 %v1018
        %v3391 = vunpack.c.h.b16 %v1018
        %v3392 = vunpack.c.l.b16 %v1019
        %v3393 = vunpack.c.h.b16 %v1019
        %v3394 = vunpack.c.l.b16 %v1020
        %v3395 = vunpack.c.h.b16 %v1020
        %v3396 = vunpack.c.l.b16 %v1021
        %v3397 = vunpack.c.h.b16 %v1021
        %v3398 = vunpack.c.l.b16 %v1022
        %v3399 = vunpack.c.h.b16 %v1022
        %v3400 = vunpack.c.l.b16 %v1023
        %v3401 = vunpack.c.h.b16 %v1023
        %v3402 = vunpack.c.l.b16 %v1024
        %v3403 = vunpack.c.h.b16 %v1024
        %v3404 = vunpack.c.l.b16 %v1025
        %v3405 = vunpack.c.h.b16 %v1025
        %v3406 = vunpack.c.l.b16 %v1026
        %v3407 = vunpack.c.h.b16 %v1026
        %v3408 = vunpack.c.l.b16 %v1027
        %v3409 = vunpack.c.h.b16 %v1027
        %v3410 = vunpack.c.l.b16 %v1028
        %v3411 = vunpack.c.h.b16 %v1028
        %v3412 = vunpack.c.l.b16 %v1029
        %v3413 = vunpack.c.h.b16 %v1029
        %v3414 = vunpack.c.l.b16 %v1030
        %v3415 = vunpack.c.h.b16 %v1030
        %v3416 = vunpack.c.l.b16 %v1031
        %v3417 = vunpack.c.h.b16 %v1031
        %v3418 = vunpack.c.l.b16 %v1032
        %v3419 = vunpack.c.h.b16 %v1032
        %v3420 = vunpack.c.l.b16 %v1033
        %v3421 = vunpack.c.h.b16 %v1033
        %v3422 = vunpack.c.l.b16 %v1034
        %v3423 = vunpack.c.h.b16 %v1034
        %v3424 = vunpack.c.l.b16 %v1035
        %v3425 = vunpack.c.h.b16 %v1035
        %v3426 = vunpack.c.l.b16 %v1036
        %v3427 = vunpack.c.h.b16 %v1036
        %v3428 = vunpack.c.l.b16 %v1037
        %v3429 = vunpack.c.h.b16 %v1037
        %v3430 = vunpack.c.l.b16 %v1038
        %v3431 = vunpack.c.h.b16 %v1038
        %v3432 = vunpack.c.l.b16 %v1039
        %v3433 = vunpack.c.h.b16 %v1039
        %v3434 = vunpack.c.l.b16 %v1040
        %v3435 = vunpack.c.h.b16 %v1040
        %v3436 = vunpack.c.l.b16 %v1041
        %v3437 = vunpack.c.h.b16 %v1041
        %v3438 = vunpack.c.l.b16 %v1042
        %v3439 = vunpack.c.h.b16 %v1042
        %v3440 = vunpack.c.l.b16 %v1043
        %v3441 = vunpack.c.h.b16 %v1043
        %v3442 = vunpack.c.l.b16 %v1044
        %v3443 = vunpack.c.h.b16 %v1044
        %v3444 = vunpack.c.l.b16 %v1045
        %v3445 = vunpack.c.h.b16 %v1045
        %v3446 = vunpack.c.l.b16 %v1046
        %v3447 = vunpack.c.h.b16 %v1046
        %v3448 = vunpack.c.l.b16 %v1047
        %v3449 = vunpack.c.h.b16 %v1047
        %v3450 = vunpack.c.l.b16 %v1048
        %v3451 = vunpack.c.h.b16 %v1048
        %v3452 = vunpack.c.l.b16 %v1049
        %v3453 = vunpack.c.h.b16 %v1049
        %v3454 = vunpack.c.l.b16 %v1050
        %v3455 = vunpack.c.h.b16 %v1050
        %v3456 = vunpack.c.l.b16 %v1051
        %v3457 = vunpack.c.h.b16 %v1051
        %v3458 = vunpack.c.l.b16 %v1052
        %v3459 = vunpack.c.h.b16 %v1052
        %v3460 = vunpack.c.l.b16 %v1053
        %v3461 = vunpack.c.h.b16 %v1053
        %v3462 = vunpack.c.l.b16 %v1054
        %v3463 = vunpack.c.h.b16 %v1054
        %v3464 = vunpack.c.l.b16 %v1055
        %v3465 = vunpack.c.h.b16 %v1055
        %v3466 = vunpack.c.l.b16 %v1056
        %v3467 = vunpack.c.h.b16 %v1056
        %v3468 = vunpack.c.l.b16 %v1057
        %v3469 = vunpack.c.h.b16 %v1057
        %v3470 = vunpack.c.l.b16 %v1058
        %v3471 = vunpack.c.h.b16 %v1058
        %v3472 = vunpack.c.l.b16 %v1059
        %v3473 = vunpack.c.h.b16 %v1059
        %v3474 = vunpack.c.l.b16 %v1060
        %v3475 = vunpack.c.h.b16 %v1060
        %v3476 = vunpack.c.l.b16 %v1061
        %v3477 = vunpack.c.h.b16 %v1061
        %v3478 = vunpack.c.l.b16 %v1062
        %v3479 = vunpack.c.h.b16 %v1062
        %v3480 = vunpack.c.l.b16 %v1063
        %v3481 = vunpack.c.h.b16 %v1063
        %v3482 = vunpack.c.l.b16 %v1064
        %v3483 = vunpack.c.h.b16 %v1064
        %v3484 = vunpack.c.l.b16 %v1065
        %v3485 = vunpack.c.h.b16 %v1065
        %v3486 = vunpack.c.l.b16 %v1066
        %v3487 = vunpack.c.h.b16 %v1066
        %v3488 = vunpack.c.l.b16 %v1067
        %v3489 = vunpack.c.h.b16 %v1067
        %v3490 = vunpack.c.l.b16 %v1068
        %v3491 = vunpack.c.h.b16 %v1068
        %v3492 = vunpack.c.l.b16 %v1069
        %v3493 = vunpack.c.h.b16 %v1069
        %v3494 = vunpack.c.l.b16 %v1070
        %v3495 = vunpack.c.h.b16 %v1070
        %v3496 = vunpack.c.l.b16 %v1071
        %v3497 = vunpack.c.h.b16 %v1071
        %v3498 = vunpack.c.l.b16 %v1072
        %v3499 = vunpack.c.h.b16 %v1072
        %v3500 = vunpack.c.l.b16 %v1073
        %v3501 = vunpack.c.h.b16 %v1073
        %v3502 = vunpack.c.l.b16 %v1074
        %v3503 = vunpack.c.h.b16 %v1074
        %v3504 = vunpack.c.l.b16 %v1075
        %v3505 = vunpack.c.h.b16 %v1075
        %v3506 = vunpack.c.l.b16 %v1076
        %v3507 = vunpack.c.h.b16 %v1076
        %v3508 = vunpack.c.l.b16 %v1077
        %v3509 = vunpack.c.h.b16 %v1077
        %v3510 = vunpack.c.l.b16 %v1078
        %v3511 = vunpack.c.h.b16 %v1078
        %v3512 = vunpack.c.l.b16 %v1079
        %v3513 = vunpack.c.h.b16 %v1079
        %v3514 = vunpack.c.l.b16 %v1080
        %v3515 = vunpack.c.h.b16 %v1080
        %v3516 = vunpack.c.l.b16 %v1081
        %v3517 = vunpack.c.h.b16 %v1081
        %v3518 = vunpack.c.l.b16 %v1082
        %v3519 = vunpack.c.h.b16 %v1082
        %v3520 = vunpack.c.l.b16 %v1083
        %v3521 = vunpack.c.h.b16 %v1083
        %v3522 = vunpack.c.l.b16 %v1084
        %v3523 = vunpack.c.h.b16 %v1084
        %v3524 = vunpack.c.l.b16 %v1085
        %v3525 = vunpack.c.h.b16 %v1085
        %v3526 = vunpack.c.l.b16 %v1086
        %v3527 = vunpack.c.h.b16 %v1086
        %v3528 = vunpack.c.l.b16 %v1087
        %v3529 = vunpack.c.h.b16 %v1087
        %v3530 = vunpack.c.l.b16 %v1088
        %v3531 = vunpack.c.h.b16 %v1088
        %v3532 = vunpack.c.l.b16 %v1089
        %v3533 = vunpack.c.h.b16 %v1089
        %v3534 = vunpack.c.l.b16 %v1090
        %v3535 = vunpack.c.h.b16 %v1090
        %v3536 = vunpack.c.l.b16 %v1091
        %v3537 = vunpack.c.h.b16 %v1091
        %v3538 = vunpack.c.l.b16 %v1092
        %v3539 = vunpack.c.h.b16 %v1092
        %v3540 = vunpack.c.l.b16 %v1093
        %v3541 = vunpack.c.h.b16 %v1093
        %v3542 = vunpack.c.l.b16 %v1094
        %v3543 = vunpack.c.h.b16 %v1094
        %v3544 = vunpack.c.l.b16 %v1095
        %v3545 = vunpack.c.h.b16 %v1095
        %v3546 = vunpack.c.l.b16 %v1096
        %v3547 = vunpack.c.h.b16 %v1096
        %v3548 = vunpack.c.l.b16 %v1097
        %v3549 = vunpack.c.h.b16 %v1097
        %v3550 = vunpack.c.l.b16 %v1098
        %v3551 = vunpack.c.h.b16 %v1098
        %v3552 = vunpack.c.l.b16 %v1099
        %v3553 = vunpack.c.h.b16 %v1099
        %v3554 = vunpack.c.l.b16 %v1100
        %v3555 = vunpack.c.h.b16 %v1100
        %v3556 = vunpack.c.l.b16 %v1101
        %v3557 = vunpack.c.h.b16 %v1101
        %v3558 = vunpack.c.l.b16 %v1102
        %v3559 = vunpack.c.h.b16 %v1102
        %v3560 = vunpack.c.l.b16 %v1103
        %v3561 = vunpack.c.h.b16 %v1103
        %v3562 = vunpack.c.l.b16 %v1104
        %v3563 = vunpack.c.h.b16 %v1104
        %v3564 = vunpack.c.l.b16 %v1105
        %v3565 = vunpack.c.h.b16 %v1105
        %v3566 = vunpack.c.l.b16 %v1106
        %v3567 = vunpack.c.h.b16 %v1106
        %v3568 = vunpack.c.l.b16 %v1107
        %v3569 = vunpack.c.h.b16 %v1107
        %v3570 = vunpack.c.l.b16 %v1108
        %v3571 = vunpack.c.h.b16 %v1108
        %v3572 = vunpack.c.l.b16 %v1109
        %v3573 = vunpack.c.h.b16 %v1109
        %v3574 = vunpack.c.l.b16 %v1110
        %v3575 = vunpack.c.h.b16 %v1110
        %v3576 = vunpack.c.l.b16 %v1111
        %v3577 = vunpack.c.h.b16 %v1111
        %v3578 = vunpack.c.l.b16 %v1112
        %v3579 = vunpack.c.h.b16 %v1112
        %v3580 = vunpack.c.l.b16 %v1113
        %v3581 = vunpack.c.h.b16 %v1113
        %v3582 = vunpack.c.l.b16 %v1114
        %v3583 = vunpack.c.h.b16 %v1114
        %v3584 = vunpack.c.l.b16 %v1115
        %v3585 = vunpack.c.h.b16 %v1115
        %v3586 = vunpack.c.l.b16 %v1116
        %v3587 = vunpack.c.h.b16 %v1116
        %v3588 = vunpack.c.l.b16 %v1117
        %v3589 = vunpack.c.h.b16 %v1117
        %v3590 = vpack.c.b16 %v2056, %v2054
        %v3591 = vpack.c.b16 %v2057, %v2055
        %v3592 = vpack.c.b16 %v2060, %v2058
        %v3593 = vpack.c.b16 %v2061, %v2059
        %v3594 = vpack.c.b16 %v2064, %v2062
        %v3595 = vpack.c.b16 %v2065, %v2063
        %v3596 = vpack.c.b16 %v2068, %v2066
        %v3597 = vpack.c.b16 %v2069, %v2067
        %v3598 = vpack.c.b16 %v2072, %v2070
        %v3599 = vpack.c.b16 %v2073, %v2071
        %v3600 = vpack.c.b16 %v2076, %v2074
        %v3601 = vpack.c.b16 %v2077, %v2075
        %v3602 = vpack.c.b16 %v2080, %v2078
        %v3603 = vpack.c.b16 %v2081, %v2079
        %v3604 = vpack.c.b16 %v2084, %v2082
        %v3605 = vpack.c.b16 %v2085, %v2083
        %v3606 = vpack.c.b16 %v2088, %v2086
        %v3607 = vpack.c.b16 %v2089, %v2087
        %v3608 = vpack.c.b16 %v2092, %v2090
        %v3609 = vpack.c.b16 %v2093, %v2091
        %v3610 = vpack.c.b16 %v2096, %v2094
        %v3611 = vpack.c.b16 %v2097, %v2095
        %v3612 = vpack.c.b16 %v2100, %v2098
        %v3613 = vpack.c.b16 %v2101, %v2099
        %v3614 = vpack.c.b16 %v2104, %v2102
        %v3615 = vpack.c.b16 %v2105, %v2103
        %v3616 = vpack.c.b16 %v2108, %v2106
        %v3617 = vpack.c.b16 %v2109, %v2107
        %v3618 = vpack.c.b16 %v2112, %v2110
        %v3619 = vpack.c.b16 %v2113, %v2111
        %v3620 = vpack.c.b16 %v2116, %v2114
        %v3621 = vpack.c.b16 %v2117, %v2115
        %v3622 = vpack.c.b16 %v2120, %v2118
        %v3623 = vpack.c.b16 %v2121, %v2119
        %v3624 = vpack.c.b16 %v2124, %v2122
        %v3625 = vpack.c.b16 %v2125, %v2123
        %v3626 = vpack.c.b16 %v2128, %v2126
        %v3627 = vpack.c.b16 %v2129, %v2127
        %v3628 = vpack.c.b16 %v2132, %v2130
        %v3629 = vpack.c.b16 %v2133, %v2131
        %v3630 = vpack.c.b16 %v2136, %v2134
        %v3631 = vpack.c.b16 %v2137, %v2135
        %v3632 = vpack.c.b16 %v2140, %v2138
        %v3633 = vpack.c.b16 %v2141, %v2139
        %v3634 = vpack.c.b16 %v2144, %v2142
        %v3635 = vpack.c.b16 %v2145, %v2143
        %v3636 = vpack.c.b16 %v2148, %v2146
        %v3637 = vpack.c.b16 %v2149, %v2147
        %v3638 = vpack.c.b16 %v2152, %v2150
        %v3639 = vpack.c.b16 %v2153, %v2151
        %v3640 = vpack.c.b16 %v2156, %v2154
        %v3641 = vpack.c.b16 %v2157, %v2155
        %v3642 = vpack.c.b16 %v2160, %v2158
        %v3643 = vpack.c.b16 %v2161, %v2159
        %v3644 = vpack.c.b16 %v2164, %v2162
        %v3645 = vpack.c.b16 %v2165, %v2163
        %v3646 = vpack.c.b16 %v2168, %v2166
        %v3647 = vpack.c.b16 %v2169, %v2167
        %v3648 = vpack.c.b16 %v2172, %v2170
        %v3649 = vpack.c.b16 %v2173, %v2171
        %v3650 = vpack.c.b16 %v2176, %v2174
        %v3651 = vpack.c.b16 %v2177, %v2175
        %v3652 = vpack.c.b16 %v2180, %v2178
        %v3653 = vpack.c.b16 %v2181, %v2179
        %v3654 = vpack.c.b16 %v2184, %v2182
        %v3655 = vpack.c.b16 %v2185, %v2183
        %v3656 = vpack.c.b16 %v2188, %v2186
        %v3657 = vpack.c.b16 %v2189, %v2187
        %v3658 = vpack.c.b16 %v2192, %v2190
        %v3659 = vpack.c.b16 %v2193, %v2191
        %v3660 = vpack.c.b16 %v2196, %v2194
        %v3661 = vpack.c.b16 %v2197, %v2195
        %v3662 = vpack.c.b16 %v2200, %v2198
        %v3663 = vpack.c.b16 %v2201, %v2199
        %v3664 = vpack.c.b16 %v2204, %v2202
        %v3665 = vpack.c.b16 %v2205, %v2203
        %v3666 = vpack.c.b16 %v2208, %v2206
        %v3667 = vpack.c.b16 %v2209, %v2207
        %v3668 = vpack.c.b16 %v2212, %v2210
        %v3669 = vpack.c.b16 %v2213, %v2211
        %v3670 = vpack.c.b16 %v2216, %v2214
        %v3671 = vpack.c.b16 %v2217, %v2215
        %v3672 = vpack.c.b16 %v2220, %v2218
        %v3673 = vpack.c.b16 %v2221, %v2219
        %v3674 = vpack.c.b16 %v2224, %v2222
        %v3675 = vpack.c.b16 %v2225, %v2223
        %v3676 = vpack.c.b16 %v2228, %v2226
        %v3677 = vpack.c.b16 %v2229, %v2227
        %v3678 = vpack.c.b16 %v2232, %v2230
        %v3679 = vpack.c.b16 %v2233, %v2231
        %v3680 = vpack.c.b16 %v2236, %v2234
        %v3681 = vpack.c.b16 %v2237, %v2235
        %v3682 = vpack.c.b16 %v2240, %v2238
        %v3683 = vpack.c.b16 %v2241, %v2239
        %v3684 = vpack.c.b16 %v2244, %v2242
        %v3685 = vpack.c.b16 %v2245, %v2243
        %v3686 = vpack.c.b16 %v2248, %v2246
        %v3687 = vpack.c.b16 %v2249, %v2247
        %v3688 = vpack.c.b16 %v2252, %v2250
        %v3689 = vpack.c.b16 %v2253, %v2251
        %v3690 = vpack.c.b16 %v2256, %v2254
        %v3691 = vpack.c.b16 %v2257, %v2255
        %v3692 = vpack.c.b16 %v2260, %v2258
        %v3693 = vpack.c.b16 %v2261, %v2259
        %v3694 = vpack.c.b16 %v2264, %v2262
        %v3695 = vpack.c.b16 %v2265, %v2263
        %v3696 = vpack.c.b16 %v2268, %v2266
        %v3697 = vpack.c.b16 %v2269, %v2267
        %v3698 = vpack.c.b16 %v2272, %v2270
        %v3699 = vpack.c.b16 %v2273, %v2271
        %v3700 = vpack.c.b16 %v2276, %v2274
        %v3701 = vpack.c.b16 %v2277, %v2275
        %v3702 = vpack.c.b16 %v2280, %v2278
        %v3703 = vpack.c.b16 %v2281, %v2279
        %v3704 = vpack.c.b16 %v2284, %v2282
        %v3705 = vpack.c.b16 %v2285, %v2283
        %v3706 = vpack.c.b16 %v2288, %v2286
        %v3707 = vpack.c.b16 %v2289, %v2287
        %v3708 = vpack.c.b16 %v2292, %v2290
        %v3709 = vpack.c.b16 %v2293, %v2291
        %v3710 = vpack.c.b16 %v2296, %v2294
        %v3711 = vpack.c.b16 %v2297, %v2295
        %v3712 = vpack.c.b16 %v2300, %v2298
        %v3713 = vpack.c.b16 %v2301, %v2299
        %v3714 = vpack.c.b16 %v2304, %v2302
        %v3715 = vpack.c.b16 %v2305, %v2303
        %v3716 = vpack.c.b16 %v2308, %v2306
        %v3717 = vpack.c.b16 %v2309, %v2307
        %v3718 = vpack.c.b16 %v2312, %v2310
        %v3719 = vpack.c.b16 %v2313, %v2311
        %v3720 = vpack.c.b16 %v2316, %v2314
        %v3721 = vpack.c.b16 %v2317, %v2315
        %v3722 = vpack.c.b16 %v2320, %v2318
        %v3723 = vpack.c.b16 %v2321, %v2319
        %v3724 = vpack.c.b16 %v2324, %v2322
        %v3725 = vpack.c.b16 %v2325, %v2323
        %v3726 = vpack.c.b16 %v2328, %v2326
        %v3727 = vpack.c.b16 %v2329, %v2327
        %v3728 = vpack.c.b16 %v2332, %v2330
        %v3729 = vpack.c.b16 %v2333, %v2331
        %v3730 = vpack.c.b16 %v2336, %v2334
        %v3731 = vpack.c.b16 %v2337, %v2335
        %v3732 = vpack.c.b16 %v2340, %v2338
        %v3733 = vpack.c.b16 %v2341, %v2339
        %v3734 = vpack.c.b16 %v2344, %v2342
        %v3735 = vpack.c.b16 %v2345, %v2343
        %v3736 = vpack.c.b16 %v2348, %v2346
        %v3737 = vpack.c.b16 %v2349, %v2347
        %v3738 = vpack.c.b16 %v2352, %v2350
        %v3739 = vpack.c.b16 %v2353, %v2351
        %v3740 = vpack.c.b16 %v2356, %v2354
        %v3741 = vpack.c.b16 %v2357, %v2355
        %v3742 = vpack.c.b16 %v2360, %v2358
        %v3743 = vpack.c.b16 %v2361, %v2359
        %v3744 = vpack.c.b16 %v2364, %v2362
        %v3745 = vpack.c.b16 %v2365, %v2363
        %v3746 = vpack.c.b16 %v2368, %v2366
        %v3747 = vpack.c.b16 %v2369, %v2367
        %v3748 = vpack.c.b16 %v2372, %v2370
        %v3749 = vpack.c.b16 %v2373, %v2371
        %v3750 = vpack.c.b16 %v2376, %v2374
        %v3751 = vpack.c.b16 %v2377, %v2375
        %v3752 = vpack.c.b16 %v2380, %v2378
        %v3753 = vpack.c.b16 %v2381, %v2379
        %v3754 = vpack.c.b16 %v2384, %v2382
        %v3755 = vpack.c.b16 %v2385, %v2383
        %v3756 = vpack.c.b16 %v2388, %v2386
        %v3757 = vpack.c.b16 %v2389, %v2387
        %v3758 = vpack.c.b16 %v2392, %v2390
        %v3759 = vpack.c.b16 %v2393, %v2391
        %v3760 = vpack.c.b16 %v2396, %v2394
        %v3761 = vpack.c.b16 %v2397, %v2395
        %v3762 = vpack.c.b16 %v2400, %v2398
        %v3763 = vpack.c.b16 %v2401, %v2399
        %v3764 = vpack.c.b16 %v2404, %v2402
        %v3765 = vpack.c.b16 %v2405, %v2403
        %v3766 = vpack.c.b16 %v2408, %v2406
        %v3767 = vpack.c.b16 %v2409, %v2407
        %v3768 = vpack.c.b16 %v2412, %v2410
        %v3769 = vpack.c.b16 %v2413, %v2411
        %v3770 = vpack.c.b16 %v2416, %v2414
        %v3771 = vpack.c.b16 %v2417, %v2415
        %v3772 = vpack.c.b16 %v2420, %v2418
        %v3773 = vpack.c.b16 %v2421, %v2419
        %v3774 = vpack.c.b16 %v2424, %v2422
        %v3775 = vpack.c.b16 %v2425, %v2423
        %v3776 = vpack.c.b16 %v2428, %v2426
        %v3777 = vpack.c.b16 %v2429, %v2427
        %v3778 = vpack.c.b16 %v2432, %v2430
        %v3779 = vpack.c.b16 %v2433, %v2431
        %v3780 = vpack.c.b16 %v2436, %v2434
        %v3781 = vpack.c.b16 %v2437, %v2435
        %v3782 = vpack.c.b16 %v2440, %v2438
        %v3783 = vpack.c.b16 %v2441, %v2439
        %v3784 = vpack.c.b16 %v2444, %v2442
        %v3785 = vpack.c.b16 %v2445, %v2443
        %v3786 = vpack.c.b16 %v2448, %v2446
        %v3787 = vpack.c.b16 %v2449, %v2447
        %v3788 = vpack.c.b16 %v2452, %v2450
        %v3789 = vpack.c.b16 %v2453, %v2451
        %v3790 = vpack.c.b16 %v2456, %v2454
        %v3791 = vpack.c.b16 %v2457, %v2455
        %v3792 = vpack.c.b16 %v2460, %v2458
        %v3793 = vpack.c.b16 %v2461, %v2459
        %v3794 = vpack.c.b16 %v2464, %v2462
        %v3795 = vpack.c.b16 %v2465, %v2463
        %v3796 = vpack.c.b16 %v2468, %v2466
        %v3797 = vpack.c.b16 %v2469, %v2467
        %v3798 = vpack.c.b16 %v2472, %v2470
        %v3799 = vpack.c.b16 %v2473, %v2471
        %v3800 = vpack.c.b16 %v2476, %v2474
        %v3801 = vpack.c.b16 %v2477, %v2475
        %v3802 = vpack.c.b16 %v2480, %v2478
        %v3803 = vpack.c.b16 %v2481, %v2479
        %v3804 = vpack.c.b16 %v2484, %v2482
        %v3805 = vpack.c.b16 %v2485, %v2483
        %v3806 = vpack.c.b16 %v2488, %v2486
        %v3807 = vpack.c.b16 %v2489, %v2487
        %v3808 = vpack.c.b16 %v2492, %v2490
        %v3809 = vpack.c.b16 %v2493, %v2491
        %v3810 = vpack.c.b16 %v2496, %v2494
        %v3811 = vpack.c.b16 %v2497, %v2495
        %v3812 = vpack.c.b16 %v2500, %v2498
        %v3813 = vpack.c.b16 %v2501, %v2499
        %v3814 = vpack.c.b16 %v2504, %v2502
        %v3815 = vpack.c.b16 %v2505, %v2503
        %v3816 = vpack.c.b16 %v2508, %v2506
        %v3817 = vpack.c.b16 %v2509, %v2507
        %v3818 = vpack.c.b16 %v2512, %v2510
        %v3819 = vpack.c.b16 %v2513, %v2511
        %v3820 = vpack.c.b16 %v2516, %v2514
        %v3821 = vpack.c.b16 %v2517, %v2515
        %v3822 = vpack.c.b16 %v2520, %v2518
        %v3823 = vpack.c.b16 %v2521, %v2519
        %v3824 = vpack.c.b16 %v2524, %v2522
        %v3825 = vpack.c.b16 %v2525, %v2523
        %v3826 = vpack.c.b16 %v2528, %v2526
        %v3827 = vpack.c.b16 %v2529, %v2527
        %v3828 = vpack.c.b16 %v2532, %v2530
        %v3829 = vpack.c.b16 %v2533, %v2531
        %v3830 = vpack.c.b16 %v2536, %v2534
        %v3831 = vpack.c.b16 %v2537, %v2535
        %v3832 = vpack.c.b16 %v2540, %v2538
        %v3833 = vpack.c.b16 %v2541, %v2539
        %v3834 = vpack.c.b16 %v2544, %v2542
        %v3835 = vpack.c.b16 %v2545, %v2543
        %v3836 = vpack.c.b16 %v2548, %v2546
        %v3837 = vpack.c.b16 %v2549, %v2547
        %v3838 = vpack.c.b16 %v2552, %v2550
        %v3839 = vpack.c.b16 %v2553, %v2551
        %v3840 = vpack.c.b16 %v2556, %v2554
        %v3841 = vpack.c.b16 %v2557, %v2555
        %v3842 = vpack.c.b16 %v2560, %v2558
        %v3843 = vpack.c.b16 %v2561, %v2559
        %v3844 = vpack.c.b16 %v2564, %v2562
        %v3845 = vpack.c.b16 %v2565, %v2563
        %v3846 = vpack.c.b16 %v2568, %v2566
        %v3847 = vpack.c.b16 %v2569, %v2567
        %v3848 = vpack.c.b16 %v2572, %v2570
        %v3849 = vpack.c.b16 %v2573, %v2571
        %v3850 = vpack.c.b16 %v2576, %v2574
        %v3851 = vpack.c.b16 %v2577, %v2575
        %v3852 = vpack.c.b16 %v2580, %v2578
        %v3853 = vpack.c.b16 %v2581, %v2579
        %v3854 = vpack.c.b16 %v2584, %v2582
        %v3855 = vpack.c.b16 %v2585, %v2583
        %v3856 = vpack.c.b16 %v2588, %v2586
        %v3857 = vpack.c.b16 %v2589, %v2587
        %v3858 = vpack.c.b16 %v2592, %v2590
        %v3859 = vpack.c.b16 %v2593, %v2591
        %v3860 = vpack.c.b16 %v2596, %v2594
        %v3861 = vpack.c.b16 %v2597, %v2595
        %v3862 = vpack.c.b16 %v2600, %v2598
        %v3863 = vpack.c.b16 %v2601, %v2599
        %v3864 = vpack.c.b16 %v2604, %v2602
        %v3865 = vpack.c.b16 %v2605, %v2603
        %v3866 = vpack.c.b16 %v2608, %v2606
        %v3867 = vpack.c.b16 %v2609, %v2607
        %v3868 = vpack.c.b16 %v2612, %v2610
        %v3869 = vpack.c.b16 %v2613, %v2611
        %v3870 = vpack.c.b16 %v2616, %v2614
        %v3871 = vpack.c.b16 %v2617, %v2615
        %v3872 = vpack.c.b16 %v2620, %v2618
        %v3873 = vpack.c.b16 %v2621, %v2619
        %v3874 = vpack.c.b16 %v2624, %v2622
        %v3875 = vpack.c.b16 %v2625, %v2623
        %v3876 = vpack.c.b16 %v2628, %v2626
        %v3877 = vpack.c.b16 %v2629, %v2627
        %v3878 = vpack.c.b16 %v2632, %v2630
        %v3879 = vpack.c.b16 %v2633, %v2631
        %v3880 = vpack.c.b16 %v2636, %v2634
        %v3881 = vpack.c.b16 %v2637, %v2635
        %v3882 = vpack.c.b16 %v2640, %v2638
        %v3883 = vpack.c.b16 %v2641, %v2639
        %v3884 = vpack.c.b16 %v2644, %v2642
        %v3885 = vpack.c.b16 %v2645, %v2643
        %v3886 = vpack.c.b16 %v2648, %v2646
        %v3887 = vpack.c.b16 %v2649, %v2647
        %v3888 = vpack.c.b16 %v2652, %v2650
        %v3889 = vpack.c.b16 %v2653, %v2651
        %v3890 = vpack.c.b16 %v2656, %v2654
        %v3891 = vpack.c.b16 %v2657, %v2655
        %v3892 = vpack.c.b16 %v2660, %v2658
        %v3893 = vpack.c.b16 %v2661, %v2659
        %v3894 = vpack.c.b16 %v2664, %v2662
        %v3895 = vpack.c.b16 %v2665, %v2663
        %v3896 = vpack.c.b16 %v2668, %v2666
        %v3897 = vpack.c.b16 %v2669, %v2667
        %v3898 = vpack.c.b16 %v2672, %v2670
        %v3899 = vpack.c.b16 %v2673, %v2671
        %v3900 = vpack.c.b16 %v2676, %v2674
        %v3901 = vpack.c.b16 %v2677, %v2675
        %v3902 = vpack.c.b16 %v2680, %v2678
        %v3903 = vpack.c.b16 %v2681, %v2679
        %v3904 = vpack.c.b16 %v2684, %v2682
        %v3905 = vpack.c.b16 %v2685, %v2683
        %v3906 = vpack.c.b16 %v2688, %v2686
        %v3907 = vpack.c.b16 %v2689, %v2687
        %v3908 = vpack.c.b16 %v2692, %v2690
        %v3909 = vpack.c.b16 %v2693, %v2691
        %v3910 = vpack.c.b16 %v2696, %v2694
        %v3911 = vpack.c.b16 %v2697, %v2695
        %v3912 = vpack.c.b16 %v2700, %v2698
        %v3913 = vpack.c.b16 %v2701, %v2699
        %v3914 = vpack.c.b16 %v2704, %v2702
        %v3915 = vpack.c.b16 %v2705, %v2703
        %v3916 = vpack.c.b16 %v2708, %v2706
        %v3917 = vpack.c.b16 %v2709, %v2707
        %v3918 = vpack.c.b16 %v2712, %v2710
        %v3919 = vpack.c.b16 %v2713, %v2711
        %v3920 = vpack.c.b16 %v2716, %v2714
        %v3921 = vpack.c.b16 %v2717, %v2715
        %v3922 = vpack.c.b16 %v2720, %v2718
        %v3923 = vpack.c.b16 %v2721, %v2719
        %v3924 = vpack.c.b16 %v2724, %v2722
        %v3925 = vpack.c.b16 %v2725, %v2723
        %v3926 = vpack.c.b16 %v2728, %v2726
        %v3927 = vpack.c.b16 %v2729, %v2727
        %v3928 = vpack.c.b16 %v2732, %v2730
        %v3929 = vpack.c.b16 %v2733, %v2731
        %v3930 = vpack.c.b16 %v2736, %v2734
        %v3931 = vpack.c.b16 %v2737, %v2735
        %v3932 = vpack.c.b16 %v2740, %v2738
        %v3933 = vpack.c.b16 %v2741, %v2739
        %v3934 = vpack.c.b16 %v2744, %v2742
        %v3935 = vpack.c.b16 %v2745, %v2743
        %v3936 = vpack.c.b16 %v2748, %v2746
        %v3937 = vpack.c.b16 %v2749, %v2747
        %v3938 = vpack.c.b16 %v2752, %v2750
        %v3939 = vpack.c.b16 %v2753, %v2751
        %v3940 = vpack.c.b16 %v2756, %v2754
        %v3941 = vpack.c.b16 %v2757, %v2755
        %v3942 = vpack.c.b16 %v2760, %v2758
        %v3943 = vpack.c.b16 %v2761, %v2759
        %v3944 = vpack.c.b16 %v2764, %v2762
        %v3945 = vpack.c.b16 %v2765, %v2763
        %v3946 = vpack.c.b16 %v2768, %v2766
        %v3947 = vpack.c.b16 %v2769, %v2767
        %v3948 = vpack.c.b16 %v2772, %v2770
        %v3949 = vpack.c.b16 %v2773, %v2771
        %v3950 = vpack.c.b16 %v2776, %v2774
        %v3951 = vpack.c.b16 %v2777, %v2775
        %v3952 = vpack.c.b16 %v2780, %v2778
        %v3953 = vpack.c.b16 %v2781, %v2779
        %v3954 = vpack.c.b16 %v2784, %v2782
        %v3955 = vpack.c.b16 %v2785, %v2783
        %v3956 = vpack.c.b16 %v2788, %v2786
        %v3957 = vpack.c.b16 %v2789, %v2787
        %v3958 = vpack.c.b16 %v2792, %v2790
        %v3959 = vpack.c.b16 %v2793, %v2791
        %v3960 = vpack.c.b16 %v2796, %v2794
        %v3961 = vpack.c.b16 %v2797, %v2795
        %v3962 = vpack.c.b16 %v2800, %v2798
        %v3963 = vpack.c.b16 %v2801, %v2799
        %v3964 = vpack.c.b16 %v2804, %v2802
        %v3965 = vpack.c.b16 %v2805, %v2803
        %v3966 = vpack.c.b16 %v2808, %v2806
        %v3967 = vpack.c.b16 %v2809, %v2807
        %v3968 = vpack.c.b16 %v2812, %v2810
        %v3969 = vpack.c.b16 %v2813, %v2811
        %v3970 = vpack.c.b16 %v2816, %v2814
        %v3971 = vpack.c.b16 %v2817, %v2815
        %v3972 = vpack.c.b16 %v2820, %v2818
        %v3973 = vpack.c.b16 %v2821, %v2819
        %v3974 = vpack.c.b16 %v2824, %v2822
        %v3975 = vpack.c.b16 %v2825, %v2823
        %v3976 = vpack.c.b16 %v2828, %v2826
        %v3977 = vpack.c.b16 %v2829, %v2827
        %v3978 = vpack.c.b16 %v2832, %v2830
        %v3979 = vpack.c.b16 %v2833, %v2831
        %v3980 = vpack.c.b16 %v2836, %v2834
        %v3981 = vpack.c.b16 %v2837, %v2835
        %v3982 = vpack.c.b16 %v2840, %v2838
        %v3983 = vpack.c.b16 %v2841, %v2839
        %v3984 = vpack.c.b16 %v2844, %v2842
        %v3985 = vpack.c.b16 %v2845, %v2843
        %v3986 = vpack.c.b16 %v2848, %v2846
        %v3987 = vpack.c.b16 %v2849, %v2847
        %v3988 = vpack.c.b16 %v2852, %v2850
        %v3989 = vpack.c.b16 %v2853, %v2851
        %v3990 = vpack.c.b16 %v2856, %v2854
        %v3991 = vpack.c.b16 %v2857, %v2855
        %v3992 = vpack.c.b16 %v2860, %v2858
        %v3993 = vpack.c.b16 %v2861, %v2859
        %v3994 = vpack.c.b16 %v2864, %v2862
        %v3995 = vpack.c.b16 %v2865, %v2863
        %v3996 = vpack.c.b16 %v2868, %v2866
        %v3997 = vpack.c.b16 %v2869, %v2867
        %v3998 = vpack.c.b16 %v2872, %v2870
        %v3999 = vpack.c.b16 %v2873, %v2871
        %v4000 = vpack.c.b16 %v2876, %v2874
        %v4001 = vpack.c.b16 %v2877, %v2875
        %v4002 = vpack.c.b16 %v2880, %v2878
        %v4003 = vpack.c.b16 %v2881, %v2879
        %v4004 = vpack.c.b16 %v2884, %v2882
        %v4005 = vpack.c.b16 %v2885, %v2883
        %v4006 = vpack.c.b16 %v2888, %v2886
        %v4007 = vpack.c.b16 %v2889, %v2887
        %v4008 = vpack.c.b16 %v2892, %v2890
        %v4009 = vpack.c.b16 %v2893, %v2891
        %v4010 = vpack.c.b16 %v2896, %v2894
        %v4011 = vpack.c.b16 %v2897, %v2895
        %v4012 = vpack.c.b16 %v2900, %v2898
        %v4013 = vpack.c.b16 %v2901, %v2899
        %v4014 = vpack.c.b16 %v2904, %v2902
        %v4015 = vpack.c.b16 %v2905, %v2903
        %v4016 = vpack.c.b16 %v2908, %v2906
        %v4017 = vpack.c.b16 %v2909, %v2907
        %v4018 = vpack.c.b16 %v2912, %v2910
        %v4019 = vpack.c.b16 %v2913, %v2911
        %v4020 = vpack.c.b16 %v2916, %v2914
        %v4021 = vpack.c.b16 %v2917, %v2915
        %v4022 = vpack.c.b16 %v2920, %v2918
        %v4023 = vpack.c.b16 %v2921, %v2919
        %v4024 = vpack.c.b16 %v2924, %v2922
        %v4025 = vpack.c.b16 %v2925, %v2923
        %v4026 = vpack.c.b16 %v2928, %v2926
        %v4027 = vpack.c.b16 %v2929, %v2927
        %v4028 = vpack.c.b16 %v2932, %v2930
        %v4029 = vpack.c.b16 %v2933, %v2931
        %v4030 = vpack.c.b16 %v2936, %v2934
        %v4031 = vpack.c.b16 %v2937, %v2935
        %v4032 = vpack.c.b16 %v2940, %v2938
        %v4033 = vpack.c.b16 %v2941, %v2939
        %v4034 = vpack.c.b16 %v2944, %v2942
        %v4035 = vpack.c.b16 %v2945, %v2943
        %v4036 = vpack.c.b16 %v2948, %v2946
        %v4037 = vpack.c.b16 %v2949, %v2947
        %v4038 = vpack.c.b16 %v2952, %v2950
        %v4039 = vpack.c.b16 %v2953, %v2951
        %v4040 = vpack.c.b16 %v2956, %v2954
        %v4041 = vpack.c.b16 %v2957, %v2955
        %v4042 = vpack.c.b16 %v2960, %v2958
        %v4043 = vpack.c.b16 %v2961, %v2959
        %v4044 = vpack.c.b16 %v2964, %v2962
        %v4045 = vpack.c.b16 %v2965, %v2963
        %v4046 = vpack.c.b16 %v2968, %v2966
        %v4047 = vpack.c.b16 %v2969, %v2967
        %v4048 = vpack.c.b16 %v2972, %v2970
        %v4049 = vpack.c.b16 %v2973, %v2971
        %v4050 = vpack.c.b16 %v2976, %v2974
        %v4051 = vpack.c.b16 %v2977, %v2975
        %v4052 = vpack.c.b16 %v2980, %v2978
        %v4053 = vpack.c.b16 %v2981, %v2979
        %v4054 = vpack.c.b16 %v2984, %v2982
        %v4055 = vpack.c.b16 %v2985, %v2983
        %v4056 = vpack.c.b16 %v2988, %v2986
        %v4057 = vpack.c.b16 %v2989, %v2987
        %v4058 = vpack.c.b16 %v2992, %v2990
        %v4059 = vpack.c.b16 %v2993, %v2991
        %v4060 = vpack.c.b16 %v2996, %v2994
        %v4061 = vpack.c.b16 %v2997, %v2995
        %v4062 = vpack.c.b16 %v3000, %v2998
        %v4063 = vpack.c.b16 %v3001, %v2999
        %v4064 = vpack.c.b16 %v3004, %v3002
        %v4065 = vpack.c.b16 %v3005, %v3003
        %v4066 = vpack.c.b16 %v3008, %v3006
        %v4067 = vpack.c.b16 %v3009, %v3007
        %v4068 = vpack.c.b16 %v3012, %v3010
        %v4069 = vpack.c.b16 %v3013, %v3011
        %v4070 = vpack.c.b16 %v3016, %v3014
        %v4071 = vpack.c.b16 %v3017, %v3015
        %v4072 = vpack.c.b16 %v3020, %v3018
        %v4073 = vpack.c.b16 %v3021, %v3019
        %v4074 = vpack.c.b16 %v3024, %v3022
        %v4075 = vpack.c.b16 %v3025, %v3023
        %v4076 = vpack.c.b16 %v3028, %v3026
        %v4077 = vpack.c.b16 %v3029, %v3027
        %v4078 = vpack.c.b16 %v3032, %v3030
        %v4079 = vpack.c.b16 %v3033, %v3031
        %v4080 = vpack.c.b16 %v3036, %v3034
        %v4081 = vpack.c.b16 %v3037, %v3035
        %v4082 = vpack.c.b16 %v3040, %v3038
        %v4083 = vpack.c.b16 %v3041, %v3039
        %v4084 = vpack.c.b16 %v3044, %v3042
        %v4085 = vpack.c.b16 %v3045, %v3043
        %v4086 = vpack.c.b16 %v3048, %v3046
        %v4087 = vpack.c.b16 %v3049, %v3047
        %v4088 = vpack.c.b16 %v3052, %v3050
        %v4089 = vpack.c.b16 %v3053, %v3051
        %v4090 = vpack.c.b16 %v3056, %v3054
        %v4091 = vpack.c.b16 %v3057, %v3055
        %v4092 = vpack.c.b16 %v3060, %v3058
        %v4093 = vpack.c.b16 %v3061, %v3059
        %v4094 = vpack.c.b16 %v3064, %v3062
        %v4095 = vpack.c.b16 %v3065, %v3063
        %v4096 = vpack.c.b16 %v3068, %v3066
        %v4097 = vpack.c.b16 %v3069, %v3067
        %v4098 = vpack.c.b16 %v3072, %v3070
        %v4099 = vpack.c.b16 %v3073, %v3071
        %v4100 = vpack.c.b16 %v3076, %v3074
        %v4101 = vpack.c.b16 %v3077, %v3075
        %v4102 = vpack.c.b16 %v3080, %v3078
        %v4103 = vpack.c.b16 %v3081, %v3079
        %v4104 = vpack.c.b16 %v3084, %v3082
        %v4105 = vpack.c.b16 %v3085, %v3083
        %v4106 = vpack.c.b16 %v3088, %v3086
        %v4107 = vpack.c.b16 %v3089, %v3087
        %v4108 = vpack.c.b16 %v3092, %v3090
        %v4109 = vpack.c.b16 %v3093, %v3091
        %v4110 = vpack.c.b16 %v3096, %v3094
        %v4111 = vpack.c.b16 %v3097, %v3095
        %v4112 = vpack.c.b16 %v3100, %v3098
        %v4113 = vpack.c.b16 %v3101, %v3099
        %v4114 = vpack.c.b16 %v3104, %v3102
        %v4115 = vpack.c.b16 %v3105, %v3103
        %v4116 = vpack.c.b16 %v3108, %v3106
        %v4117 = vpack.c.b16 %v3109, %v3107
        %v4118 = vpack.c.b16 %v3112, %v3110
        %v4119 = vpack.c.b16 %v3113, %v3111
        %v4120 = vpack.c.b16 %v3116, %v3114
        %v4121 = vpack.c.b16 %v3117, %v3115
        %v4122 = vpack.c.b16 %v3120, %v3118
        %v4123 = vpack.c.b16 %v3121, %v3119
        %v4124 = vpack.c.b16 %v3124, %v3122
        %v4125 = vpack.c.b16 %v3125, %v3123
        %v4126 = vpack.c.b16 %v3128, %v3126
        %v4127 = vpack.c.b16 %v3129, %v3127
        %v4128 = vpack.c.b16 %v3132, %v3130
        %v4129 = vpack.c.b16 %v3133, %v3131
        %v4130 = vpack.c.b16 %v3136, %v3134
        %v4131 = vpack.c.b16 %v3137, %v3135
        %v4132 = vpack.c.b16 %v3140, %v3138
        %v4133 = vpack.c.b16 %v3141, %v3139
        %v4134 = vpack.c.b16 %v3144, %v3142
        %v4135 = vpack.c.b16 %v3145, %v3143
        %v4136 = vpack.c.b16 %v3148, %v3146
        %v4137 = vpack.c.b16 %v3149, %v3147
        %v4138 = vpack.c.b16 %v3152, %v3150
        %v4139 = vpack.c.b16 %v3153, %v3151
        %v4140 = vpack.c.b16 %v3156, %v3154
        %v4141 = vpack.c.b16 %v3157, %v3155
        %v4142 = vpack.c.b16 %v3160, %v3158
        %v4143 = vpack.c.b16 %v3161, %v3159
        %v4144 = vpack.c.b16 %v3164, %v3162
        %v4145 = vpack.c.b16 %v3165, %v3163
        %v4146 = vpack.c.b16 %v3168, %v3166
        %v4147 = vpack.c.b16 %v3169, %v3167
        %v4148 = vpack.c.b16 %v3172, %v3170
        %v4149 = vpack.c.b16 %v3173, %v3171
        %v4150 = vpack.c.b16 %v3176, %v3174
        %v4151 = vpack.c.b16 %v3177, %v3175
        %v4152 = vpack.c.b16 %v3180, %v3178
        %v4153 = vpack.c.b16 %v3181, %v3179
        %v4154 = vpack.c.b16 %v3184, %v3182
        %v4155 = vpack.c.b16 %v3185, %v3183
        %v4156 = vpack.c.b16 %v3188, %v3186
        %v4157 = vpack.c.b16 %v3189, %v3187
        %v4158 = vpack.c.b16 %v3192, %v3190
        %v4159 = vpack.c.b16 %v3193, %v3191
        %v4160 = vpack.c.b16 %v3196, %v3194
        %v4161 = vpack.c.b16 %v3197, %v3195
        %v4162 = vpack.c.b16 %v3200, %v3198
        %v4163 = vpack.c.b16 %v3201, %v3199
        %v4164 = vpack.c.b16 %v3204, %v3202
        %v4165 = vpack.c.b16 %v3205, %v3203
        %v4166 = vpack.c.b16 %v3208, %v3206
        %v4167 = vpack.c.b16 %v3209, %v3207
        %v4168 = vpack.c.b16 %v3212, %v3210
        %v4169 = vpack.c.b16 %v3213, %v3211
        %v4170 = vpack.c.b16 %v3216, %v3214
        %v4171 = vpack.c.b16 %v3217, %v3215
        %v4172 = vpack.c.b16 %v3220, %v3218
        %v4173 = vpack.c.b16 %v3221, %v3219
        %v4174 = vpack.c.b16 %v3224, %v3222
        %v4175 = vpack.c.b16 %v3225, %v3223
        %v4176 = vpack.c.b16 %v3228, %v3226
        %v4177 = vpack.c.b16 %v3229, %v3227
        %v4178 = vpack.c.b16 %v3232, %v3230
        %v4179 = vpack.c.b16 %v3233, %v3231
        %v4180 = vpack.c.b16 %v3236, %v3234
        %v4181 = vpack.c.b16 %v3237, %v3235
        %v4182 = vpack.c.b16 %v3240, %v3238
        %v4183 = vpack.c.b16 %v3241, %v3239
        %v4184 = vpack.c.b16 %v3244, %v3242
        %v4185 = vpack.c.b16 %v3245, %v3243
        %v4186 = vpack.c.b16 %v3248, %v3246
        %v4187 = vpack.c.b16 %v3249, %v3247
        %v4188 = vpack.c.b16 %v3252, %v3250
        %v4189 = vpack.c.b16 %v3253, %v3251
        %v4190 = vpack.c.b16 %v3256, %v3254
        %v4191 = vpack.c.b16 %v3257, %v3255
        %v4192 = vpack.c.b16 %v3260, %v3258
        %v4193 = vpack.c.b16 %v3261, %v3259
        %v4194 = vpack.c.b16 %v3264, %v3262
        %v4195 = vpack.c.b16 %v3265, %v3263
        %v4196 = vpack.c.b16 %v3268, %v3266
        %v4197 = vpack.c.b16 %v3269, %v3267
        %v4198 = vpack.c.b16 %v3272, %v3270
        %v4199 = vpack.c.b16 %v3273, %v3271
        %v4200 = vpack.c.b16 %v3276, %v3274
        %v4201 = vpack.c.b16 %v3277, %v3275
        %v4202 = vpack.c.b16 %v3280, %v3278
        %v4203 = vpack.c.b16 %v3281, %v3279
        %v4204 = vpack.c.b16 %v3284, %v3282
        %v4205 = vpack.c.b16 %v3285, %v3283
        %v4206 = vpack.c.b16 %v3288, %v3286
        %v4207 = vpack.c.b16 %v3289, %v3287
        %v4208 = vpack.c.b16 %v3292, %v3290
        %v4209 = vpack.c.b16 %v3293, %v3291
        %v4210 = vpack.c.b16 %v3296, %v3294
        %v4211 = vpack.c.b16 %v3297, %v3295
        %v4212 = vpack.c.b16 %v3300, %v3298
        %v4213 = vpack.c.b16 %v3301, %v3299
        %v4214 = vpack.c.b16 %v3304, %v3302
        %v4215 = vpack.c.b16 %v3305, %v3303
        %v4216 = vpack.c.b16 %v3308, %v3306
        %v4217 = vpack.c.b16 %v3309, %v3307
        %v4218 = vpack.c.b16 %v3312, %v3310
        %v4219 = vpack.c.b16 %v3313, %v3311
        %v4220 = vpack.c.b16 %v3316, %v3314
        %v4221 = vpack.c.b16 %v3317, %v3315
        %v4222 = vpack.c.b16 %v3320, %v3318
        %v4223 = vpack.c.b16 %v3321, %v3319
        %v4224 = vpack.c.b16 %v3324, %v3322
        %v4225 = vpack.c.b16 %v3325, %v3323
        %v4226 = vpack.c.b16 %v3328, %v3326
        %v4227 = vpack.c.b16 %v3329, %v3327
        %v4228 = vpack.c.b16 %v3332, %v3330
        %v4229 = vpack.c.b16 %v3333, %v3331
        %v4230 = vpack.c.b16 %v3336, %v3334
        %v4231 = vpack.c.b16 %v3337, %v3335
        %v4232 = vpack.c.b16 %v3340, %v3338
        %v4233 = vpack.c.b16 %v3341, %v3339
        %v4234 = vpack.c.b16 %v3344, %v3342
        %v4235 = vpack.c.b16 %v3345, %v3343
        %v4236 = vpack.c.b16 %v3348, %v3346
        %v4237 = vpack.c.b16 %v3349, %v3347
        %v4238 = vpack.c.b16 %v3352, %v3350
        %v4239 = vpack.c.b16 %v3353, %v3351
        %v4240 = vpack.c.b16 %v3356, %v3354
        %v4241 = vpack.c.b16 %v3357, %v3355
        %v4242 = vpack.c.b16 %v3360, %v3358
        %v4243 = vpack.c.b16 %v3361, %v3359
        %v4244 = vpack.c.b16 %v3364, %v3362
        %v4245 = vpack.c.b16 %v3365, %v3363
        %v4246 = vpack.c.b16 %v3368, %v3366
        %v4247 = vpack.c.b16 %v3369, %v3367
        %v4248 = vpack.c.b16 %v3372, %v3370
        %v4249 = vpack.c.b16 %v3373, %v3371
        %v4250 = vpack.c.b16 %v3376, %v3374
        %v4251 = vpack.c.b16 %v3377, %v3375
        %v4252 = vpack.c.b16 %v3380, %v3378
        %v4253 = vpack.c.b16 %v3381, %v3379
        %v4254 = vpack.c.b16 %v3384, %v3382
        %v4255 = vpack.c.b16 %v3385, %v3383
        %v4256 = vpack.c.b16 %v3388, %v3386
        %v4257 = vpack.c.b16 %v3389, %v3387
        %v4258 = vpack.c.b16 %v3392, %v3390
        %v4259 = vpack.c.b16 %v3393, %v3391
        %v4260 = vpack.c.b16 %v3396, %v3394
        %v4261 = vpack.c.b16 %v3397, %v3395
        %v4262 = vpack.c.b16 %v3400, %v3398
        %v4263 = vpack.c.b16 %v3401, %v3399
        %v4264 = vpack.c.b16 %v3404, %v3402
        %v4265 = vpack.c.b16 %v3405, %v3403
        %v4266 = vpack.c.b16 %v3408, %v3406
        %v4267 = vpack.c.b16 %v3409, %v3407
        %v4268 = vpack.c.b16 %v3412, %v3410
        %v4269 = vpack.c.b16 %v3413, %v3411
        %v4270 = vpack.c.b16 %v3416, %v3414
        %v4271 = vpack.c.b16 %v3417, %v3415
        %v4272 = vpack.c.b16 %v3420, %v3418
        %v4273 = vpack.c.b16 %v3421, %v3419
        %v4274 = vpack.c.b16 %v3424, %v3422
        %v4275 = vpack.c.b16 %v3425, %v3423
        %v4276 = vpack.c.b16 %v3428, %v3426
        %v4277 = vpack.c.b16 %v3429, %v3427
        %v4278 = vpack.c.b16 %v3432, %v3430
        %v4279 = vpack.c.b16 %v3433, %v3431
        %v4280 = vpack.c.b16 %v3436, %v3434
        %v4281 = vpack.c.b16 %v3437, %v3435
        %v4282 = vpack.c.b16 %v3440, %v3438
        %v4283 = vpack.c.b16 %v3441, %v3439
        %v4284 = vpack.c.b16 %v3444, %v3442
        %v4285 = vpack.c.b16 %v3445, %v3443
        %v4286 = vpack.c.b16 %v3448, %v3446
        %v4287 = vpack.c.b16 %v3449, %v3447
        %v4288 = vpack.c.b16 %v3452, %v3450
        %v4289 = vpack.c.b16 %v3453, %v3451
        %v4290 = vpack.c.b16 %v3456, %v3454
        %v4291 = vpack.c.b16 %v3457, %v3455
        %v4292 = vpack.c.b16 %v3460, %v3458
        %v4293 = vpack.c.b16 %v3461, %v3459
        %v4294 = vpack.c.b16 %v3464, %v3462
        %v4295 = vpack.c.b16 %v3465, %v3463
        %v4296 = vpack.c.b16 %v3468, %v3466
        %v4297 = vpack.c.b16 %v3469, %v3467
        %v4298 = vpack.c.b16 %v3472, %v3470
        %v4299 = vpack.c.b16 %v3473, %v3471
        %v4300 = vpack.c.b16 %v3476, %v3474
        %v4301 = vpack.c.b16 %v3477, %v3475
        %v4302 = vpack.c.b16 %v3480, %v3478
        %v4303 = vpack.c.b16 %v3481, %v3479
        %v4304 = vpack.c.b16 %v3484, %v3482
        %v4305 = vpack.c.b16 %v3485, %v3483
        %v4306 = vpack.c.b16 %v3488, %v3486
        %v4307 = vpack.c.b16 %v3489, %v3487
        %v4308 = vpack.c.b16 %v3492, %v3490
        %v4309 = vpack.c.b16 %v3493, %v3491
        %v4310 = vpack.c.b16 %v3496, %v3494
        %v4311 = vpack.c.b16 %v3497, %v3495
        %v4312 = vpack.c.b16 %v3500, %v3498
        %v4313 = vpack.c.b16 %v3501, %v3499
        %v4314 = vpack.c.b16 %v3504, %v3502
        %v4315 = vpack.c.b16 %v3505, %v3503
        %v4316 = vpack.c.b16 %v3508, %v3506
        %v4317 = vpack.c.b16 %v3509, %v3507
        %v4318 = vpack.c.b16 %v3512, %v3510
        %v4319 = vpack.c.b16 %v3513, %v3511
        %v4320 = vpack.c.b16 %v3516, %v3514
        %v4321 = vpack.c.b16 %v3517, %v3515
        %v4322 = vpack.c.b16 %v3520, %v3518
        %v4323 = vpack.c.b16 %v3521, %v3519
        %v4324 = vpack.c.b16 %v3524, %v3522
        %v4325 = vpack.c.b16 %v3525, %v3523
        %v4326 = vpack.c.b16 %v3528, %v3526
        %v4327 = vpack.c.b16 %v3529, %v3527
        %v4328 = vpack.c.b16 %v3532, %v3530
        %v4329 = vpack.c.b16 %v3533, %v3531
        %v4330 = vpack.c.b16 %v3536, %v3534
        %v4331 = vpack.c.b16 %v3537, %v3535
        %v4332 = vpack.c.b16 %v3540, %v3538
        %v4333 = vpack.c.b16 %v3541, %v3539
        %v4334 = vpack.c.b16 %v3544, %v3542
        %v4335 = vpack.c.b16 %v3545, %v3543
        %v4336 = vpack.c.b16 %v3548, %v3546
        %v4337 = vpack.c.b16 %v3549, %v3547
        %v4338 = vpack.c.b16 %v3552, %v3550
        %v4339 = vpack.c.b16 %v3553, %v3551
        %v4340 = vpack.c.b16 %v3556, %v3554
        %v4341 = vpack.c.b16 %v3557, %v3555
        %v4342 = vpack.c.b16 %v3560, %v3558
        %v4343 = vpack.c.b16 %v3561, %v3559
        %v4344 = vpack.c.b16 %v3564, %v3562
        %v4345 = vpack.c.b16 %v3565, %v3563
        %v4346 = vpack.c.b16 %v3568, %v3566
        %v4347 = vpack.c.b16 %v3569, %v3567
        %v4348 = vpack.c.b16 %v3572, %v3570
        %v4349 = vpack.c.b16 %v3573, %v3571
        %v4350 = vpack.c.b16 %v3576, %v3574
        %v4351 = vpack.c.b16 %v3577, %v3575
        %v4352 = vpack.c.b16 %v3580, %v3578
        %v4353 = vpack.c.b16 %v3581, %v3579
        %v4354 = vpack.c.b16 %v3584, %v3582
        %v4355 = vpack.c.b16 %v3585, %v3583
        %v4356 = vpack.c.b16 %v3588, %v3586
        %v4357 = vpack.c.b16 %v3589, %v3587
        %5126 = vmatprep.subr.bf16.mxu0 %v3591
        %5127 = vmatpush1.bf16.msra.mxu0 %v3590
        %5128 = vmatprep.subr.bf16.mxu0 %v3593
        %5129 = vmatpush1.bf16.msra.mxu0 %v3592
        %5130 = vmatprep.subr.bf16.mxu0 %v3595
        %5131 = vmatpush1.bf16.msra.mxu0 %v3594
        %5132 = vmatprep.subr.bf16.mxu0 %v3597
        %5133 = vmatpush1.bf16.msra.mxu0 %v3596
        %5134 = vmatprep.subr.bf16.mxu0 %v3599
        %5135 = vmatpush1.bf16.msra.mxu0 %v3598
        %5136 = vmatprep.subr.bf16.mxu0 %v3601
        %5137 = vmatpush1.bf16.msra.mxu0 %v3600
        %5138 = vmatprep.subr.bf16.mxu0 %v3603
        %5139 = vmatpush1.bf16.msra.mxu0 %v3602
        %5140 = vmatprep.subr.bf16.mxu0 %v3605
        %5141 = vmatpush1.bf16.msra.mxu0 %v3604
        %5142 = vmatprep.subr.bf16.mxu0 %v3607
        %5143 = vmatpush1.bf16.msra.mxu0 %v3606
        %5144 = vmatprep.subr.bf16.mxu0 %v3609
        %5145 = vmatpush1.bf16.msra.mxu0 %v3608
        %5146 = vmatprep.subr.bf16.mxu0 %v3611
        %5147 = vmatpush1.bf16.msra.mxu0 %v3610
        %5148 = vmatprep.subr.bf16.mxu0 %v3613
        %5149 = vmatpush1.bf16.msra.mxu0 %v3612
        %5150 = vmatprep.subr.bf16.mxu0 %v3615
        %5151 = vmatpush1.bf16.msra.mxu0 %v3614
        %5152 = vmatprep.subr.bf16.mxu0 %v3617
        %5153 = vmatpush1.bf16.msra.mxu0 %v3616
        %5154 = vmatprep.subr.bf16.mxu0 %v3619
        %5155 = vmatpush1.bf16.msra.mxu0 %v3618
        %5156 = vmatprep.subr.bf16.mxu0 %v3621
        %5157 = vmatpush1.bf16.msra.mxu0 %v3620
        %5158 = vmatprep.mubr.bf16.mxu0 %v1191
        %5159 = vmatmul.mubr.bf16.gmra.mrb[0].mxu0 %v1190
        %v5160 = vpop.f32.mrb[0].mxu0
        %v5161 = vadd.f32 0.0, %v5160
        %v5162 = vpop.f32.mrb[0].mxu0
        %v5163 = vadd.f32 0.0, %v5162
        %v5164 = vpop.f32.mrb[0].mxu0
        %v5165 = vpop.f32.mrb[0].mxu0
        %5166 = vdwg.mxu0
        %5167 = vmatprep.subr.bf16.mxu0 %v3623
        %5168 = vmatpush1.bf16.msra.mxu0 %v3622
        %5169 = vmatprep.subr.bf16.mxu0 %v3625
        %5170 = vmatpush1.bf16.msra.mxu0 %v3624
        %5171 = vmatprep.subr.bf16.mxu0 %v3627
        %5172 = vmatpush1.bf16.msra.mxu0 %v3626
        %5173 = vmatprep.subr.bf16.mxu0 %v3629
        %5174 = vmatpush1.bf16.msra.mxu0 %v3628
        %5175 = vmatprep.subr.bf16.mxu0 %v3631
        %5176 = vmatpush1.bf16.msra.mxu0 %v3630
        %5177 = vmatprep.subr.bf16.mxu0 %v3633
        %5178 = vmatpush1.bf16.msra.mxu0 %v3632
        %5179 = vmatprep.subr.bf16.mxu0 %v3635
        %5180 = vmatpush1.bf16.msra.mxu0 %v3634
        %5181 = vmatprep.subr.bf16.mxu0 %v3637
        %5182 = vmatpush1.bf16.msra.mxu0 %v3636
        %5183 = vmatprep.subr.bf16.mxu0 %v3639
        %5184 = vmatpush1.bf16.msra.mxu0 %v3638
        %5185 = vmatprep.subr.bf16.mxu0 %v3641
        %5186 = vmatpush1.bf16.msra.mxu0 %v3640
        %5187 = vmatprep.subr.bf16.mxu0 %v3643
        %5188 = vmatpush1.bf16.msra.mxu0 %v3642
        %5189 = vmatprep.subr.bf16.mxu0 %v3645
        %5190 = vmatpush1.bf16.msra.mxu0 %v3644
        %5191 = vmatprep.subr.bf16.mxu0 %v3647
        %5192 = vmatpush1.bf16.msra.mxu0 %v3646
        %5193 = vmatprep.subr.bf16.mxu0 %v3649
        %5194 = vmatpush1.bf16.msra.mxu0 %v3648
        %5195 = vmatprep.subr.bf16.mxu0 %v3651
        %5196 = vmatpush1.bf16.msra.mxu0 %v3650
        %5197 = vmatprep.subr.bf16.mxu0 %v3653
        %5198 = vmatpush1.bf16.msra.mxu0 %v3652
        %5199 = vmatprep.mubr.bf16.mxu0 %v1193
        %5200 = vmatmul.mubr.bf16.gmra.mrb[0].mxu0 %v1192
        %v5201 = vpop.f32.mrb[0].mxu0
        %v5202 = vadd.f32 %v5161, %v5201
        %v5203 = vpop.f32.mrb[0].mxu0
        %v5204 = vadd.f32 %v5163, %v5203
        %v5205 = vpop.f32.mrb[0].mxu0
        %v5206 = vpop.f32.mrb[0].mxu0
        %5207 = vdwg.mxu0
        %5208 = vmatprep.subr.bf16.mxu0 %v3655
        %5209 = vmatpush1.bf16.msra.mxu0 %v3654
        %5210 = vmatprep.subr.bf16.mxu0 %v3657
        %5211 = vmatpush1.bf16.msra.mxu0 %v3656
        %5212 = vmatprep.subr.bf16.mxu0 %v3659
        %5213 = vmatpush1.bf16.msra.mxu0 %v3658
        %5214 = vmatprep.subr.bf16.mxu0 %v3661
        %5215 = vmatpush1.bf16.msra.mxu0 %v3660
        %5216 = vmatprep.subr.bf16.mxu0 %v3663
        %5217 = vmatpush1.bf16.msra.mxu0 %v3662
        %5218 = vmatprep.subr.bf16.mxu0 %v3665
        %5219 = vmatpush1.bf16.msra.mxu0 %v3664
        %5220 = vmatprep.subr.bf16.mxu0 %v3667
        %5221 = vmatpush1.bf16.msra.mxu0 %v3666
        %5222 = vmatprep.subr.bf16.mxu0 %v3669
        %5223 = vmatpush1.bf16.msra.mxu0 %v3668
        %5224 = vmatprep.subr.bf16.mxu0 %v3671
        %5225 = vmatpush1.bf16.msra.mxu0 %v3670
        %5226 = vmatprep.subr.bf16.mxu0 %v3673
        %5227 = vmatpush1.bf16.msra.mxu0 %v3672
        %5228 = vmatprep.subr.bf16.mxu0 %v3675
        %5229 = vmatpush1.bf16.msra.mxu0 %v3674
        %5230 = vmatprep.subr.bf16.mxu0 %v3677
        %5231 = vmatpush1.bf16.msra.mxu0 %v3676
        %5232 = vmatprep.subr.bf16.mxu0 %v3679
        %5233 = vmatpush1.bf16.msra.mxu0 %v3678
        %5234 = vmatprep.subr.bf16.mxu0 %v3681
        %5235 = vmatpush1.bf16.msra.mxu0 %v3680
        %5236 = vmatprep.subr.bf16.mxu0 %v3683
        %5237 = vmatpush1.bf16.msra.mxu0 %v3682
        %5238 = vmatprep.subr.bf16.mxu0 %v3685
        %5239 = vmatpush1.bf16.msra.mxu0 %v3684
        %5240 = vmatprep.mubr.bf16.mxu0 %v1195
        %5241 = vmatmul.mubr.bf16.gmra.mrb[0].mxu0 %v1194
        %v5242 = vpop.f32.mrb[0].mxu0
        %v5243 = vadd.f32 %v5202, %v5242
        %v5244 = vpop.f32.mrb[0].mxu0
        %v5245 = vadd.f32 %v5204, %v5244
        %v5246 = vpop.f32.mrb[0].mxu0
        %v5247 = vpop.f32.mrb[0].mxu0
        %5248 = vdwg.mxu0
        %5249 = vmatprep.subr.bf16.mxu0 %v3687
        %5250 = vmatpush1.bf16.msra.mxu0 %v3686
        %5251 = vmatprep.subr.bf16.mxu0 %v3689
        %5252 = vmatpush1.bf16.msra.mxu0 %v3688
        %5253 = vmatprep.subr.bf16.mxu0 %v3691
        %5254 = vmatpush1.bf16.msra.mxu0 %v3690
        %5255 = vmatprep.subr.bf16.mxu0 %v3693
        %5256 = vmatpush1.bf16.msra.mxu0 %v3692
        %5257 = vmatprep.subr.bf16.mxu0 %v3695
        %5258 = vmatpush1.bf16.msra.mxu0 %v3694
        %5259 = vmatprep.subr.bf16.mxu0 %v3697
        %5260 = vmatpush1.bf16.msra.mxu0 %v3696
        %5261 = vmatprep.subr.bf16.mxu0 %v3699
        %5262 = vmatpush1.bf16.msra.mxu0 %v3698
        %5263 = vmatprep.subr.bf16.mxu0 %v3701
        %5264 = vmatpush1.bf16.msra.mxu0 %v3700
        %5265 = vmatprep.subr.bf16.mxu0 %v3703
        %5266 = vmatpush1.bf16.msra.mxu0 %v3702
        %5267 = vmatprep.subr.bf16.mxu0 %v3705
        %5268 = vmatpush1.bf16.msra.mxu0 %v3704
        %5269 = vmatprep.subr.bf16.mxu0 %v3707
        %5270 = vmatpush1.bf16.msra.mxu0 %v3706
        %5271 = vmatprep.subr.bf16.mxu0 %v3709
        %5272 = vmatpush1.bf16.msra.mxu0 %v3708
        %5273 = vmatprep.subr.bf16.mxu0 %v3711
        %5274 = vmatpush1.bf16.msra.mxu0 %v3710
        %5275 = vmatprep.subr.bf16.mxu0 %v3713
        %5276 = vmatpush1.bf16.msra.mxu0 %v3712
        %5277 = vmatprep.subr.bf16.mxu0 %v3715
        %5278 = vmatpush1.bf16.msra.mxu0 %v3714
        %5279 = vmatprep.subr.bf16.mxu0 %v3717
        %5280 = vmatpush1.bf16.msra.mxu0 %v3716
        %5281 = vmatprep.mubr.bf16.mxu0 %v1197
        %5282 = vmatmul.mubr.bf16.gmra.mrb[0].mxu0 %v1196
        %v5283 = vpop.f32.mrb[0].mxu0
        %v5284 = vadd.f32 %v5243, %v5283
        %v5285 = vpop.f32.mrb[0].mxu0
        %v5286 = vadd.f32 %v5245, %v5285
        %v5287 = vpop.f32.mrb[0].mxu0
        %v5288 = vpop.f32.mrb[0].mxu0
        %5289 = vdwg.mxu0
        %5290 = vmatprep.subr.bf16.mxu0 %v3719
        %5291 = vmatpush1.bf16.msra.mxu0 %v3718
        %5292 = vmatprep.subr.bf16.mxu0 %v3721
        %5293 = vmatpush1.bf16.msra.mxu0 %v3720
        %5294 = vmatprep.subr.bf16.mxu0 %v3723
        %5295 = vmatpush1.bf16.msra.mxu0 %v3722
        %5296 = vmatprep.subr.bf16.mxu0 %v3725
        %5297 = vmatpush1.bf16.msra.mxu0 %v3724
        %5298 = vmatprep.subr.bf16.mxu0 %v3727
        %5299 = vmatpush1.bf16.msra.mxu0 %v3726
        %5300 = vmatprep.subr.bf16.mxu0 %v3729
        %5301 = vmatpush1.bf16.msra.mxu0 %v3728
        %5302 = vmatprep.subr.bf16.mxu0 %v3731
        %5303 = vmatpush1.bf16.msra.mxu0 %v3730
        %5304 = vmatprep.subr.bf16.mxu0 %v3733
        %5305 = vmatpush1.bf16.msra.mxu0 %v3732
        %5306 = vmatprep.subr.bf16.mxu0 %v3735
        %5307 = vmatpush1.bf16.msra.mxu0 %v3734
        %5308 = vmatprep.subr.bf16.mxu0 %v3737
        %5309 = vmatpush1.bf16.msra.mxu0 %v3736
        %5310 = vmatprep.subr.bf16.mxu0 %v3739
        %5311 = vmatpush1.bf16.msra.mxu0 %v3738
        %5312 = vmatprep.subr.bf16.mxu0 %v3741
        %5313 = vmatpush1.bf16.msra.mxu0 %v3740
        %5314 = vmatprep.subr.bf16.mxu0 %v3743
        %5315 = vmatpush1.bf16.msra.mxu0 %v3742
        %5316 = vmatprep.subr.bf16.mxu0 %v3745
        %5317 = vmatpush1.bf16.msra.mxu0 %v3744
        %5318 = vmatprep.subr.bf16.mxu0 %v3747
        %5319 = vmatpush1.bf16.msra.mxu0 %v3746
        %5320 = vmatprep.subr.bf16.mxu0 %v3749
        %5321 = vmatpush1.bf16.msra.mxu0 %v3748
        %5322 = vmatprep.mubr.bf16.mxu0 %v1199
        %5323 = vmatmul.mubr.bf16.gmra.mrb[0].mxu0 %v1198
        %v5324 = vpop.f32.mrb[0].mxu0
        %v5325 = vadd.f32 %v5284, %v5324
        %v5326 = vpop.f32.mrb[0].mxu0
        %v5327 = vadd.f32 %v5286, %v5326
        %v5328 = vpop.f32.mrb[0].mxu0
        %v5329 = vpop.f32.mrb[0].mxu0
        %5330 = vdwg.mxu0
        %5331 = vmatprep.subr.bf16.mxu0 %v3751
        %5332 = vmatpush1.bf16.msra.mxu0 %v3750
        %5333 = vmatprep.subr.bf16.mxu0 %v3753
        %5334 = vmatpush1.bf16.msra.mxu0 %v3752
        %5335 = vmatprep.subr.bf16.mxu0 %v3755
        %5336 = vmatpush1.bf16.msra.mxu0 %v3754
        %5337 = vmatprep.subr.bf16.mxu0 %v3757
        %5338 = vmatpush1.bf16.msra.mxu0 %v3756
        %5339 = vmatprep.subr.bf16.mxu0 %v3759
        %5340 = vmatpush1.bf16.msra.mxu0 %v3758
        %5341 = vmatprep.subr.bf16.mxu0 %v3761
        %5342 = vmatpush1.bf16.msra.mxu0 %v3760
        %5343 = vmatprep.subr.bf16.mxu0 %v3763
        %5344 = vmatpush1.bf16.msra.mxu0 %v3762
        %5345 = vmatprep.subr.bf16.mxu0 %v3765
        %5346 = vmatpush1.bf16.msra.mxu0 %v3764
        %5347 = vmatprep.subr.bf16.mxu0 %v3767
        %5348 = vmatpush1.bf16.msra.mxu0 %v3766
        %5349 = vmatprep.subr.bf16.mxu0 %v3769
        %5350 = vmatpush1.bf16.msra.mxu0 %v3768
        %5351 = vmatprep.subr.bf16.mxu0 %v3771
        %5352 = vmatpush1.bf16.msra.mxu0 %v3770
        %5353 = vmatprep.subr.bf16.mxu0 %v3773
        %5354 = vmatpush1.bf16.msra.mxu0 %v3772
        %5355 = vmatprep.subr.bf16.mxu0 %v3775
        %5356 = vmatpush1.bf16.msra.mxu0 %v3774
        %5357 = vmatprep.subr.bf16.mxu0 %v3777
        %5358 = vmatpush1.bf16.msra.mxu0 %v3776
        %5359 = vmatprep.subr.bf16.mxu0 %v3779
        %5360 = vmatpush1.bf16.msra.mxu0 %v3778
        %5361 = vmatprep.subr.bf16.mxu0 %v3781
        %5362 = vmatpush1.bf16.msra.mxu0 %v3780
        %5363 = vmatprep.mubr.bf16.mxu0 %v1201
        %5364 = vmatmul.mubr.bf16.gmra.mrb[0].mxu0 %v1200
        %v5365 = vpop.f32.mrb[0].mxu0
        %v5366 = vadd.f32 %v5325, %v5365
        %v5367 = vpop.f32.mrb[0].mxu0
        %v5368 = vadd.f32 %v5327, %v5367
        %v5369 = vpop.f32.mrb[0].mxu0
        %v5370 = vpop.f32.mrb[0].mxu0
        %5371 = vdwg.mxu0
        %5372 = vmatprep.subr.bf16.mxu0 %v3783
        %5373 = vmatpush1.bf16.msra.mxu0 %v3782
        %5374 = vmatprep.subr.bf16.mxu0 %v3785
        %5375 = vmatpush1.bf16.msra.mxu0 %v3784
        %5376 = vmatprep.subr.bf16.mxu0 %v3787
        %5377 = vmatpush1.bf16.msra.mxu0 %v3786
        %5378 = vmatprep.subr.bf16.mxu0 %v3789
        %5379 = vmatpush1.bf16.msra.mxu0 %v3788
        %5380 = vmatprep.subr.bf16.mxu0 %v3791
        %5381 = vmatpush1.bf16.msra.mxu0 %v3790
        %5382 = vmatprep.subr.bf16.mxu0 %v3793
        %5383 = vmatpush1.bf16.msra.mxu0 %v3792
        %5384 = vmatprep.subr.bf16.mxu0 %v3795
        %5385 = vmatpush1.bf16.msra.mxu0 %v3794
        %5386 = vmatprep.subr.bf16.mxu0 %v3797
        %5387 = vmatpush1.bf16.msra.mxu0 %v3796
        %5388 = vmatprep.subr.bf16.mxu0 %v3799
        %5389 = vmatpush1.bf16.msra.mxu0 %v3798
        %5390 = vmatprep.subr.bf16.mxu0 %v3801
        %5391 = vmatpush1.bf16.msra.mxu0 %v3800
        %5392 = vmatprep.subr.bf16.mxu0 %v3803
        %5393 = vmatpush1.bf16.msra.mxu0 %v3802
        %5394 = vmatprep.subr.bf16.mxu0 %v3805
        %5395 = vmatpush1.bf16.msra.mxu0 %v3804
        %5396 = vmatprep.subr.bf16.mxu0 %v3807
        %5397 = vmatpush1.bf16.msra.mxu0 %v3806
        %5398 = vmatprep.subr.bf16.mxu0 %v3809
        %5399 = vmatpush1.bf16.msra.mxu0 %v3808
        %5400 = vmatprep.subr.bf16.mxu0 %v3811
        %5401 = vmatpush1.bf16.msra.mxu0 %v3810
        %5402 = vmatprep.subr.bf16.mxu0 %v3813
        %5403 = vmatpush1.bf16.msra.mxu0 %v3812
        %5404 = vmatprep.mubr.bf16.mxu0 %v1203
        %5405 = vmatmul.mubr.bf16.gmra.mrb[0].mxu0 %v1202
        %v5406 = vpop.f32.mrb[0].mxu0
        %v5407 = vadd.f32 %v5366, %v5406
        %v5408 = vpop.f32.mrb[0].mxu0
        %v5409 = vadd.f32 %v5368, %v5408
        %v5410 = vpop.f32.mrb[0].mxu0
        %v5411 = vpop.f32.mrb[0].mxu0
        %5412 = vdwg.mxu0
        %5413 = vmatprep.subr.bf16.mxu0 %v3815
        %5414 = vmatpush1.bf16.msra.mxu0 %v3814
        %5415 = vmatprep.subr.bf16.mxu0 %v3817
        %5416 = vmatpush1.bf16.msra.mxu0 %v3816
        %5417 = vmatprep.subr.bf16.mxu0 %v3819
        %5418 = vmatpush1.bf16.msra.mxu0 %v3818
        %5419 = vmatprep.subr.bf16.mxu0 %v3821
        %5420 = vmatpush1.bf16.msra.mxu0 %v3820
        %5421 = vmatprep.subr.bf16.mxu0 %v3823
        %5422 = vmatpush1.bf16.msra.mxu0 %v3822
        %5423 = vmatprep.subr.bf16.mxu0 %v3825
        %5424 = vmatpush1.bf16.msra.mxu0 %v3824
        %5425 = vmatprep.subr.bf16.mxu0 %v3827
        %5426 = vmatpush1.bf16.msra.mxu0 %v3826
        %5427 = vmatprep.subr.bf16.mxu0 %v3829
        %5428 = vmatpush1.bf16.msra.mxu0 %v3828
        %5429 = vmatprep.subr.bf16.mxu0 %v3831
        %5430 = vmatpush1.bf16.msra.mxu0 %v3830
        %5431 = vmatprep.subr.bf16.mxu0 %v3833
        %5432 = vmatpush1.bf16.msra.mxu0 %v3832
        %5433 = vmatprep.subr.bf16.mxu0 %v3835
        %5434 = vmatpush1.bf16.msra.mxu0 %v3834
        %5435 = vmatprep.subr.bf16.mxu0 %v3837
        %5436 = vmatpush1.bf16.msra.mxu0 %v3836
        %5437 = vmatprep.subr.bf16.mxu0 %v3839
        %5438 = vmatpush1.bf16.msra.mxu0 %v3838
        %5439 = vmatprep.subr.bf16.mxu0 %v3841
        %5440 = vmatpush1.bf16.msra.mxu0 %v3840
        %5441 = vmatprep.subr.bf16.mxu0 %v3843
        %5442 = vmatpush1.bf16.msra.mxu0 %v3842
        %5443 = vmatprep.subr.bf16.mxu0 %v3845
        %5444 = vmatpush1.bf16.msra.mxu0 %v3844
        %5445 = vmatprep.mubr.bf16.mxu0 %v1205
        %5446 = vmatmul.mubr.bf16.gmra.mrb[0].mxu0 %v1204
        %v5447 = vpop.f32.mrb[0].mxu0
        %v5448 = vadd.f32 %v5407, %v5447
        %v5449 = vpop.f32.mrb[0].mxu0
        %v5450 = vadd.f32 %v5409, %v5449
        %v5451 = vpop.f32.mrb[0].mxu0
        %v5452 = vpop.f32.mrb[0].mxu0
        %5453 = vdwg.mxu0
        %5454 = vmatprep.subr.bf16.mxu0 %v3847
        %5455 = vmatpush1.bf16.msra.mxu0 %v3846
        %5456 = vmatprep.subr.bf16.mxu0 %v3849
        %5457 = vmatpush1.bf16.msra.mxu0 %v3848
        %5458 = vmatprep.subr.bf16.mxu0 %v3851
        %5459 = vmatpush1.bf16.msra.mxu0 %v3850
        %5460 = vmatprep.subr.bf16.mxu0 %v3853
        %5461 = vmatpush1.bf16.msra.mxu0 %v3852
        %5462 = vmatprep.subr.bf16.mxu0 %v3855
        %5463 = vmatpush1.bf16.msra.mxu0 %v3854
        %5464 = vmatprep.subr.bf16.mxu0 %v3857
        %5465 = vmatpush1.bf16.msra.mxu0 %v3856
        %5466 = vmatprep.subr.bf16.mxu0 %v3859
        %5467 = vmatpush1.bf16.msra.mxu0 %v3858
        %5468 = vmatprep.subr.bf16.mxu0 %v3861
        %5469 = vmatpush1.bf16.msra.mxu0 %v3860
        %5470 = vmatprep.subr.bf16.mxu0 %v3863
        %5471 = vmatpush1.bf16.msra.mxu0 %v3862
        %5472 = vmatprep.subr.bf16.mxu0 %v3865
        %5473 = vmatpush1.bf16.msra.mxu0 %v3864
        %5474 = vmatprep.subr.bf16.mxu0 %v3867
        %5475 = vmatpush1.bf16.msra.mxu0 %v3866
        %5476 = vmatprep.subr.bf16.mxu0 %v3869
        %5477 = vmatpush1.bf16.msra.mxu0 %v3868
        %5478 = vmatprep.subr.bf16.mxu0 %v3871
        %5479 = vmatpush1.bf16.msra.mxu0 %v3870
        %5480 = vmatprep.subr.bf16.mxu0 %v3873
        %5481 = vmatpush1.bf16.msra.mxu0 %v3872
        %5482 = vmatprep.subr.bf16.mxu0 %v3875
        %5483 = vmatpush1.bf16.msra.mxu0 %v3874
        %5484 = vmatprep.subr.bf16.mxu0 %v3877
        %5485 = vmatpush1.bf16.msra.mxu0 %v3876
        %5486 = vmatprep.mubr.bf16.mxu0 %v1207
        %5487 = vmatmul.mubr.bf16.gmra.mrb[0].mxu0 %v1206
        %v5488 = vpop.f32.mrb[0].mxu0
        %v5489 = vadd.f32 %v5448, %v5488
        %v5490 = vpop.f32.mrb[0].mxu0
        %v5491 = vadd.f32 %v5450, %v5490
        %v5492 = vpop.f32.mrb[0].mxu0
        %v5493 = vpop.f32.mrb[0].mxu0
        %5494 = vdwg.mxu0
        %5495 = vmatprep.subr.bf16.mxu0 %v3879
        %5496 = vmatpush1.bf16.msra.mxu0 %v3878
        %5497 = vmatprep.subr.bf16.mxu0 %v3881
        %5498 = vmatpush1.bf16.msra.mxu0 %v3880
        %5499 = vmatprep.subr.bf16.mxu0 %v3883
        %5500 = vmatpush1.bf16.msra.mxu0 %v3882
        %5501 = vmatprep.subr.bf16.mxu0 %v3885
        %5502 = vmatpush1.bf16.msra.mxu0 %v3884
        %5503 = vmatprep.subr.bf16.mxu0 %v3887
        %5504 = vmatpush1.bf16.msra.mxu0 %v3886
        %5505 = vmatprep.subr.bf16.mxu0 %v3889
        %5506 = vmatpush1.bf16.msra.mxu0 %v3888
        %5507 = vmatprep.subr.bf16.mxu0 %v3891
        %5508 = vmatpush1.bf16.msra.mxu0 %v3890
        %5509 = vmatprep.subr.bf16.mxu0 %v3893
        %5510 = vmatpush1.bf16.msra.mxu0 %v3892
        %5511 = vmatprep.subr.bf16.mxu0 %v3895
        %5512 = vmatpush1.bf16.msra.mxu0 %v3894
        %5513 = vmatprep.subr.bf16.mxu0 %v3897
        %5514 = vmatpush1.bf16.msra.mxu0 %v3896
        %5515 = vmatprep.subr.bf16.mxu0 %v3899
        %5516 = vmatpush1.bf16.msra.mxu0 %v3898
        %5517 = vmatprep.subr.bf16.mxu0 %v3901
        %5518 = vmatpush1.bf16.msra.mxu0 %v3900
        %5519 = vmatprep.subr.bf16.mxu0 %v3903
        %5520 = vmatpush1.bf16.msra.mxu0 %v3902
        %5521 = vmatprep.subr.bf16.mxu0 %v3905
        %5522 = vmatpush1.bf16.msra.mxu0 %v3904
        %5523 = vmatprep.subr.bf16.mxu0 %v3907
        %5524 = vmatpush1.bf16.msra.mxu0 %v3906
        %5525 = vmatprep.subr.bf16.mxu0 %v3909
        %5526 = vmatpush1.bf16.msra.mxu0 %v3908
        %5527 = vmatprep.mubr.bf16.mxu0 %v1209
        %5528 = vmatmul.mubr.bf16.gmra.mrb[0].mxu0 %v1208
        %v5529 = vpop.f32.mrb[0].mxu0
        %v5530 = vadd.f32 %v5489, %v5529
        %v5531 = vpop.f32.mrb[0].mxu0
        %v5532 = vadd.f32 %v5491, %v5531
        %v5533 = vpop.f32.mrb[0].mxu0
        %v5534 = vpop.f32.mrb[0].mxu0
        %5535 = vdwg.mxu0
        %5536 = vmatprep.subr.bf16.mxu0 %v3911
        %5537 = vmatpush1.bf16.msra.mxu0 %v3910
        %5538 = vmatprep.subr.bf16.mxu0 %v3913
        %5539 = vmatpush1.bf16.msra.mxu0 %v3912
        %5540 = vmatprep.subr.bf16.mxu0 %v3915
        %5541 = vmatpush1.bf16.msra.mxu0 %v3914
        %5542 = vmatprep.subr.bf16.mxu0 %v3917
        %5543 = vmatpush1.bf16.msra.mxu0 %v3916
        %5544 = vmatprep.subr.bf16.mxu0 %v3919
        %5545 = vmatpush1.bf16.msra.mxu0 %v3918
        %5546 = vmatprep.subr.bf16.mxu0 %v3921
        %5547 = vmatpush1.bf16.msra.mxu0 %v3920
        %5548 = vmatprep.subr.bf16.mxu0 %v3923
        %5549 = vmatpush1.bf16.msra.mxu0 %v3922
        %5550 = vmatprep.subr.bf16.mxu0 %v3925
        %5551 = vmatpush1.bf16.msra.mxu0 %v3924
        %5552 = vmatprep.subr.bf16.mxu0 %v3927
        %5553 = vmatpush1.bf16.msra.mxu0 %v3926
        %5554 = vmatprep.subr.bf16.mxu0 %v3929
        %5555 = vmatpush1.bf16.msra.mxu0 %v3928
        %5556 = vmatprep.subr.bf16.mxu0 %v3931
        %5557 = vmatpush1.bf16.msra.mxu0 %v3930
        %5558 = vmatprep.subr.bf16.mxu0 %v3933
        %5559 = vmatpush1.bf16.msra.mxu0 %v3932
        %5560 = vmatprep.subr.bf16.mxu0 %v3935
        %5561 = vmatpush1.bf16.msra.mxu0 %v3934
        %5562 = vmatprep.subr.bf16.mxu0 %v3937
        %5563 = vmatpush1.bf16.msra.mxu0 %v3936
        %5564 = vmatprep.subr.bf16.mxu0 %v3939
        %5565 = vmatpush1.bf16.msra.mxu0 %v3938
        %5566 = vmatprep.subr.bf16.mxu0 %v3941
        %5567 = vmatpush1.bf16.msra.mxu0 %v3940
        %5568 = vmatprep.mubr.bf16.mxu0 %v1211
        %5569 = vmatmul.mubr.bf16.gmra.mrb[0].mxu0 %v1210
        %v5570 = vpop.f32.mrb[0].mxu0
        %v5571 = vadd.f32 %v5530, %v5570
        %v5572 = vpop.f32.mrb[0].mxu0
        %v5573 = vadd.f32 %v5532, %v5572
        %v5574 = vpop.f32.mrb[0].mxu0
        %v5575 = vpop.f32.mrb[0].mxu0
        %5576 = vdwg.mxu0
        %5577 = vmatprep.subr.bf16.mxu0 %v3943
        %5578 = vmatpush1.bf16.msra.mxu0 %v3942
        %5579 = vmatprep.subr.bf16.mxu0 %v3945
        %5580 = vmatpush1.bf16.msra.mxu0 %v3944
        %5581 = vmatprep.subr.bf16.mxu0 %v3947
        %5582 = vmatpush1.bf16.msra.mxu0 %v3946
        %5583 = vmatprep.subr.bf16.mxu0 %v3949
        %5584 = vmatpush1.bf16.msra.mxu0 %v3948
        %5585 = vmatprep.subr.bf16.mxu0 %v3951
        %5586 = vmatpush1.bf16.msra.mxu0 %v3950
        %5587 = vmatprep.subr.bf16.mxu0 %v3953
        %5588 = vmatpush1.bf16.msra.mxu0 %v3952
        %5589 = vmatprep.subr.bf16.mxu0 %v3955
        %5590 = vmatpush1.bf16.msra.mxu0 %v3954
        %5591 = vmatprep.subr.bf16.mxu0 %v3957
        %5592 = vmatpush1.bf16.msra.mxu0 %v3956
        %5593 = vmatprep.subr.bf16.mxu0 %v3959
        %5594 = vmatpush1.bf16.msra.mxu0 %v3958
        %5595 = vmatprep.subr.bf16.mxu0 %v3961
        %5596 = vmatpush1.bf16.msra.mxu0 %v3960
        %5597 = vmatprep.subr.bf16.mxu0 %v3963
        %5598 = vmatpush1.bf16.msra.mxu0 %v3962
        %5599 = vmatprep.subr.bf16.mxu0 %v3965
        %5600 = vmatpush1.bf16.msra.mxu0 %v3964
        %5601 = vmatprep.subr.bf16.mxu0 %v3967
        %5602 = vmatpush1.bf16.msra.mxu0 %v3966
        %5603 = vmatprep.subr.bf16.mxu0 %v3969
        %5604 = vmatpush1.bf16.msra.mxu0 %v3968
        %5605 = vmatprep.subr.bf16.mxu0 %v3971
        %5606 = vmatpush1.bf16.msra.mxu0 %v3970
        %5607 = vmatprep.subr.bf16.mxu0 %v3973
        %5608 = vmatpush1.bf16.msra.mxu0 %v3972
        %5609 = vmatprep.mubr.bf16.mxu0 %v1213
        %5610 = vmatmul.mubr.bf16.gmra.mrb[0].mxu0 %v1212
        %v5611 = vpop.f32.mrb[0].mxu0
        %v5612 = vadd.f32 %v5571, %v5611
        %v5613 = vpop.f32.mrb[0].mxu0
        %v5614 = vadd.f32 %v5573, %v5613
        %v5615 = vpop.f32.mrb[0].mxu0
        %v5616 = vpop.f32.mrb[0].mxu0
        %5617 = vdwg.mxu0
        %5618 = vmatprep.subr.bf16.mxu0 %v3975
        %5619 = vmatpush1.bf16.msra.mxu0 %v3974
        %5620 = vmatprep.subr.bf16.mxu0 %v3977
        %5621 = vmatpush1.bf16.msra.mxu0 %v3976
        %5622 = vmatprep.subr.bf16.mxu0 %v3979
        %5623 = vmatpush1.bf16.msra.mxu0 %v3978
        %5624 = vmatprep.subr.bf16.mxu0 %v3981
        %5625 = vmatpush1.bf16.msra.mxu0 %v3980
        %5626 = vmatprep.subr.bf16.mxu0 %v3983
        %5627 = vmatpush1.bf16.msra.mxu0 %v3982
        %5628 = vmatprep.subr.bf16.mxu0 %v3985
        %5629 = vmatpush1.bf16.msra.mxu0 %v3984
        %5630 = vmatprep.subr.bf16.mxu0 %v3987
        %5631 = vmatpush1.bf16.msra.mxu0 %v3986
        %5632 = vmatprep.subr.bf16.mxu0 %v3989
        %5633 = vmatpush1.bf16.msra.mxu0 %v3988
        %5634 = vmatprep.subr.bf16.mxu0 %v3991
        %5635 = vmatpush1.bf16.msra.mxu0 %v3990
        %5636 = vmatprep.subr.bf16.mxu0 %v3993
        %5637 = vmatpush1.bf16.msra.mxu0 %v3992
        %5638 = vmatprep.subr.bf16.mxu0 %v3995
        %5639 = vmatpush1.bf16.msra.mxu0 %v3994
        %5640 = vmatprep.subr.bf16.mxu0 %v3997
        %5641 = vmatpush1.bf16.msra.mxu0 %v3996
        %5642 = vmatprep.subr.bf16.mxu0 %v3999
        %5643 = vmatpush1.bf16.msra.mxu0 %v3998
        %5644 = vmatprep.subr.bf16.mxu0 %v4001
        %5645 = vmatpush1.bf16.msra.mxu0 %v4000
        %5646 = vmatprep.subr.bf16.mxu0 %v4003
        %5647 = vmatpush1.bf16.msra.mxu0 %v4002
        %5648 = vmatprep.subr.bf16.mxu0 %v4005
        %5649 = vmatpush1.bf16.msra.mxu0 %v4004
        %5650 = vmatprep.mubr.bf16.mxu0 %v1215
        %5651 = vmatmul.mubr.bf16.gmra.mrb[0].mxu0 %v1214
        %v5652 = vpop.f32.mrb[0].mxu0
        %v5653 = vadd.f32 %v5612, %v5652
        %v5654 = vpop.f32.mrb[0].mxu0
        %v5655 = vadd.f32 %v5614, %v5654
        %v5656 = vpop.f32.mrb[0].mxu0
        %v5657 = vpop.f32.mrb[0].mxu0
        %5658 = vdwg.mxu0
        %5659 = vmatprep.subr.bf16.mxu0 %v4007
        %5660 = vmatpush1.bf16.msra.mxu0 %v4006
        %5661 = vmatprep.subr.bf16.mxu0 %v4009
        %5662 = vmatpush1.bf16.msra.mxu0 %v4008
        %5663 = vmatprep.subr.bf16.mxu0 %v4011
        %5664 = vmatpush1.bf16.msra.mxu0 %v4010
        %5665 = vmatprep.subr.bf16.mxu0 %v4013
        %5666 = vmatpush1.bf16.msra.mxu0 %v4012
        %5667 = vmatprep.subr.bf16.mxu0 %v4015
        %5668 = vmatpush1.bf16.msra.mxu0 %v4014
        %5669 = vmatprep.subr.bf16.mxu0 %v4017
        %5670 = vmatpush1.bf16.msra.mxu0 %v4016
        %5671 = vmatprep.subr.bf16.mxu0 %v4019
        %5672 = vmatpush1.bf16.msra.mxu0 %v4018
        %5673 = vmatprep.subr.bf16.mxu0 %v4021
        %5674 = vmatpush1.bf16.msra.mxu0 %v4020
        %5675 = vmatprep.subr.bf16.mxu0 %v4023
        %5676 = vmatpush1.bf16.msra.mxu0 %v4022
        %5677 = vmatprep.subr.bf16.mxu0 %v4025
        %5678 = vmatpush1.bf16.msra.mxu0 %v4024
        %5679 = vmatprep.subr.bf16.mxu0 %v4027
        %5680 = vmatpush1.bf16.msra.mxu0 %v4026
        %5681 = vmatprep.subr.bf16.mxu0 %v4029
        %5682 = vmatpush1.bf16.msra.mxu0 %v4028
        %5683 = vmatprep.subr.bf16.mxu0 %v4031
        %5684 = vmatpush1.bf16.msra.mxu0 %v4030
        %5685 = vmatprep.subr.bf16.mxu0 %v4033
        %5686 = vmatpush1.bf16.msra.mxu0 %v4032
        %5687 = vmatprep.subr.bf16.mxu0 %v4035
        %5688 = vmatpush1.bf16.msra.mxu0 %v4034
        %5689 = vmatprep.subr.bf16.mxu0 %v4037
        %5690 = vmatpush1.bf16.msra.mxu0 %v4036
        %5691 = vmatprep.mubr.bf16.mxu0 %v1217
        %5692 = vmatmul.mubr.bf16.gmra.mrb[0].mxu0 %v1216
        %v5693 = vpop.f32.mrb[0].mxu0
        %v5694 = vadd.f32 %v5653, %v5693
        %v5695 = vpop.f32.mrb[0].mxu0
        %v5696 = vadd.f32 %v5655, %v5695
        %v5697 = vpop.f32.mrb[0].mxu0
        %v5698 = vpop.f32.mrb[0].mxu0
        %5699 = vdwg.mxu0
        %5700 = vmatprep.subr.bf16.mxu0 %v4039
        %5701 = vmatpush1.bf16.msra.mxu0 %v4038
        %5702 = vmatprep.subr.bf16.mxu0 %v4041
        %5703 = vmatpush1.bf16.msra.mxu0 %v4040
        %5704 = vmatprep.subr.bf16.mxu0 %v4043
        %5705 = vmatpush1.bf16.msra.mxu0 %v4042
        %5706 = vmatprep.subr.bf16.mxu0 %v4045
        %5707 = vmatpush1.bf16.msra.mxu0 %v4044
        %5708 = vmatprep.subr.bf16.mxu0 %v4047
        %5709 = vmatpush1.bf16.msra.mxu0 %v4046
        %5710 = vmatprep.subr.bf16.mxu0 %v4049
        %5711 = vmatpush1.bf16.msra.mxu0 %v4048
        %5712 = vmatprep.subr.bf16.mxu0 %v4051
        %5713 = vmatpush1.bf16.msra.mxu0 %v4050
        %5714 = vmatprep.subr.bf16.mxu0 %v4053
        %5715 = vmatpush1.bf16.msra.mxu0 %v4052
        %5716 = vmatprep.subr.bf16.mxu0 %v4055
        %5717 = vmatpush1.bf16.msra.mxu0 %v4054
        %5718 = vmatprep.subr.bf16.mxu0 %v4057
        %5719 = vmatpush1.bf16.msra.mxu0 %v4056
        %5720 = vmatprep.subr.bf16.mxu0 %v4059
        %5721 = vmatpush1.bf16.msra.mxu0 %v4058
        %5722 = vmatprep.subr.bf16.mxu0 %v4061
        %5723 = vmatpush1.bf16.msra.mxu0 %v4060
        %5724 = vmatprep.subr.bf16.mxu0 %v4063
        %5725 = vmatpush1.bf16.msra.mxu0 %v4062
        %5726 = vmatprep.subr.bf16.mxu0 %v4065
        %5727 = vmatpush1.bf16.msra.mxu0 %v4064
        %5728 = vmatprep.subr.bf16.mxu0 %v4067
        %5729 = vmatpush1.bf16.msra.mxu0 %v4066
        %5730 = vmatprep.subr.bf16.mxu0 %v4069
        %5731 = vmatpush1.bf16.msra.mxu0 %v4068
        %5732 = vmatprep.mubr.bf16.mxu0 %v1219
        %5733 = vmatmul.mubr.bf16.gmra.mrb[0].mxu0 %v1218
        %v5734 = vpop.f32.mrb[0].mxu0
        %v5735 = vadd.f32 %v5694, %v5734
        %v5736 = vpop.f32.mrb[0].mxu0
        %v5737 = vadd.f32 %v5696, %v5736
        %v5738 = vpop.f32.mrb[0].mxu0
        %v5739 = vpop.f32.mrb[0].mxu0
        %5740 = vdwg.mxu0
        %5741 = vmatprep.subr.bf16.mxu0 %v4071
        %5742 = vmatpush1.bf16.msra.mxu0 %v4070
        %5743 = vmatprep.subr.bf16.mxu0 %v4073
        %5744 = vmatpush1.bf16.msra.mxu0 %v4072
        %5745 = vmatprep.subr.bf16.mxu0 %v4075
        %5746 = vmatpush1.bf16.msra.mxu0 %v4074
        %5747 = vmatprep.subr.bf16.mxu0 %v4077
        %5748 = vmatpush1.bf16.msra.mxu0 %v4076
        %5749 = vmatprep.subr.bf16.mxu0 %v4079
        %5750 = vmatpush1.bf16.msra.mxu0 %v4078
        %5751 = vmatprep.subr.bf16.mxu0 %v4081
        %5752 = vmatpush1.bf16.msra.mxu0 %v4080
        %5753 = vmatprep.subr.bf16.mxu0 %v4083
        %5754 = vmatpush1.bf16.msra.mxu0 %v4082
        %5755 = vmatprep.subr.bf16.mxu0 %v4085
        %5756 = vmatpush1.bf16.msra.mxu0 %v4084
        %5757 = vmatprep.subr.bf16.mxu0 %v4087
        %5758 = vmatpush1.bf16.msra.mxu0 %v4086
        %5759 = vmatprep.subr.bf16.mxu0 %v4089
        %5760 = vmatpush1.bf16.msra.mxu0 %v4088
        %5761 = vmatprep.subr.bf16.mxu0 %v4091
        %5762 = vmatpush1.bf16.msra.mxu0 %v4090
        %5763 = vmatprep.subr.bf16.mxu0 %v4093
        %5764 = vmatpush1.bf16.msra.mxu0 %v4092
        %5765 = vmatprep.subr.bf16.mxu0 %v4095
        %5766 = vmatpush1.bf16.msra.mxu0 %v4094
        %5767 = vmatprep.subr.bf16.mxu0 %v4097
        %5768 = vmatpush1.bf16.msra.mxu0 %v4096
        %5769 = vmatprep.subr.bf16.mxu0 %v4099
        %5770 = vmatpush1.bf16.msra.mxu0 %v4098
        %5771 = vmatprep.subr.bf16.mxu0 %v4101
        %5772 = vmatpush1.bf16.msra.mxu0 %v4100
        %5773 = vmatprep.mubr.bf16.mxu0 %v1221
        %5774 = vmatmul.mubr.bf16.gmra.mrb[0].mxu0 %v1220
        %v5775 = vpop.f32.mrb[0].mxu0
        %v5776 = vadd.f32 %v5735, %v5775
        %v5777 = vpop.f32.mrb[0].mxu0
        %v5778 = vadd.f32 %v5737, %v5777
        %v5779 = vpop.f32.mrb[0].mxu0
        %v5780 = vpop.f32.mrb[0].mxu0
        %5781 = vdwg.mxu0
        %5782 = vmatprep.subr.bf16.mxu0 %v4103
        %5783 = vmatpush1.bf16.msra.mxu0 %v4102
        %5784 = vmatprep.subr.bf16.mxu0 %v4105
        %5785 = vmatpush1.bf16.msra.mxu0 %v4104
        %5786 = vmatprep.subr.bf16.mxu0 %v4107
        %5787 = vmatpush1.bf16.msra.mxu0 %v4106
        %5788 = vmatprep.subr.bf16.mxu0 %v4109
        %5789 = vmatpush1.bf16.msra.mxu0 %v4108
        %5790 = vmatprep.subr.bf16.mxu0 %v4111
        %5791 = vmatpush1.bf16.msra.mxu0 %v4110
        %5792 = vmatprep.subr.bf16.mxu0 %v4113
        %5793 = vmatpush1.bf16.msra.mxu0 %v4112
        %5794 = vmatprep.subr.bf16.mxu0 %v4115
        %5795 = vmatpush1.bf16.msra.mxu0 %v4114
        %5796 = vmatprep.subr.bf16.mxu0 %v4117
        %5797 = vmatpush1.bf16.msra.mxu0 %v4116
        %5798 = vmatprep.subr.bf16.mxu0 %v4119
        %5799 = vmatpush1.bf16.msra.mxu0 %v4118
        %5800 = vmatprep.subr.bf16.mxu0 %v4121
        %5801 = vmatpush1.bf16.msra.mxu0 %v4120
        %5802 = vmatprep.subr.bf16.mxu0 %v4123
        %5803 = vmatpush1.bf16.msra.mxu0 %v4122
        %5804 = vmatprep.subr.bf16.mxu0 %v4125
        %5805 = vmatpush1.bf16.msra.mxu0 %v4124
        %5806 = vmatprep.subr.bf16.mxu0 %v4127
        %5807 = vmatpush1.bf16.msra.mxu0 %v4126
        %5808 = vmatprep.subr.bf16.mxu0 %v4129
        %5809 = vmatpush1.bf16.msra.mxu0 %v4128
        %5810 = vmatprep.subr.bf16.mxu0 %v4131
        %5811 = vmatpush1.bf16.msra.mxu0 %v4130
        %5812 = vmatprep.subr.bf16.mxu0 %v4133
        %5813 = vmatpush1.bf16.msra.mxu0 %v4132
        %5814 = vmatprep.mubr.bf16.mxu0 %v1223
        %5815 = vmatmul.mubr.bf16.gmra.mrb[0].mxu0 %v1222
        %v5816 = vpop.f32.mrb[0].mxu0
        %v5817 = vadd.f32 %v5776, %v5816
        %v5818 = vpop.f32.mrb[0].mxu0
        %v5819 = vadd.f32 %v5778, %v5818
        %v5820 = vpop.f32.mrb[0].mxu0
        %v5821 = vpop.f32.mrb[0].mxu0
        %5822 = vdwg.mxu0
        %5823 = vmatprep.subr.bf16.mxu0 %v4135
        %5824 = vmatpush1.bf16.msra.mxu0 %v4134
        %5825 = vmatprep.subr.bf16.mxu0 %v4137
        %5826 = vmatpush1.bf16.msra.mxu0 %v4136
        %5827 = vmatprep.subr.bf16.mxu0 %v4139
        %5828 = vmatpush1.bf16.msra.mxu0 %v4138
        %5829 = vmatprep.subr.bf16.mxu0 %v4141
        %5830 = vmatpush1.bf16.msra.mxu0 %v4140
        %5831 = vmatprep.subr.bf16.mxu0 %v4143
        %5832 = vmatpush1.bf16.msra.mxu0 %v4142
        %5833 = vmatprep.subr.bf16.mxu0 %v4145
        %5834 = vmatpush1.bf16.msra.mxu0 %v4144
        %5835 = vmatprep.subr.bf16.mxu0 %v4147
        %5836 = vmatpush1.bf16.msra.mxu0 %v4146
        %5837 = vmatprep.subr.bf16.mxu0 %v4149
        %5838 = vmatpush1.bf16.msra.mxu0 %v4148
        %5839 = vmatprep.subr.bf16.mxu0 %v4151
        %5840 = vmatpush1.bf16.msra.mxu0 %v4150
        %5841 = vmatprep.subr.bf16.mxu0 %v4153
        %5842 = vmatpush1.bf16.msra.mxu0 %v4152
        %5843 = vmatprep.subr.bf16.mxu0 %v4155
        %5844 = vmatpush1.bf16.msra.mxu0 %v4154
        %5845 = vmatprep.subr.bf16.mxu0 %v4157
        %5846 = vmatpush1.bf16.msra.mxu0 %v4156
        %5847 = vmatprep.subr.bf16.mxu0 %v4159
        %5848 = vmatpush1.bf16.msra.mxu0 %v4158
        %5849 = vmatprep.subr.bf16.mxu0 %v4161
        %5850 = vmatpush1.bf16.msra.mxu0 %v4160
        %5851 = vmatprep.subr.bf16.mxu0 %v4163
        %5852 = vmatpush1.bf16.msra.mxu0 %v4162
        %5853 = vmatprep.subr.bf16.mxu0 %v4165
        %5854 = vmatpush1.bf16.msra.mxu0 %v4164
        %5855 = vmatprep.mubr.bf16.mxu0 %v1225
        %5856 = vmatmul.mubr.bf16.gmra.mrb[0].mxu0 %v1224
        %v5857 = vpop.f32.mrb[0].mxu0
        %v5858 = vadd.f32 %v5817, %v5857
        %v5859 = vpop.f32.mrb[0].mxu0
        %v5860 = vadd.f32 %v5819, %v5859
        %v5861 = vpop.f32.mrb[0].mxu0
        %v5862 = vpop.f32.mrb[0].mxu0
        %5863 = vdwg.mxu0
        %5864 = vmatprep.subr.bf16.mxu0 %v4167
        %5865 = vmatpush1.bf16.msra.mxu0 %v4166
        %5866 = vmatprep.subr.bf16.mxu0 %v4169
        %5867 = vmatpush1.bf16.msra.mxu0 %v4168
        %5868 = vmatprep.subr.bf16.mxu0 %v4171
        %5869 = vmatpush1.bf16.msra.mxu0 %v4170
        %5870 = vmatprep.subr.bf16.mxu0 %v4173
        %5871 = vmatpush1.bf16.msra.mxu0 %v4172
        %5872 = vmatprep.subr.bf16.mxu0 %v4175
        %5873 = vmatpush1.bf16.msra.mxu0 %v4174
        %5874 = vmatprep.subr.bf16.mxu0 %v4177
        %5875 = vmatpush1.bf16.msra.mxu0 %v4176
        %5876 = vmatprep.subr.bf16.mxu0 %v4179
        %5877 = vmatpush1.bf16.msra.mxu0 %v4178
        %5878 = vmatprep.subr.bf16.mxu0 %v4181
        %5879 = vmatpush1.bf16.msra.mxu0 %v4180
        %5880 = vmatprep.subr.bf16.mxu0 %v4183
        %5881 = vmatpush1.bf16.msra.mxu0 %v4182
        %5882 = vmatprep.subr.bf16.mxu0 %v4185
        %5883 = vmatpush1.bf16.msra.mxu0 %v4184
        %5884 = vmatprep.subr.bf16.mxu0 %v4187
        %5885 = vmatpush1.bf16.msra.mxu0 %v4186
        %5886 = vmatprep.subr.bf16.mxu0 %v4189
        %5887 = vmatpush1.bf16.msra.mxu0 %v4188
        %5888 = vmatprep.subr.bf16.mxu0 %v4191
        %5889 = vmatpush1.bf16.msra.mxu0 %v4190
        %5890 = vmatprep.subr.bf16.mxu0 %v4193
        %5891 = vmatpush1.bf16.msra.mxu0 %v4192
        %5892 = vmatprep.subr.bf16.mxu0 %v4195
        %5893 = vmatpush1.bf16.msra.mxu0 %v4194
        %5894 = vmatprep.subr.bf16.mxu0 %v4197
        %5895 = vmatpush1.bf16.msra.mxu0 %v4196
        %5896 = vmatprep.mubr.bf16.mxu0 %v1227
        %5897 = vmatmul.mubr.bf16.gmra.mrb[0].mxu0 %v1226
        %v5898 = vpop.f32.mrb[0].mxu0
        %v5899 = vadd.f32 %v5858, %v5898
        %v5900 = vpop.f32.mrb[0].mxu0
        %v5901 = vadd.f32 %v5860, %v5900
        %v5902 = vpop.f32.mrb[0].mxu0
        %v5903 = vpop.f32.mrb[0].mxu0
        %5904 = vdwg.mxu0
        %5905 = vmatprep.subr.bf16.mxu0 %v4199
        %5906 = vmatpush1.bf16.msra.mxu0 %v4198
        %5907 = vmatprep.subr.bf16.mxu0 %v4201
        %5908 = vmatpush1.bf16.msra.mxu0 %v4200
        %5909 = vmatprep.subr.bf16.mxu0 %v4203
        %5910 = vmatpush1.bf16.msra.mxu0 %v4202
        %5911 = vmatprep.subr.bf16.mxu0 %v4205
        %5912 = vmatpush1.bf16.msra.mxu0 %v4204
        %5913 = vmatprep.subr.bf16.mxu0 %v4207
        %5914 = vmatpush1.bf16.msra.mxu0 %v4206
        %5915 = vmatprep.subr.bf16.mxu0 %v4209
        %5916 = vmatpush1.bf16.msra.mxu0 %v4208
        %5917 = vmatprep.subr.bf16.mxu0 %v4211
        %5918 = vmatpush1.bf16.msra.mxu0 %v4210
        %5919 = vmatprep.subr.bf16.mxu0 %v4213
        %5920 = vmatpush1.bf16.msra.mxu0 %v4212
        %5921 = vmatprep.subr.bf16.mxu0 %v4215
        %5922 = vmatpush1.bf16.msra.mxu0 %v4214
        %5923 = vmatprep.subr.bf16.mxu0 %v4217
        %5924 = vmatpush1.bf16.msra.mxu0 %v4216
        %5925 = vmatprep.subr.bf16.mxu0 %v4219
        %5926 = vmatpush1.bf16.msra.mxu0 %v4218
        %5927 = vmatprep.subr.bf16.mxu0 %v4221
        %5928 = vmatpush1.bf16.msra.mxu0 %v4220
        %5929 = vmatprep.subr.bf16.mxu0 %v4223
        %5930 = vmatpush1.bf16.msra.mxu0 %v4222
        %5931 = vmatprep.subr.bf16.mxu0 %v4225
        %5932 = vmatpush1.bf16.msra.mxu0 %v4224
        %5933 = vmatprep.subr.bf16.mxu0 %v4227
        %5934 = vmatpush1.bf16.msra.mxu0 %v4226
        %5935 = vmatprep.subr.bf16.mxu0 %v4229
        %5936 = vmatpush1.bf16.msra.mxu0 %v4228
        %5937 = vmatprep.mubr.bf16.mxu0 %v1229
        %5938 = vmatmul.mubr.bf16.gmra.mrb[0].mxu0 %v1228
        %v5939 = vpop.f32.mrb[0].mxu0
        %v5940 = vadd.f32 %v5899, %v5939
        %v5941 = vpop.f32.mrb[0].mxu0
        %v5942 = vadd.f32 %v5901, %v5941
        %v5943 = vpop.f32.mrb[0].mxu0
        %v5944 = vpop.f32.mrb[0].mxu0
        %5945 = vdwg.mxu0
        %5946 = vmatprep.subr.bf16.mxu0 %v4231
        %5947 = vmatpush1.bf16.msra.mxu0 %v4230
        %5948 = vmatprep.subr.bf16.mxu0 %v4233
        %5949 = vmatpush1.bf16.msra.mxu0 %v4232
        %5950 = vmatprep.subr.bf16.mxu0 %v4235
        %5951 = vmatpush1.bf16.msra.mxu0 %v4234
        %5952 = vmatprep.subr.bf16.mxu0 %v4237
        %5953 = vmatpush1.bf16.msra.mxu0 %v4236
        %5954 = vmatprep.subr.bf16.mxu0 %v4239
        %5955 = vmatpush1.bf16.msra.mxu0 %v4238
        %5956 = vmatprep.subr.bf16.mxu0 %v4241
        %5957 = vmatpush1.bf16.msra.mxu0 %v4240
        %5958 = vmatprep.subr.bf16.mxu0 %v4243
        %5959 = vmatpush1.bf16.msra.mxu0 %v4242
        %5960 = vmatprep.subr.bf16.mxu0 %v4245
        %5961 = vmatpush1.bf16.msra.mxu0 %v4244
        %5962 = vmatprep.subr.bf16.mxu0 %v4247
        %5963 = vmatpush1.bf16.msra.mxu0 %v4246
        %5964 = vmatprep.subr.bf16.mxu0 %v4249
        %5965 = vmatpush1.bf16.msra.mxu0 %v4248
        %5966 = vmatprep.subr.bf16.mxu0 %v4251
        %5967 = vmatpush1.bf16.msra.mxu0 %v4250
        %5968 = vmatprep.subr.bf16.mxu0 %v4253
        %5969 = vmatpush1.bf16.msra.mxu0 %v4252
        %5970 = vmatprep.subr.bf16.mxu0 %v4255
        %5971 = vmatpush1.bf16.msra.mxu0 %v4254
        %5972 = vmatprep.subr.bf16.mxu0 %v4257
        %5973 = vmatpush1.bf16.msra.mxu0 %v4256
        %5974 = vmatprep.subr.bf16.mxu0 %v4259
        %5975 = vmatpush1.bf16.msra.mxu0 %v4258
        %5976 = vmatprep.subr.bf16.mxu0 %v4261
        %5977 = vmatpush1.bf16.msra.mxu0 %v4260
        %5978 = vmatprep.mubr.bf16.mxu0 %v1231
        %5979 = vmatmul.mubr.bf16.gmra.mrb[0].mxu0 %v1230
        %v5980 = vpop.f32.mrb[0].mxu0
        %v5981 = vadd.f32 %v5940, %v5980
        %v5982 = vpop.f32.mrb[0].mxu0
        %v5983 = vadd.f32 %v5942, %v5982
        %v5984 = vpop.f32.mrb[0].mxu0
        %v5985 = vpop.f32.mrb[0].mxu0
        %5986 = vdwg.mxu0
        %5987 = vmatprep.subr.bf16.mxu0 %v4263
        %5988 = vmatpush1.bf16.msra.mxu0 %v4262
        %5989 = vmatprep.subr.bf16.mxu0 %v4265
        %5990 = vmatpush1.bf16.msra.mxu0 %v4264
        %5991 = vmatprep.subr.bf16.mxu0 %v4267
        %5992 = vmatpush1.bf16.msra.mxu0 %v4266
        %5993 = vmatprep.subr.bf16.mxu0 %v4269
        %5994 = vmatpush1.bf16.msra.mxu0 %v4268
        %5995 = vmatprep.subr.bf16.mxu0 %v4271
        %5996 = vmatpush1.bf16.msra.mxu0 %v4270
        %5997 = vmatprep.subr.bf16.mxu0 %v4273
        %5998 = vmatpush1.bf16.msra.mxu0 %v4272
        %5999 = vmatprep.subr.bf16.mxu0 %v4275
        %6000 = vmatpush1.bf16.msra.mxu0 %v4274
        %6001 = vmatprep.subr.bf16.mxu0 %v4277
        %6002 = vmatpush1.bf16.msra.mxu0 %v4276
        %6003 = vmatprep.subr.bf16.mxu0 %v4279
        %6004 = vmatpush1.bf16.msra.mxu0 %v4278
        %6005 = vmatprep.subr.bf16.mxu0 %v4281
        %6006 = vmatpush1.bf16.msra.mxu0 %v4280
        %6007 = vmatprep.subr.bf16.mxu0 %v4283
        %6008 = vmatpush1.bf16.msra.mxu0 %v4282
        %6009 = vmatprep.subr.bf16.mxu0 %v4285
        %6010 = vmatpush1.bf16.msra.mxu0 %v4284
        %6011 = vmatprep.subr.bf16.mxu0 %v4287
        %6012 = vmatpush1.bf16.msra.mxu0 %v4286
        %6013 = vmatprep.subr.bf16.mxu0 %v4289
        %6014 = vmatpush1.bf16.msra.mxu0 %v4288
        %6015 = vmatprep.subr.bf16.mxu0 %v4291
        %6016 = vmatpush1.bf16.msra.mxu0 %v4290
        %6017 = vmatprep.subr.bf16.mxu0 %v4293
        %6018 = vmatpush1.bf16.msra.mxu0 %v4292
        %6019 = vmatprep.mubr.bf16.mxu0 %v1233
        %6020 = vmatmul.mubr.bf16.gmra.mrb[0].mxu0 %v1232
        %v6021 = vpop.f32.mrb[0].mxu0
        %v6022 = vadd.f32 %v5981, %v6021
        %v6023 = vpop.f32.mrb[0].mxu0
        %v6024 = vadd.f32 %v5983, %v6023
        %v6025 = vpop.f32.mrb[0].mxu0
        %v6026 = vpop.f32.mrb[0].mxu0
        %6027 = vdwg.mxu0
        %6028 = vmatprep.subr.bf16.mxu0 %v4295
        %6029 = vmatpush1.bf16.msra.mxu0 %v4294
        %6030 = vmatprep.subr.bf16.mxu0 %v4297
        %6031 = vmatpush1.bf16.msra.mxu0 %v4296
        %6032 = vmatprep.subr.bf16.mxu0 %v4299
        %6033 = vmatpush1.bf16.msra.mxu0 %v4298
        %6034 = vmatprep.subr.bf16.mxu0 %v4301
        %6035 = vmatpush1.bf16.msra.mxu0 %v4300
        %6036 = vmatprep.subr.bf16.mxu0 %v4303
        %6037 = vmatpush1.bf16.msra.mxu0 %v4302
        %6038 = vmatprep.subr.bf16.mxu0 %v4305
        %6039 = vmatpush1.bf16.msra.mxu0 %v4304
        %6040 = vmatprep.subr.bf16.mxu0 %v4307
        %6041 = vmatpush1.bf16.msra.mxu0 %v4306
        %6042 = vmatprep.subr.bf16.mxu0 %v4309
        %6043 = vmatpush1.bf16.msra.mxu0 %v4308
        %6044 = vmatprep.subr.bf16.mxu0 %v4311
        %6045 = vmatpush1.bf16.msra.mxu0 %v4310
        %6046 = vmatprep.subr.bf16.mxu0 %v4313
        %6047 = vmatpush1.bf16.msra.mxu0 %v4312
        %6048 = vmatprep.subr.bf16.mxu0 %v4315
        %6049 = vmatpush1.bf16.msra.mxu0 %v4314
        %6050 = vmatprep.subr.bf16.mxu0 %v4317
        %6051 = vmatpush1.bf16.msra.mxu0 %v4316
        %6052 = vmatprep.subr.bf16.mxu0 %v4319
        %6053 = vmatpush1.bf16.msra.mxu0 %v4318
        %6054 = vmatprep.subr.bf16.mxu0 %v4321
        %6055 = vmatpush1.bf16.msra.mxu0 %v4320
        %6056 = vmatprep.subr.bf16.mxu0 %v4323
        %6057 = vmatpush1.bf16.msra.mxu0 %v4322
        %6058 = vmatprep.subr.bf16.mxu0 %v4325
        %6059 = vmatpush1.bf16.msra.mxu0 %v4324
        %6060 = vmatprep.mubr.bf16.mxu0 %v1235
        %6061 = vmatmul.mubr.bf16.gmra.mrb[0].mxu0 %v1234
        %v6062 = vpop.f32.mrb[0].mxu0
        %v6063 = vadd.f32 %v6022, %v6062
        %v6064 = vpop.f32.mrb[0].mxu0
        %v6065 = vadd.f32 %v6024, %v6064
        %v6066 = vpop.f32.mrb[0].mxu0
        %v6067 = vpop.f32.mrb[0].mxu0
        %6068 = vdwg.mxu0
        %6069 = vmatprep.subr.bf16.mxu0 %v4327
        %6070 = vmatpush1.bf16.msra.mxu0 %v4326
        %6071 = vmatprep.subr.bf16.mxu0 %v4329
        %6072 = vmatpush1.bf16.msra.mxu0 %v4328
        %6073 = vmatprep.subr.bf16.mxu0 %v4331
        %6074 = vmatpush1.bf16.msra.mxu0 %v4330
        %6075 = vmatprep.subr.bf16.mxu0 %v4333
        %6076 = vmatpush1.bf16.msra.mxu0 %v4332
        %6077 = vmatprep.subr.bf16.mxu0 %v4335
        %6078 = vmatpush1.bf16.msra.mxu0 %v4334
        %6079 = vmatprep.subr.bf16.mxu0 %v4337
        %6080 = vmatpush1.bf16.msra.mxu0 %v4336
        %6081 = vmatprep.subr.bf16.mxu0 %v4339
        %6082 = vmatpush1.bf16.msra.mxu0 %v4338
        %6083 = vmatprep.subr.bf16.mxu0 %v4341
        %6084 = vmatpush1.bf16.msra.mxu0 %v4340
        %6085 = vmatprep.subr.bf16.mxu0 %v4343
        %6086 = vmatpush1.bf16.msra.mxu0 %v4342
        %6087 = vmatprep.subr.bf16.mxu0 %v4345
        %6088 = vmatpush1.bf16.msra.mxu0 %v4344
        %6089 = vmatprep.subr.bf16.mxu0 %v4347
        %6090 = vmatpush1.bf16.msra.mxu0 %v4346
        %6091 = vmatprep.subr.bf16.mxu0 %v4349
        %6092 = vmatpush1.bf16.msra.mxu0 %v4348
        %6093 = vmatprep.subr.bf16.mxu0 %v4351
        %6094 = vmatpush1.bf16.msra.mxu0 %v4350
        %6095 = vmatprep.subr.bf16.mxu0 %v4353
        %6096 = vmatpush1.bf16.msra.mxu0 %v4352
        %6097 = vmatprep.subr.bf16.mxu0 %v4355
        %6098 = vmatpush1.bf16.msra.mxu0 %v4354
        %6099 = vmatprep.subr.bf16.mxu0 %v4357
        %6100 = vmatpush1.bf16.msra.mxu0 %v4356
        %6101 = vmatprep.mubr.bf16.mxu0 %v1237
        %6102 = vmatmul.mubr.bf16.gmra.mrb[0].mxu0 %v1236
        %v6103 = vpop.f32.mrb[0].mxu0
        %v6104 = vadd.f32 %v6063, %v6103
        %v6105 = vpop.f32.mrb[0].mxu0
        %v6106 = vadd.f32 %v6065, %v6105
        %v6107 = vpop.f32.mrb[0].mxu0
        %v6108 = vpop.f32.mrb[0].mxu0
        %6109 = vdwg.mxu0
        %v6110 = vadd.f32 %v324, %v6104
        %v6111 = vadd.f32 %v325, %v6106
        %6112 = vst [vmem:[#allocation2] sm:$0xff] %v6110
        %6113 = vst [vmem:[#allocation2 + $0x8] sm:$0xff] %v6111
        %p6114 = scmp.eq.s32.totalorder %s26, 1
        // Predicated region
        $region49: #{policy_mlp_pallas.1} parent=35 // pred_check
          %p6115 = pneg %p6114
        $region50: #{policy_mlp_pallas.1} parent=35 // pred_check_branch
          %6117 = sbr.rel (%p6115) target = $region52
        $region51: #{policy_mlp_pallas.1} parent=35 // pred_region
          %v6118 = vld [vmem:[#allocation2] sm:$0xff]
          %v6119 = vld [vmem:[#allocation2 + $0x8] sm:$0xff]
          %v6120 = vld [vmem:[%s260] sm:$0x3]
          %v6122 = vlaneseq
          %v6123 = vshrl.u32 %v6122, 7
          %v6124 = vsub.s32 0, %v6123
          %v6125 = vrot.slane %v6120, %v6124
          %v6126 = vlaneseq
          %v6127 = vshrl.u32 %v6126, 7
          %v6128 = vsub.s32 1, %v6127
          %v6129 = vrot.slane %v6120, %v6128
          %v6132 = vadd.f32 %v6118, %v6125
          %v6133 = vadd.f32 %v6119, %v6129
          %v6134 = vmax.f32 %v6132, 0.0
          %v6135 = vmax.f32 %v6133, 0.0
          %v6136 = vld [vmem:[%s312] sm:$0xff]
          %v6137 = vld [vmem:[%s312 + $0x8] sm:$0xff]
          %v6138 = vld [vmem:[%s312 + $0x10] sm:$0xff]
          %v6139 = vld [vmem:[%s312 + $0x18] sm:$0xff]
          %v6140 = vld [vmem:[%s312 + $0x20] sm:$0xff]
          %v6141 = vld [vmem:[%s312 + $0x28] sm:$0xff]
          %v6142 = vld [vmem:[%s312 + $0x30] sm:$0xff]
          %v6143 = vld [vmem:[%s312 + $0x38] sm:$0xff]
          %v6144 = vld [vmem:[%s312 + $0x40] sm:$0xff]
          %v6145 = vld [vmem:[%s312 + $0x48] sm:$0xff]
          %v6146 = vld [vmem:[%s312 + $0x50] sm:$0xff]
          %v6147 = vld [vmem:[%s312 + $0x58] sm:$0xff]
          %v6148 = vld [vmem:[%s312 + $0x60] sm:$0xff]
          %v6149 = vld [vmem:[%s312 + $0x68] sm:$0xff]
          %v6150 = vld [vmem:[%s312 + $0x70] sm:$0xff]
          %v6151 = vld [vmem:[%s312 + $0x78] sm:$0xff]
          %v6152 = vld [vmem:[%s312 + $0x80] sm:$0xff]
          %v6153 = vld [vmem:[%s312 + $0x88] sm:$0xff]
          %v6154 = vld [vmem:[%s312 + $0x90] sm:$0xff]
          %v6155 = vld [vmem:[%s312 + $0x98] sm:$0xff]
          %v6156 = vld [vmem:[%s312 + $0xa0] sm:$0xff]
          %v6157 = vld [vmem:[%s312 + $0xa8] sm:$0xff]
          %v6158 = vld [vmem:[%s312 + $0xb0] sm:$0xff]
          %v6159 = vld [vmem:[%s312 + $0xb8] sm:$0xff]
          %v6160 = vld [vmem:[%s312 + $0xc0] sm:$0xff]
          %v6161 = vld [vmem:[%s312 + $0xc8] sm:$0xff]
          %v6162 = vld [vmem:[%s312 + $0xd0] sm:$0xff]
          %v6163 = vld [vmem:[%s312 + $0xd8] sm:$0xff]
          %v6164 = vld [vmem:[%s312 + $0xe0] sm:$0xff]
          %v6165 = vld [vmem:[%s312 + $0xe8] sm:$0xff]
          %v6166 = vld [vmem:[%s312 + $0xf0] sm:$0xff]
          %v6167 = vld [vmem:[%s312 + $0xf8] sm:$0xff]
          %6168 = vmatprep.subr.mxu0 0.0
          %6169 = vmatpush1.msra.mxu0 %v6136
          %6170 = vmatprep.subr.mxu0 0.0
          %6171 = vmatpush1.msra.mxu0 %v6137
          %6172 = vmatprep.subr.mxu0 0.0
          %6173 = vmatpush1.msra.mxu0 %v6138
          %6174 = vmatprep.subr.mxu0 0.0
          %6175 = vmatpush1.msra.mxu0 %v6139
          %6176 = vmatprep.subr.mxu0 0.0
          %6177 = vmatpush1.msra.mxu0 %v6140
          %6178 = vmatprep.subr.mxu0 0.0
          %6179 = vmatpush1.msra.mxu0 %v6141
          %6180 = vmatprep.subr.mxu0 0.0
          %6181 = vmatpush1.msra.mxu0 %v6142
          %6182 = vmatprep.subr.mxu0 0.0
          %6183 = vmatpush1.msra.mxu0 %v6143
          %6184 = vmatprep.subr.mxu0 0.0
          %6185 = vmatpush1.msra.mxu0 %v6144
          %6186 = vmatprep.subr.mxu0 0.0
          %6187 = vmatpush1.msra.mxu0 %v6145
          %6188 = vmatprep.subr.mxu0 0.0
          %6189 = vmatpush1.msra.mxu0 %v6146
          %6190 = vmatprep.subr.mxu0 0.0
          %6191 = vmatpush1.msra.mxu0 %v6147
          %6192 = vmatprep.subr.mxu0 0.0
          %6193 = vmatpush1.msra.mxu0 %v6148
          %6194 = vmatprep.subr.mxu0 0.0
          %6195 = vmatpush1.msra.mxu0 %v6149
          %6196 = vmatprep.subr.mxu0 0.0
          %6197 = vmatpush1.msra.mxu0 %v6150
          %6198 = vmatprep.subr.mxu0 0.0
          %6199 = vmatpush1.msra.mxu0 %v6151
          %6200 = vmatprep.subr.mxu0 0.0
          %6201 = vmatpush1.msra.mxu0 %v6152
          %6202 = vmatprep.subr.mxu0 0.0
          %6203 = vmatpush1.msra.mxu0 %v6153
          %6204 = vmatprep.subr.mxu0 0.0
          %6205 = vmatpush1.msra.mxu0 %v6154
          %6206 = vmatprep.subr.mxu0 0.0
          %6207 = vmatpush1.msra.mxu0 %v6155
          %6208 = vmatprep.subr.mxu0 0.0
          %6209 = vmatpush1.msra.mxu0 %v6156
          %6210 = vmatprep.subr.mxu0 0.0
          %6211 = vmatpush1.msra.mxu0 %v6157
          %6212 = vmatprep.subr.mxu0 0.0
          %6213 = vmatpush1.msra.mxu0 %v6158
          %6214 = vmatprep.subr.mxu0 0.0
          %6215 = vmatpush1.msra.mxu0 %v6159
          %6216 = vmatprep.subr.mxu0 0.0
          %6217 = vmatpush1.msra.mxu0 %v6160
          %6218 = vmatprep.subr.mxu0 0.0
          %6219 = vmatpush1.msra.mxu0 %v6161
          %6220 = vmatprep.subr.mxu0 0.0
          %6221 = vmatpush1.msra.mxu0 %v6162
          %6222 = vmatprep.subr.mxu0 0.0
          %6223 = vmatpush1.msra.mxu0 %v6163
          %6224 = vmatprep.subr.mxu0 0.0
          %6225 = vmatpush1.msra.mxu0 %v6164
          %6226 = vmatprep.subr.mxu0 0.0
          %6227 = vmatpush1.msra.mxu0 %v6165
          %6228 = vmatprep.subr.mxu0 0.0
          %6229 = vmatpush1.msra.mxu0 %v6166
          %6230 = vmatprep.subr.mxu0 0.0
          %6231 = vmatpush1.msra.mxu0 %v6167
          %6232 = vmatprep.mubr.f32.mxu0 %v6135
          %6233 = vmatmul.mubr.f32.gmra.mrb[0].mxu0 %v6134
          %v6234 = vpop.f32.mrb[0].mxu0
          %v6235 = vadd.f32 0.0, %v6234
          %v6236 = vpop.f32.mrb[0].mxu0
          %6237 = vdwg.mxu0
          %vm6238 = vcmask 15360
          %6239 = vst.msk [vmem:[%s317] sm:$0xff] %vm6238, %v6235
        $region52: #{policy_mlp_pallas.1} parent=35 // pred_fallthru
          _
        %p6240 = scmp.lt.s32.totalorder %s25, 1
        %s6241 = scalar_select %p6240, %s25, 1
        %s6242 = smul.addr %s6241, 8
        %s6243 = scalar_lea.vmem %s4, %s6242
        // Predicated region
        $region53: #{policy_mlp_pallas.1} parent=35 // pred_check
          %p6244 = pneg %p157
        $region54: #{policy_mlp_pallas.1} parent=35 // pred_check_branch
          %6246 = sbr.rel (%p6244) target = $region56
        $region55: #{policy_mlp_pallas.1} parent=35 // pred_region
          _
        $region56: #{policy_mlp_pallas.1} parent=35 // pred_fallthru
          _
      $region36: #{policy_mlp_pallas.1} parent=5 // pred_fallthru
        _
      %p6247 = scmp.le.s32.totalorder 2, %s16
      // Predicated region
      $region57: #{policy_mlp_pallas.1} parent=5 // pred_check
        %p6248 = pneg %p6247
      $region58: #{policy_mlp_pallas.1} parent=5 // pred_check_branch
        %6250 = sbr.rel (%p6248) target = $region60
      $region59: #{policy_mlp_pallas.1} parent=5 // pred_region
        %s6251 = ssub.s32 %s16, 2
        // Predicated region
        $region61: #{policy_mlp_pallas.1} parent=59 // pred_check
          %p6252 = pneg %p163
        $region62: #{policy_mlp_pallas.1} parent=59 // pred_check_branch
          %6254 = sbr.rel (%p6252) target = $region64
        $region63: #{policy_mlp_pallas.1} parent=59 // pred_region
          %p6255 = scmp.lt.s32.totalorder %s27, 1
          %s6256 = scalar_select %p6255, %s27, 1
          %s6257 = smul.addr %s6256, 8
          %s6258 = scalar_lea.vmem %s4, %s6257
        $region64: #{policy_mlp_pallas.1} parent=59 // pred_fallthru
          _
      $region60: #{policy_mlp_pallas.1} parent=5 // pred_fallthru
        _
    $region6: #{policy_mlp_pallas.1} parent=1 // loop_footer
      %s20 = sadd.s32 1, %s16
    $region7: #{policy_mlp_pallas.1} parent=1 // loop_footer_branch
      %15 = sbr.rel target = $region3
    $region8: #{policy_mlp_pallas.1} parent=1 // loop_exit
      _
    %6259 = vsyncpa [#allocation4], 1
    %s6260 = scalar_lea.sflag [#allocation4], 1
    %6261 = vsyncpa %s6260, 1
    %6262 = vsyncpa [#allocation6], 1
    %s6263 = scalar_lea.sflag [#allocation6], 1
    %6264 = vsyncpa %s6263, 1

</llo_original>
